<compile_context>
chip_gen: v6e
topology: v6e:2x2x1
jax: 0.10.0
libtpu: 0.0.40
codegen_flags: <defaults>
</compile_context>

<pallas_src>
import functools

import jax
import jax.numpy as jnp
from jax import lax
from jax.experimental import pallas as pl
from jax.experimental.pallas import tpu as pltpu

OUTPUT_DIM = 40                 # number of discrete bins
NUM_ACT = OUTPUT_DIM + 1        # readout emits OUTPUT_DIM + 1 logits
LPAD = 128                      # readout logits padded to a full 128-lane block
GPAD = 128                      # each GRU gate block lane-padded to 128
NEG = -1e30                     # bias for padded readout lanes (never win max/argmax)


def _relu(x):
    return jnp.maximum(x, 0.0)


def decoder_kernel(
    seed_ref,          # (1,) int32 (scalar prefetch, SMEM) - only used when sampling
    x_ref,             # (TB, C+L)      [context[:, :-1] | Z]
    sol_ref,           # (TB, num_dim)  teacher-forcing targets (zeros if unused)
    wcl_ref, bcl_ref,  # blockdiag(ctx-embedder, latent-embedder): (C+L, 2E), (1, 2E)
    we_ref, be_ref,    # embedding: (2E, E), (1, E)
    table_ref,         # (LPAD, 3*GPAD) host-precomputed action table (incl. input bias)
    wh_ref, bh_ref,    # packed [wro->LPAD | whr->GPAD | whz->GPAD | whn->GPAD]
    solution_ref, logp_ref,
    *, num_dim, greedy, teacher_forcing, embed_dim,
):
    E = embed_dim
    x = x_ref[...]
    B = x.shape[0]

    # ---- initial hidden state ------------------------------------------------
    # relu([ctx|z] @ blockdiag(Wc, Wl) + [bc|bl]) == [relu(ctx@Wc+bc) | relu(z@Wl+bl)]
    cl = _relu(jnp.dot(x, wcl_ref[...], preferred_element_type=jnp.float32)
               + bcl_ref[...])
    hx = _relu(jnp.dot(cl, we_ref[...], preferred_element_type=jnp.float32)
               + be_ref[...])

    col = lax.broadcasted_iota(jnp.int32, (B, LPAD), 1)

    if teacher_forcing:
        # ---- everything argmax-independent hoisted out of the loop ----------
        sol_in = sol_ref[...]
        # cont_to_cat: ((a + 1) * output_dim / 2).int(), clamped to a valid action
        act_idx_all = jnp.clip(
            ((sol_in + 1.0) * (OUTPUT_DIM / 2.0)).astype(jnp.int32), 0, OUTPUT_DIM)
        act_cont_all = -1.0 + act_idx_all.astype(jnp.float32) * (2.0 / OUTPUT_DIM)
        # solution = reversed action columns, one dense store (anti-diag permutation)
        flip = (lax.broadcasted_iota(jnp.int32, (num_dim, num_dim), 0)
                + lax.broadcasted_iota(jnp.int32, (num_dim, num_dim), 1)
                == num_dim - 1).astype(jnp.float32)
        solution_ref[...] = jnp.dot(act_cont_all, flip,
                                    preferred_element_type=jnp.float32)
        # per-step one-hots + ONE batched input-side GRU lookup for all steps
        oh_steps = [col == act_idx_all[:, i:i + 1] for i in range(num_dim)]
        oh_flat = jnp.concatenate([o.astype(jnp.float32) for o in oh_steps], axis=0)
        in_big = jnp.dot(oh_flat, table_ref[...],
                         preferred_element_type=jnp.float32)       # (num_dim*B, 3*GPAD)
    else:
        nd_col = lax.broadcasted_iota(jnp.int32, (B, num_dim), 1)
        sol_acc = jnp.zeros((B, num_dim), jnp.float32)
        if not greedy:
            pltpu.prng_seed(seed_ref[0] + pl.program_id(0))

    logp_sum = jnp.zeros((B, 1), jnp.float32)

    # num_dim is small & static -> unrolled Python loop inside the kernel.
    for i in range(num_dim):
        # One fused matmul per step: readout logits + all three hidden GRU terms,
        # every block starting on a 128-lane boundary.
        h_all = (jnp.dot(hx, wh_ref[...], preferred_element_type=jnp.float32)
                 + bh_ref[...])                                     # (B, LPAD+3*GPAD)
        logits = h_all[:, :LPAD]                                    # padded lanes = NEG
        h_r = h_all[:, LPAD:LPAD + E]
        h_z = h_all[:, LPAD + GPAD:LPAD + GPAD + E]
        h_n = h_all[:, LPAD + 2 * GPAD:LPAD + 2 * GPAD + E]

        m = jnp.max(logits, axis=1, keepdims=True)
        lse = jnp.log(jnp.sum(jnp.exp(logits - m), axis=1, keepdims=True)) + m

        if teacher_forcing:
            onehot = oh_steps[i]
            sel = jnp.sum(jnp.where(onehot, logits, 0.0), axis=1, keepdims=True)
            logp_sum = logp_sum + (sel - lse)
            in_all = in_big[i * B:(i + 1) * B, :]                   # contiguous 8 rows
        else:
            if greedy:
                act_idx = jnp.min(jnp.where(logits == m, col, LPAD),
                                  axis=1, keepdims=True)            # first argmax
                onehot = col == act_idx
                logp_sum = logp_sum + (m - lse)                     # logits[argmax]==m
            else:
                # Categorical sampling via Gumbel-max on the on-chip PRNG.
                # TODO(synk): RNG stream differs from torch's global generator.
                bits = pltpu.bitcast(pltpu.prng_random_bits((B, LPAD)), jnp.uint32)
                u = pltpu.bitcast((bits >> 9) | jnp.uint32(0x3F800000),
                                  jnp.float32) - 1.0
                g = -jnp.log(-jnp.log(u + 1e-20) + 1e-20)
                pert = logits + g                                   # NEG lanes never win
                pm = jnp.max(pert, axis=1, keepdims=True)
                act_idx = jnp.min(jnp.where(pert == pm, col, LPAD),
                                  axis=1, keepdims=True)
                onehot = col == act_idx
                sel = jnp.sum(jnp.where(onehot, logits, 0.0), axis=1, keepdims=True)
                logp_sum = logp_sum + (sel - lse)
            # cat_to_cont; accumulate reversed-position column in a register
            act_cont = -1.0 + act_idx.astype(jnp.float32) * (2.0 / OUTPUT_DIM)
            sol_acc = jnp.where(nd_col == (num_dim - 1 - i), act_cont, sol_acc)
            # Data-dependent input-side GRU terms: tiny (B,128)x(128,384) lookup.
            in_all = jnp.dot(onehot.astype(jnp.float32), table_ref[...],
                             preferred_element_type=jnp.float32)

        r = jax.nn.sigmoid(in_all[:, :E] + h_r)
        zg = jax.nn.sigmoid(in_all[:, GPAD:GPAD + E] + h_z)
        n = jnp.tanh(in_all[:, 2 * GPAD:2 * GPAD + E] + r * h_n)
        hx = (1.0 - zg) * n + zg * hx

    if not teacher_forcing:
        solution_ref[...] = sol_acc
    logp_ref[...] = logp_sum


# --------------------------------------------------------------------------
# Parameter construction (deterministic, synthetic) and host-side packing
# --------------------------------------------------------------------------
def _linear(key, in_dim, out_dim, scale=0.2):
    k1, k2 = jax.random.split(key)
    w = jax.random.normal(k1, (in_dim, out_dim), jnp.float32) * scale
    b = jax.random.normal(k2, (1, out_dim), jnp.float32) * scale
    return w, b


def make_params(key, *, num_var, deg, latent_size, embed_dim):
    ks = jax.random.split(key, 12)
    wc, bc = _linear(ks[0], num_var * deg, embed_dim)
    wl, bl = _linear(ks[1], latent_size, embed_dim)
    we, be = _linear(ks[2], 2 * embed_dim, embed_dim)
    wae, bae = _linear(ks[3], 1, embed_dim)
    wir, bir = _linear(ks[4], embed_dim, embed_dim)
    wiz, biz = _linear(ks[5], embed_dim, embed_dim)
    win, bin_ = _linear(ks[6], embed_dim, embed_dim)
    whr, bhr = _linear(ks[7], embed_dim, embed_dim)
    whz, bhz = _linear(ks[8], embed_dim, embed_dim)
    whn, bhn = _linear(ks[9], embed_dim, embed_dim)
    wro, bro = _linear(ks[10], embed_dim, NUM_ACT)
    return (wc, bc, wl, bl, we, be, wae, bae,
            wir, wiz, win, whr, whz, whn,
            bir, biz, bin_, bhr, bhz, bhn,
            wro, bro)


def pack_params(params, *, num_var, deg, latent_size, embed_dim):
    """Host-side packing: fused / lane-aligned weights + precomputed action table."""
    (wc, bc, wl, bl, we, be, wae, bae,
     wir, wiz, win, whr, whz, whn,
     bir, biz, bin_, bhr, bhz, bhn, wro, bro) = params
    C, L, E = num_var * deg, latent_size, embed_dim

    # block-diagonal [Wc 0; 0 Wl] so the two input embedders become one matmul
    wcl = jnp.zeros((C + L, 2 * E), jnp.float32)
    wcl = wcl.at[:C, :E].set(wc).at[C:, E:].set(wl)
    bcl = jnp.concatenate([bc, bl], axis=1)

    def gpad(m):  # lane-pad a gate block (cols E -> GPAD) with zeros
        return jnp.pad(m, ((0, 0), (0, GPAD - m.shape[1])))

    # Precomputed action table (host): table[a] = relu(cat_to_cont(a)*Wae+bae) @ Wi + bi,
    # gate blocks lane-padded to GPAD, rows padded to LPAD (padded rows never selected).
    a = jnp.arange(NUM_ACT, dtype=jnp.float32)[:, None]                  # (41, 1)
    c = -1.0 + a * (2.0 / OUTPUT_DIM)
    ae = jnp.maximum(c * wae + bae, 0.0)                                 # (41, E)
    table = jnp.concatenate([gpad(ae @ wir + bir),
                             gpad(ae @ wiz + biz),
                             gpad(ae @ win + bin_)], axis=1)             # (41, 3*GPAD)
    table = jnp.pad(table, ((0, LPAD - NUM_ACT), (0, 0)))                # (128, 384)

    # readout lane-padded to LPAD (bias pad = NEG so padded lanes never win the max),
    # hidden-side gate blocks lane-padded to GPAD -> all slices 128-lane aligned.
    wro_pad = jnp.pad(wro, ((0, 0), (0, LPAD - NUM_ACT)))
    bro_pad = jnp.pad(bro, ((0, 0), (0, LPAD - NUM_ACT)), constant_values=NEG)
    wh_p = jnp.concatenate([wro_pad, gpad(whr), gpad(whz), gpad(whn)], axis=1)
    bh_p = jnp.concatenate([bro_pad, gpad(bhr), gpad(bhz), gpad(bhn)], axis=1)

    return (wcl, bcl, we, be, table, wh_p, bh_p)


def discrete_decoder_forward(context, solution, Z, packed, *,
                             num_dim, embed_dim, teacher_forcing, greedy,
                             seed=0, batch_tile=8):
    """Returns (None, solution, solution_logp, None, None) like the PyTorch module."""
    B = context.shape[0]
    x = jnp.concatenate([context[:, :-1], Z], axis=1)      # glue: static slice + concat
    if solution is None:
        solution = jnp.zeros((B, num_dim), jnp.float32)
    seed_arr = jnp.asarray([seed], jnp.int32)

    TB = min(batch_tile, B)
    grid = (pl.cdiv(B, TB),)

    kernel = functools.partial(decoder_kernel, num_dim=num_dim, greedy=greedy,
                               teacher_forcing=teacher_forcing, embed_dim=embed_dim)

    def batch_spec(cols):
        return pl.BlockSpec((TB, cols), lambda i, *_: (i, 0))

    def full_spec(arr):
        zeros = (0,) * arr.ndim
        return pl.BlockSpec(arr.shape, lambda i, *_, _z=zeros: _z)

    in_specs = ([batch_spec(x.shape[1]), batch_spec(num_dim)]
                + [full_spec(w) for w in packed])
    out_specs = (batch_spec(num_dim), batch_spec(1))

    grid_spec = pltpu.PrefetchScalarGridSpec(
        num_scalar_prefetch=1, grid=grid,
        in_specs=in_specs, out_specs=out_specs)

    sol_out, logp_out = pl.pallas_call(
        kernel,
        grid_spec=grid_spec,
        out_shape=(jax.ShapeDtypeStruct((B, num_dim), jnp.float32),
                   jax.ShapeDtypeStruct((B, 1), jnp.float32)),
        compiler_params=pltpu.CompilerParams(
            dimension_semantics=("parallel",)),
    )(seed_arr, x, solution, *packed)
    return None, sol_out, logp_out, None, None


# --------------------------------------------------------------------------
# Pure-JAX reference (unpacked params, same math) for correctness checks
# --------------------------------------------------------------------------
def reference_forward(context, solution, Z, params, *, num_dim, teacher_forcing, greedy):
    (wc, bc, wl, bl, we, be, wae, bae,
     wir, wiz, win, whr, whz, whn,
     bir, biz, bin_, bhr, bhz, bhn, wro, bro) = params
    ctx = context[:, :-1]
    ce = jnp.maximum(ctx @ wc + bc, 0.0)
    le = jnp.maximum(Z @ wl + bl, 0.0)
    hx = jnp.maximum(jnp.concatenate([ce, le], axis=1) @ we + be, 0.0)
    actions, logps = [], []
    for i in range(num_dim):
        logits = hx @ wro + bro
        log_probs = jax.nn.log_softmax(logits, axis=1)
        if teacher_forcing:
            act_idx = ((solution[:, i] + 1.0) * (OUTPUT_DIM / 2.0)).astype(jnp.int32)
        else:
            act_idx = jnp.argmax(logits, axis=1).astype(jnp.int32)
        logps.append(jnp.take_along_axis(log_probs, act_idx[:, None], axis=1))
        act_cont = -1.0 + act_idx.astype(jnp.float32) * (2.0 / OUTPUT_DIM)
        actions.append(act_cont[:, None])
        ae = jnp.maximum(act_cont[:, None] * wae + bae, 0.0)
        r = jax.nn.sigmoid(ae @ wir + bir + hx @ whr + bhr)
        zg = jax.nn.sigmoid(ae @ wiz + biz + hx @ whz + bhz)
        n = jnp.tanh(ae @ win + bin_ + r * (hx @ whn + bhn))
        hx = (1.0 - zg) * n + zg * hx
    actions.reverse()
    sol = jnp.concatenate(actions, axis=1)
    logp = jnp.sum(jnp.concatenate(logps, axis=1), axis=1, keepdims=True)
    return sol, logp


if __name__ == "__main__":
    # Small, module-consistent shapes.
    B, num_var, deg, latent_size, embed_dim = 8, 8, 3, 16, 32
    key = jax.random.PRNGKey(0)
    k_ctx, k_z, k_sol, k_par = jax.random.split(key, 4)

    context = jax.random.normal(k_ctx, (B, num_var * deg + 1), jnp.float32)
    Z = jax.random.normal(k_z, (B, latent_size), jnp.float32)
    params = make_params(k_par, num_var=num_var, deg=deg,
                         latent_size=latent_size, embed_dim=embed_dim)
    packed = pack_params(params, num_var=num_var, deg=deg,
                         latent_size=latent_size, embed_dim=embed_dim)

    # 1) Greedy decoding (deterministic), no teacher forcing.
    _, sol, logp, _, _ = discrete_decoder_forward(
        context, None, Z, packed, num_dim=num_var, embed_dim=embed_dim,
        teacher_forcing=False, greedy=True)
    jax.block_until_ready((sol, logp))
    sol_ref, logp_ref = reference_forward(
        context, None, Z, params, num_dim=num_var,
        teacher_forcing=False, greedy=True)
    assert sol.shape == (B, num_var) and logp.shape == (B, 1)
    assert jnp.allclose(sol, sol_ref, atol=1e-3), (sol, sol_ref)
    assert jnp.allclose(logp, logp_ref, atol=1e-3, rtol=1e-3), (logp, logp_ref)

    # 2) Teacher forcing.
    tf_sol = jax.random.uniform(k_sol, (B, num_var), jnp.float32,
                                minval=-1.0, maxval=1.0)
    _, sol_tf, logp_tf, _, _ = discrete_decoder_forward(
        context, tf_sol, Z, packed, num_dim=num_var, embed_dim=embed_dim,
        teacher_forcing=True, greedy=False)
    jax.block_until_ready((sol_tf, logp_tf))
    sol_tf_ref, logp_tf_ref = reference_forward(
        context, tf_sol, Z, params, num_dim=num_var,
        teacher_forcing=True, greedy=False)
    assert jnp.allclose(sol_tf, sol_tf_ref, atol=1e-3), (sol_tf, sol_tf_ref)
    assert jnp.allclose(logp_tf, logp_tf_ref, atol=1e-3, rtol=1e-3), (logp_tf, logp_tf_ref)

    print("KERNEL_OK")
</pallas_src>

<mosaic_0001>
module attributes {stable_mosaic.version = 11 : i64} {
  func.func @decoder_kernel(%arg0: i32, %arg1: memref<1xi32, #tpu.memory_space<smem>>, %arg2: memref<8x40xf32, #tpu.memory_space<vmem>>, %arg3: memref<8x8xf32, #tpu.memory_space<vmem>>, %arg4: memref<40x64xf32, #tpu.memory_space<vmem>>, %arg5: memref<1x64xf32, #tpu.memory_space<vmem>>, %arg6: memref<64x32xf32, #tpu.memory_space<vmem>>, %arg7: memref<1x32xf32, #tpu.memory_space<vmem>>, %arg8: memref<128x384xf32, #tpu.memory_space<vmem>>, %arg9: memref<32x512xf32, #tpu.memory_space<vmem>>, %arg10: memref<1x512xf32, #tpu.memory_space<vmem>>, %arg11: memref<8x8xf32, #tpu.memory_space<vmem>>, %arg12: memref<8x1xf32, #tpu.memory_space<vmem>>) attributes {dimension_semantics = [#tpu.dimension_semantics<parallel>], iteration_bounds = array<i64: 1>, scalar_prefetch = 1 : i64, scratch_operands = 0 : i64, tpu.core_type = #tpu.core_type<tc>, window_params = [{transform_indices = @transform_0, window_bounds = array<i64: 8, 40>}, {transform_indices = @transform_1, window_bounds = array<i64: 8, 8>}, {pipeline_mode = #tpu.pipeline_mode<synchronous>, transform_indices = @transform_2, window_bounds = array<i64: 40, 64>}, {pipeline_mode = #tpu.pipeline_mode<synchronous>, transform_indices = @transform_3, window_bounds = array<i64: 1, 64>}, {pipeline_mode = #tpu.pipeline_mode<synchronous>, transform_indices = @transform_4, window_bounds = array<i64: 64, 32>}, {pipeline_mode = #tpu.pipeline_mode<synchronous>, transform_indices = @transform_5, window_bounds = array<i64: 1, 32>}, {pipeline_mode = #tpu.pipeline_mode<synchronous>, transform_indices = @transform_6, window_bounds = array<i64: 128, 384>}, {pipeline_mode = #tpu.pipeline_mode<synchronous>, transform_indices = @transform_7, window_bounds = array<i64: 32, 512>}, {pipeline_mode = #tpu.pipeline_mode<synchronous>, transform_indices = @transform_8, window_bounds = array<i64: 1, 512>}, {transform_indices = @transform_9, window_bounds = array<i64: 8, 8>}, {transform_indices = @transform_10, window_bounds = array<i64: 8, 1>}]} {
    %c0 = arith.constant 0 : index
    %c0_0 = arith.constant 0 : index
    %0 = vector.load %arg2[%c0, %c0_0] : memref<8x40xf32, #tpu.memory_space<vmem>>, vector<8x40xf32>
    %c0_1 = arith.constant 0 : index
    %c0_2 = arith.constant 0 : index
    %1 = vector.load %arg4[%c0_1, %c0_2] : memref<40x64xf32, #tpu.memory_space<vmem>>, vector<40x64xf32>
    %cst = arith.constant dense<0.000000e+00> : vector<8x64xf32>
    %2 = tpu.matmul %0, %1, %cst {dimension_numbers = #tpu.dot_dimension_numbers<[1], [0], [0], [1], [0, 0, 1, 1], [], []>} : vector<8x40xf32>, vector<40x64xf32>, vector<8x64xf32> -> vector<8x64xf32>
    %c0_3 = arith.constant 0 : index
    %c0_4 = arith.constant 0 : index
    %3 = vector.load %arg5[%c0_3, %c0_4] : memref<1x64xf32, #tpu.memory_space<vmem>>, vector<1x64xf32>
    %4 = vector.broadcast %3 : vector<1x64xf32> to vector<8x64xf32>
    %5 = arith.addf %2, %4 : vector<8x64xf32>
    %cst_5 = arith.constant 0.000000e+00 : f32
    %6 = vector.broadcast %cst_5 : f32 to vector<8x64xf32>
    %7 = arith.maximumf %5, %6 : vector<8x64xf32>
    %c0_6 = arith.constant 0 : index
    %c0_7 = arith.constant 0 : index
    %8 = vector.load %arg6[%c0_6, %c0_7] : memref<64x32xf32, #tpu.memory_space<vmem>>, vector<64x32xf32>
    %cst_8 = arith.constant dense<0.000000e+00> : vector<8x32xf32>
    %9 = tpu.matmul %7, %8, %cst_8 {dimension_numbers = #tpu.dot_dimension_numbers<[1], [0], [0], [1], [0, 0, 1, 1], [], []>} : vector<8x64xf32>, vector<64x32xf32>, vector<8x32xf32> -> vector<8x32xf32>
    %c0_9 = arith.constant 0 : index
    %c0_10 = arith.constant 0 : index
    %10 = vector.load %arg7[%c0_9, %c0_10] : memref<1x32xf32, #tpu.memory_space<vmem>>, vector<1x32xf32>
    %11 = vector.broadcast %10 : vector<1x32xf32> to vector<8x32xf32>
    %12 = arith.addf %9, %11 : vector<8x32xf32>
    %cst_11 = arith.constant 0.000000e+00 : f32
    %13 = vector.broadcast %cst_11 : f32 to vector<8x32xf32>
    %14 = arith.maximumf %12, %13 : vector<8x32xf32>
    %15 = tpu.iota {dimensions = array<i32: 1>} : vector<8x128xi32>
    %16 = tpu.iota {dimensions = array<i32: 1>} : vector<8x8xi32>
    %cst_12 = arith.constant 0.000000e+00 : f32
    %17 = vector.broadcast %cst_12 : f32 to vector<8x8xf32>
    %cst_13 = arith.constant 0.000000e+00 : f32
    %18 = vector.broadcast %cst_13 : f32 to vector<8x1xf32>
    %c0_14 = arith.constant 0 : index
    %c0_15 = arith.constant 0 : index
    %19 = vector.load %arg9[%c0_14, %c0_15] : memref<32x512xf32, #tpu.memory_space<vmem>>, vector<32x512xf32>
    %cst_16 = arith.constant dense<0.000000e+00> : vector<8x512xf32>
    %20 = tpu.matmul %14, %19, %cst_16 {dimension_numbers = #tpu.dot_dimension_numbers<[1], [0], [0], [1], [0, 0, 1, 1], [], []>} : vector<8x32xf32>, vector<32x512xf32>, vector<8x512xf32> -> vector<8x512xf32>
    %c0_17 = arith.constant 0 : index
    %c0_18 = arith.constant 0 : index
    %21 = vector.load %arg10[%c0_17, %c0_18] : memref<1x512xf32, #tpu.memory_space<vmem>>, vector<1x512xf32>
    %22 = vector.broadcast %21 : vector<1x512xf32> to vector<8x512xf32>
    %23 = arith.addf %20, %22 : vector<8x512xf32>
    %24 = vector.extract_strided_slice %23 {offsets = [0, 0], sizes = [8, 128], strides = [1, 1]} : vector<8x512xf32> to vector<8x128xf32>
    %25 = vector.extract_strided_slice %23 {offsets = [0, 128], sizes = [8, 32], strides = [1, 1]} : vector<8x512xf32> to vector<8x32xf32>
    %26 = vector.extract_strided_slice %23 {offsets = [0, 256], sizes = [8, 32], strides = [1, 1]} : vector<8x512xf32> to vector<8x32xf32>
    %27 = vector.extract_strided_slice %23 {offsets = [0, 384], sizes = [8, 32], strides = [1, 1]} : vector<8x512xf32> to vector<8x32xf32>
    %cst_19 = arith.constant dense<0xFF800000> : vector<8xf32>
    %28 = vector.multi_reduction <maximumf>, %24, %cst_19 [1] : vector<8x128xf32> to vector<8xf32>
    %29 = vector.shape_cast %28 : vector<8xf32> to vector<8x1xf32>
    %30 = vector.broadcast %29 : vector<8x1xf32> to vector<8x128xf32>
    %31 = arith.subf %24, %30 : vector<8x128xf32>
    %32 = math.exp %31 : vector<8x128xf32>
    %cst_20 = arith.constant dense<0.000000e+00> : vector<8xf32>
    %33 = vector.multi_reduction <add>, %32, %cst_20 [1] : vector<8x128xf32> to vector<8xf32>
    %34 = vector.shape_cast %33 : vector<8xf32> to vector<8x1xf32>
    %35 = math.log %34 : vector<8x1xf32>
    %36 = arith.addf %35, %29 : vector<8x1xf32>
    %37 = vector.broadcast %29 : vector<8x1xf32> to vector<8x128xf32>
    %38 = arith.cmpf oeq, %24, %37 : vector<8x128xf32>
    %c128_i32 = arith.constant 128 : i32
    %39 = vector.broadcast %c128_i32 : i32 to vector<8x128xi32>
    %40 = arith.select %38, %15, %39 : vector<8x128xi1>, vector<8x128xi32>
    %cst_21 = arith.constant dense<2147483647> : vector<8xi32>
    %41 = vector.multi_reduction <minsi>, %40, %cst_21 [1] : vector<8x128xi32> to vector<8xi32>
    %42 = vector.shape_cast %41 : vector<8xi32> to vector<8x1xi32>
    %43 = vector.broadcast %42 : vector<8x1xi32> to vector<8x128xi32>
    %44 = arith.cmpi eq, %15, %43 : vector<8x128xi32>
    %45 = arith.subf %29, %36 : vector<8x1xf32>
    %46 = arith.addf %18, %45 : vector<8x1xf32>
    %47 = arith.sitofp %42 : vector<8x1xi32> to vector<8x1xf32>
    %cst_22 = arith.constant 5.000000e-02 : f32
    %48 = vector.broadcast %cst_22 : f32 to vector<8x1xf32>
    %49 = arith.mulf %47, %48 : vector<8x1xf32>
    %cst_23 = arith.constant -1.000000e+00 : f32
    %50 = vector.broadcast %cst_23 : f32 to vector<8x1xf32>
    %51 = arith.addf %50, %49 : vector<8x1xf32>
    %c7_i32 = arith.constant 7 : i32
    %52 = vector.broadcast %c7_i32 : i32 to vector<8x8xi32>
    %53 = arith.cmpi eq, %16, %52 : vector<8x8xi32>
    %54 = vector.shape_cast %51 : vector<8x1xf32> to vector<8x1xf32>
    %55 = vector.broadcast %54 : vector<8x1xf32> to vector<8x8xf32>
    %56 = arith.select %53, %55, %17 : vector<8x8xi1>, vector<8x8xf32>
    %57 = arith.extui %44 : vector<8x128xi1> to vector<8x128xi32>
    %58 = arith.sitofp %57 : vector<8x128xi32> to vector<8x128xf32>
    %c0_24 = arith.constant 0 : index
    %c0_25 = arith.constant 0 : index
    %59 = vector.load %arg8[%c0_24, %c0_25] : memref<128x384xf32, #tpu.memory_space<vmem>>, vector<128x384xf32>
    %cst_26 = arith.constant dense<0.000000e+00> : vector<8x384xf32>
    %60 = tpu.matmul %58, %59, %cst_26 {dimension_numbers = #tpu.dot_dimension_numbers<[1], [0], [0], [1], [0, 0, 1, 1], [], []>} : vector<8x128xf32>, vector<128x384xf32>, vector<8x384xf32> -> vector<8x384xf32>
    %61 = vector.extract_strided_slice %60 {offsets = [0, 0], sizes = [8, 32], strides = [1, 1]} : vector<8x384xf32> to vector<8x32xf32>
    %62 = arith.addf %61, %25 : vector<8x32xf32>
    %63 = arith.negf %62 : vector<8x32xf32>
    %64 = math.exp %63 : vector<8x32xf32>
    %cst_27 = arith.constant 1.000000e+00 : f32
    %65 = vector.broadcast %cst_27 : f32 to vector<8x32xf32>
    %66 = arith.addf %65, %64 : vector<8x32xf32>
    %67 = arith.divf %65, %66 : vector<8x32xf32>
    %68 = vector.extract_strided_slice %60 {offsets = [0, 128], sizes = [8, 32], strides = [1, 1]} : vector<8x384xf32> to vector<8x32xf32>
    %69 = arith.addf %68, %26 : vector<8x32xf32>
    %70 = arith.negf %69 : vector<8x32xf32>
    %71 = math.exp %70 : vector<8x32xf32>
    %cst_28 = arith.constant 1.000000e+00 : f32
    %72 = vector.broadcast %cst_28 : f32 to vector<8x32xf32>
    %73 = arith.addf %72, %71 : vector<8x32xf32>
    %74 = arith.divf %72, %73 : vector<8x32xf32>
    %75 = vector.extract_strided_slice %60 {offsets = [0, 256], sizes = [8, 32], strides = [1, 1]} : vector<8x384xf32> to vector<8x32xf32>
    %76 = arith.mulf %67, %27 : vector<8x32xf32>
    %77 = arith.addf %75, %76 : vector<8x32xf32>
    %78 = math.tanh %77 : vector<8x32xf32>
    %cst_29 = arith.constant 1.000000e+00 : f32
    %79 = vector.broadcast %cst_29 : f32 to vector<8x32xf32>
    %80 = arith.subf %79, %74 : vector<8x32xf32>
    %81 = arith.mulf %80, %78 : vector<8x32xf32>
    %82 = arith.mulf %74, %14 : vector<8x32xf32>
    %83 = arith.addf %81, %82 : vector<8x32xf32>
    %c0_30 = arith.constant 0 : index
    %c0_31 = arith.constant 0 : index
    %84 = vector.load %arg9[%c0_30, %c0_31] : memref<32x512xf32, #tpu.memory_space<vmem>>, vector<32x512xf32>
    %cst_32 = arith.constant dense<0.000000e+00> : vector<8x512xf32>
    %85 = tpu.matmul %83, %84, %cst_32 {dimension_numbers = #tpu.dot_dimension_numbers<[1], [0], [0], [1], [0, 0, 1, 1], [], []>} : vector<8x32xf32>, vector<32x512xf32>, vector<8x512xf32> -> vector<8x512xf32>
    %c0_33 = arith.constant 0 : index
    %c0_34 = arith.constant 0 : index
    %86 = vector.load %arg10[%c0_33, %c0_34] : memref<1x512xf32, #tpu.memory_space<vmem>>, vector<1x512xf32>
    %87 = vector.broadcast %86 : vector<1x512xf32> to vector<8x512xf32>
    %88 = arith.addf %85, %87 : vector<8x512xf32>
    %89 = vector.extract_strided_slice %88 {offsets = [0, 0], sizes = [8, 128], strides = [1, 1]} : vector<8x512xf32> to vector<8x128xf32>
    %90 = vector.extract_strided_slice %88 {offsets = [0, 128], sizes = [8, 32], strides = [1, 1]} : vector<8x512xf32> to vector<8x32xf32>
    %91 = vector.extract_strided_slice %88 {offsets = [0, 256], sizes = [8, 32], strides = [1, 1]} : vector<8x512xf32> to vector<8x32xf32>
    %92 = vector.extract_strided_slice %88 {offsets = [0, 384], sizes = [8, 32], strides = [1, 1]} : vector<8x512xf32> to vector<8x32xf32>
    %cst_35 = arith.constant dense<0xFF800000> : vector<8xf32>
    %93 = vector.multi_reduction <maximumf>, %89, %cst_35 [1] : vector<8x128xf32> to vector<8xf32>
    %94 = vector.shape_cast %93 : vector<8xf32> to vector<8x1xf32>
    %95 = vector.broadcast %94 : vector<8x1xf32> to vector<8x128xf32>
    %96 = arith.subf %89, %95 : vector<8x128xf32>
    %97 = math.exp %96 : vector<8x128xf32>
    %cst_36 = arith.constant dense<0.000000e+00> : vector<8xf32>
    %98 = vector.multi_reduction <add>, %97, %cst_36 [1] : vector<8x128xf32> to vector<8xf32>
    %99 = vector.shape_cast %98 : vector<8xf32> to vector<8x1xf32>
    %100 = math.log %99 : vector<8x1xf32>
    %101 = arith.addf %100, %94 : vector<8x1xf32>
    %102 = vector.broadcast %94 : vector<8x1xf32> to vector<8x128xf32>
    %103 = arith.cmpf oeq, %89, %102 : vector<8x128xf32>
    %c128_i32_37 = arith.constant 128 : i32
    %104 = vector.broadcast %c128_i32_37 : i32 to vector<8x128xi32>
    %105 = arith.select %103, %15, %104 : vector<8x128xi1>, vector<8x128xi32>
    %cst_38 = arith.constant dense<2147483647> : vector<8xi32>
    %106 = vector.multi_reduction <minsi>, %105, %cst_38 [1] : vector<8x128xi32> to vector<8xi32>
    %107 = vector.shape_cast %106 : vector<8xi32> to vector<8x1xi32>
    %108 = vector.broadcast %107 : vector<8x1xi32> to vector<8x128xi32>
    %109 = arith.cmpi eq, %15, %108 : vector<8x128xi32>
    %110 = arith.subf %94, %101 : vector<8x1xf32>
    %111 = arith.addf %46, %110 : vector<8x1xf32>
    %112 = arith.sitofp %107 : vector<8x1xi32> to vector<8x1xf32>
    %cst_39 = arith.constant 5.000000e-02 : f32
    %113 = vector.broadcast %cst_39 : f32 to vector<8x1xf32>
    %114 = arith.mulf %112, %113 : vector<8x1xf32>
    %cst_40 = arith.constant -1.000000e+00 : f32
    %115 = vector.broadcast %cst_40 : f32 to vector<8x1xf32>
    %116 = arith.addf %115, %114 : vector<8x1xf32>
    %c6_i32 = arith.constant 6 : i32
    %117 = vector.broadcast %c6_i32 : i32 to vector<8x8xi32>
    %118 = arith.cmpi eq, %16, %117 : vector<8x8xi32>
    %119 = vector.shape_cast %116 : vector<8x1xf32> to vector<8x1xf32>
    %120 = vector.broadcast %119 : vector<8x1xf32> to vector<8x8xf32>
    %121 = arith.select %118, %120, %56 : vector<8x8xi1>, vector<8x8xf32>
    %122 = arith.extui %109 : vector<8x128xi1> to vector<8x128xi32>
    %123 = arith.sitofp %122 : vector<8x128xi32> to vector<8x128xf32>
    %c0_41 = arith.constant 0 : index
    %c0_42 = arith.constant 0 : index
    %124 = vector.load %arg8[%c0_41, %c0_42] : memref<128x384xf32, #tpu.memory_space<vmem>>, vector<128x384xf32>
    %cst_43 = arith.constant dense<0.000000e+00> : vector<8x384xf32>
    %125 = tpu.matmul %123, %124, %cst_43 {dimension_numbers = #tpu.dot_dimension_numbers<[1], [0], [0], [1], [0, 0, 1, 1], [], []>} : vector<8x128xf32>, vector<128x384xf32>, vector<8x384xf32> -> vector<8x384xf32>
    %126 = vector.extract_strided_slice %125 {offsets = [0, 0], sizes = [8, 32], strides = [1, 1]} : vector<8x384xf32> to vector<8x32xf32>
    %127 = arith.addf %126, %90 : vector<8x32xf32>
    %128 = arith.negf %127 : vector<8x32xf32>
    %129 = math.exp %128 : vector<8x32xf32>
    %cst_44 = arith.constant 1.000000e+00 : f32
    %130 = vector.broadcast %cst_44 : f32 to vector<8x32xf32>
    %131 = arith.addf %130, %129 : vector<8x32xf32>
    %132 = arith.divf %130, %131 : vector<8x32xf32>
    %133 = vector.extract_strided_slice %125 {offsets = [0, 128], sizes = [8, 32], strides = [1, 1]} : vector<8x384xf32> to vector<8x32xf32>
    %134 = arith.addf %133, %91 : vector<8x32xf32>
    %135 = arith.negf %134 : vector<8x32xf32>
    %136 = math.exp %135 : vector<8x32xf32>
    %cst_45 = arith.constant 1.000000e+00 : f32
    %137 = vector.broadcast %cst_45 : f32 to vector<8x32xf32>
    %138 = arith.addf %137, %136 : vector<8x32xf32>
    %139 = arith.divf %137, %138 : vector<8x32xf32>
    %140 = vector.extract_strided_slice %125 {offsets = [0, 256], sizes = [8, 32], strides = [1, 1]} : vector<8x384xf32> to vector<8x32xf32>
    %141 = arith.mulf %132, %92 : vector<8x32xf32>
    %142 = arith.addf %140, %141 : vector<8x32xf32>
    %143 = math.tanh %142 : vector<8x32xf32>
    %cst_46 = arith.constant 1.000000e+00 : f32
    %144 = vector.broadcast %cst_46 : f32 to vector<8x32xf32>
    %145 = arith.subf %144, %139 : vector<8x32xf32>
    %146 = arith.mulf %145, %143 : vector<8x32xf32>
    %147 = arith.mulf %139, %83 : vector<8x32xf32>
    %148 = arith.addf %146, %147 : vector<8x32xf32>
    %c0_47 = arith.constant 0 : index
    %c0_48 = arith.constant 0 : index
    %149 = vector.load %arg9[%c0_47, %c0_48] : memref<32x512xf32, #tpu.memory_space<vmem>>, vector<32x512xf32>
    %cst_49 = arith.constant dense<0.000000e+00> : vector<8x512xf32>
    %150 = tpu.matmul %148, %149, %cst_49 {dimension_numbers = #tpu.dot_dimension_numbers<[1], [0], [0], [1], [0, 0, 1, 1], [], []>} : vector<8x32xf32>, vector<32x512xf32>, vector<8x512xf32> -> vector<8x512xf32>
    %c0_50 = arith.constant 0 : index
    %c0_51 = arith.constant 0 : index
    %151 = vector.load %arg10[%c0_50, %c0_51] : memref<1x512xf32, #tpu.memory_space<vmem>>, vector<1x512xf32>
    %152 = vector.broadcast %151 : vector<1x512xf32> to vector<8x512xf32>
    %153 = arith.addf %150, %152 : vector<8x512xf32>
    %154 = vector.extract_strided_slice %153 {offsets = [0, 0], sizes = [8, 128], strides = [1, 1]} : vector<8x512xf32> to vector<8x128xf32>
    %155 = vector.extract_strided_slice %153 {offsets = [0, 128], sizes = [8, 32], strides = [1, 1]} : vector<8x512xf32> to vector<8x32xf32>
    %156 = vector.extract_strided_slice %153 {offsets = [0, 256], sizes = [8, 32], strides = [1, 1]} : vector<8x512xf32> to vector<8x32xf32>
    %157 = vector.extract_strided_slice %153 {offsets = [0, 384], sizes = [8, 32], strides = [1, 1]} : vector<8x512xf32> to vector<8x32xf32>
    %cst_52 = arith.constant dense<0xFF800000> : vector<8xf32>
    %158 = vector.multi_reduction <maximumf>, %154, %cst_52 [1] : vector<8x128xf32> to vector<8xf32>
    %159 = vector.shape_cast %158 : vector<8xf32> to vector<8x1xf32>
    %160 = vector.broadcast %159 : vector<8x1xf32> to vector<8x128xf32>
    %161 = arith.subf %154, %160 : vector<8x128xf32>
    %162 = math.exp %161 : vector<8x128xf32>
    %cst_53 = arith.constant dense<0.000000e+00> : vector<8xf32>
    %163 = vector.multi_reduction <add>, %162, %cst_53 [1] : vector<8x128xf32> to vector<8xf32>
    %164 = vector.shape_cast %163 : vector<8xf32> to vector<8x1xf32>
    %165 = math.log %164 : vector<8x1xf32>
    %166 = arith.addf %165, %159 : vector<8x1xf32>
    %167 = vector.broadcast %159 : vector<8x1xf32> to vector<8x128xf32>
    %168 = arith.cmpf oeq, %154, %167 : vector<8x128xf32>
    %c128_i32_54 = arith.constant 128 : i32
    %169 = vector.broadcast %c128_i32_54 : i32 to vector<8x128xi32>
    %170 = arith.select %168, %15, %169 : vector<8x128xi1>, vector<8x128xi32>
    %cst_55 = arith.constant dense<2147483647> : vector<8xi32>
    %171 = vector.multi_reduction <minsi>, %170, %cst_55 [1] : vector<8x128xi32> to vector<8xi32>
    %172 = vector.shape_cast %171 : vector<8xi32> to vector<8x1xi32>
    %173 = vector.broadcast %172 : vector<8x1xi32> to vector<8x128xi32>
    %174 = arith.cmpi eq, %15, %173 : vector<8x128xi32>
    %175 = arith.subf %159, %166 : vector<8x1xf32>
    %176 = arith.addf %111, %175 : vector<8x1xf32>
    %177 = arith.sitofp %172 : vector<8x1xi32> to vector<8x1xf32>
    %cst_56 = arith.constant 5.000000e-02 : f32
    %178 = vector.broadcast %cst_56 : f32 to vector<8x1xf32>
    %179 = arith.mulf %177, %178 : vector<8x1xf32>
    %cst_57 = arith.constant -1.000000e+00 : f32
    %180 = vector.broadcast %cst_57 : f32 to vector<8x1xf32>
    %181 = arith.addf %180, %179 : vector<8x1xf32>
    %c5_i32 = arith.constant 5 : i32
    %182 = vector.broadcast %c5_i32 : i32 to vector<8x8xi32>
    %183 = arith.cmpi eq, %16, %182 : vector<8x8xi32>
    %184 = vector.shape_cast %181 : vector<8x1xf32> to vector<8x1xf32>
    %185 = vector.broadcast %184 : vector<8x1xf32> to vector<8x8xf32>
    %186 = arith.select %183, %185, %121 : vector<8x8xi1>, vector<8x8xf32>
    %187 = arith.extui %174 : vector<8x128xi1> to vector<8x128xi32>
    %188 = arith.sitofp %187 : vector<8x128xi32> to vector<8x128xf32>
    %c0_58 = arith.constant 0 : index
    %c0_59 = arith.constant 0 : index
    %189 = vector.load %arg8[%c0_58, %c0_59] : memref<128x384xf32, #tpu.memory_space<vmem>>, vector<128x384xf32>
    %cst_60 = arith.constant dense<0.000000e+00> : vector<8x384xf32>
    %190 = tpu.matmul %188, %189, %cst_60 {dimension_numbers = #tpu.dot_dimension_numbers<[1], [0], [0], [1], [0, 0, 1, 1], [], []>} : vector<8x128xf32>, vector<128x384xf32>, vector<8x384xf32> -> vector<8x384xf32>
    %191 = vector.extract_strided_slice %190 {offsets = [0, 0], sizes = [8, 32], strides = [1, 1]} : vector<8x384xf32> to vector<8x32xf32>
    %192 = arith.addf %191, %155 : vector<8x32xf32>
    %193 = arith.negf %192 : vector<8x32xf32>
    %194 = math.exp %193 : vector<8x32xf32>
    %cst_61 = arith.constant 1.000000e+00 : f32
    %195 = vector.broadcast %cst_61 : f32 to vector<8x32xf32>
    %196 = arith.addf %195, %194 : vector<8x32xf32>
    %197 = arith.divf %195, %196 : vector<8x32xf32>
    %198 = vector.extract_strided_slice %190 {offsets = [0, 128], sizes = [8, 32], strides = [1, 1]} : vector<8x384xf32> to vector<8x32xf32>
    %199 = arith.addf %198, %156 : vector<8x32xf32>
    %200 = arith.negf %199 : vector<8x32xf32>
    %201 = math.exp %200 : vector<8x32xf32>
    %cst_62 = arith.constant 1.000000e+00 : f32
    %202 = vector.broadcast %cst_62 : f32 to vector<8x32xf32>
    %203 = arith.addf %202, %201 : vector<8x32xf32>
    %204 = arith.divf %202, %203 : vector<8x32xf32>
    %205 = vector.extract_strided_slice %190 {offsets = [0, 256], sizes = [8, 32], strides = [1, 1]} : vector<8x384xf32> to vector<8x32xf32>
    %206 = arith.mulf %197, %157 : vector<8x32xf32>
    %207 = arith.addf %205, %206 : vector<8x32xf32>
    %208 = math.tanh %207 : vector<8x32xf32>
    %cst_63 = arith.constant 1.000000e+00 : f32
    %209 = vector.broadcast %cst_63 : f32 to vector<8x32xf32>
    %210 = arith.subf %209, %204 : vector<8x32xf32>
    %211 = arith.mulf %210, %208 : vector<8x32xf32>
    %212 = arith.mulf %204, %148 : vector<8x32xf32>
    %213 = arith.addf %211, %212 : vector<8x32xf32>
    %c0_64 = arith.constant 0 : index
    %c0_65 = arith.constant 0 : index
    %214 = vector.load %arg9[%c0_64, %c0_65] : memref<32x512xf32, #tpu.memory_space<vmem>>, vector<32x512xf32>
    %cst_66 = arith.constant dense<0.000000e+00> : vector<8x512xf32>
    %215 = tpu.matmul %213, %214, %cst_66 {dimension_numbers = #tpu.dot_dimension_numbers<[1], [0], [0], [1], [0, 0, 1, 1], [], []>} : vector<8x32xf32>, vector<32x512xf32>, vector<8x512xf32> -> vector<8x512xf32>
    %c0_67 = arith.constant 0 : index
    %c0_68 = arith.constant 0 : index
    %216 = vector.load %arg10[%c0_67, %c0_68] : memref<1x512xf32, #tpu.memory_space<vmem>>, vector<1x512xf32>
    %217 = vector.broadcast %216 : vector<1x512xf32> to vector<8x512xf32>
    %218 = arith.addf %215, %217 : vector<8x512xf32>
    %219 = vector.extract_strided_slice %218 {offsets = [0, 0], sizes = [8, 128], strides = [1, 1]} : vector<8x512xf32> to vector<8x128xf32>
    %220 = vector.extract_strided_slice %218 {offsets = [0, 128], sizes = [8, 32], strides = [1, 1]} : vector<8x512xf32> to vector<8x32xf32>
    %221 = vector.extract_strided_slice %218 {offsets = [0, 256], sizes = [8, 32], strides = [1, 1]} : vector<8x512xf32> to vector<8x32xf32>
    %222 = vector.extract_strided_slice %218 {offsets = [0, 384], sizes = [8, 32], strides = [1, 1]} : vector<8x512xf32> to vector<8x32xf32>
    %cst_69 = arith.constant dense<0xFF800000> : vector<8xf32>
    %223 = vector.multi_reduction <maximumf>, %219, %cst_69 [1] : vector<8x128xf32> to vector<8xf32>
    %224 = vector.shape_cast %223 : vector<8xf32> to vector<8x1xf32>
    %225 = vector.broadcast %224 : vector<8x1xf32> to vector<8x128xf32>
    %226 = arith.subf %219, %225 : vector<8x128xf32>
    %227 = math.exp %226 : vector<8x128xf32>
    %cst_70 = arith.constant dense<0.000000e+00> : vector<8xf32>
    %228 = vector.multi_reduction <add>, %227, %cst_70 [1] : vector<8x128xf32> to vector<8xf32>
    %229 = vector.shape_cast %228 : vector<8xf32> to vector<8x1xf32>
    %230 = math.log %229 : vector<8x1xf32>
    %231 = arith.addf %230, %224 : vector<8x1xf32>
    %232 = vector.broadcast %224 : vector<8x1xf32> to vector<8x128xf32>
    %233 = arith.cmpf oeq, %219, %232 : vector<8x128xf32>
    %c128_i32_71 = arith.constant 128 : i32
    %234 = vector.broadcast %c128_i32_71 : i32 to vector<8x128xi32>
    %235 = arith.select %233, %15, %234 : vector<8x128xi1>, vector<8x128xi32>
    %cst_72 = arith.constant dense<2147483647> : vector<8xi32>
    %236 = vector.multi_reduction <minsi>, %235, %cst_72 [1] : vector<8x128xi32> to vector<8xi32>
    %237 = vector.shape_cast %236 : vector<8xi32> to vector<8x1xi32>
    %238 = vector.broadcast %237 : vector<8x1xi32> to vector<8x128xi32>
    %239 = arith.cmpi eq, %15, %238 : vector<8x128xi32>
    %240 = arith.subf %224, %231 : vector<8x1xf32>
    %241 = arith.addf %176, %240 : vector<8x1xf32>
    %242 = arith.sitofp %237 : vector<8x1xi32> to vector<8x1xf32>
    %cst_73 = arith.constant 5.000000e-02 : f32
    %243 = vector.broadcast %cst_73 : f32 to vector<8x1xf32>
    %244 = arith.mulf %242, %243 : vector<8x1xf32>
    %cst_74 = arith.constant -1.000000e+00 : f32
    %245 = vector.broadcast %cst_74 : f32 to vector<8x1xf32>
    %246 = arith.addf %245, %244 : vector<8x1xf32>
    %c4_i32 = arith.constant 4 : i32
    %247 = vector.broadcast %c4_i32 : i32 to vector<8x8xi32>
    %248 = arith.cmpi eq, %16, %247 : vector<8x8xi32>
    %249 = vector.shape_cast %246 : vector<8x1xf32> to vector<8x1xf32>
    %250 = vector.broadcast %249 : vector<8x1xf32> to vector<8x8xf32>
    %251 = arith.select %248, %250, %186 : vector<8x8xi1>, vector<8x8xf32>
    %252 = arith.extui %239 : vector<8x128xi1> to vector<8x128xi32>
    %253 = arith.sitofp %252 : vector<8x128xi32> to vector<8x128xf32>
    %c0_75 = arith.constant 0 : index
    %c0_76 = arith.constant 0 : index
    %254 = vector.load %arg8[%c0_75, %c0_76] : memref<128x384xf32, #tpu.memory_space<vmem>>, vector<128x384xf32>
    %cst_77 = arith.constant dense<0.000000e+00> : vector<8x384xf32>
    %255 = tpu.matmul %253, %254, %cst_77 {dimension_numbers = #tpu.dot_dimension_numbers<[1], [0], [0], [1], [0, 0, 1, 1], [], []>} : vector<8x128xf32>, vector<128x384xf32>, vector<8x384xf32> -> vector<8x384xf32>
    %256 = vector.extract_strided_slice %255 {offsets = [0, 0], sizes = [8, 32], strides = [1, 1]} : vector<8x384xf32> to vector<8x32xf32>
    %257 = arith.addf %256, %220 : vector<8x32xf32>
    %258 = arith.negf %257 : vector<8x32xf32>
    %259 = math.exp %258 : vector<8x32xf32>
    %cst_78 = arith.constant 1.000000e+00 : f32
    %260 = vector.broadcast %cst_78 : f32 to vector<8x32xf32>
    %261 = arith.addf %260, %259 : vector<8x32xf32>
    %262 = arith.divf %260, %261 : vector<8x32xf32>
    %263 = vector.extract_strided_slice %255 {offsets = [0, 128], sizes = [8, 32], strides = [1, 1]} : vector<8x384xf32> to vector<8x32xf32>
    %264 = arith.addf %263, %221 : vector<8x32xf32>
    %265 = arith.negf %264 : vector<8x32xf32>
    %266 = math.exp %265 : vector<8x32xf32>
    %cst_79 = arith.constant 1.000000e+00 : f32
    %267 = vector.broadcast %cst_79 : f32 to vector<8x32xf32>
    %268 = arith.addf %267, %266 : vector<8x32xf32>
    %269 = arith.divf %267, %268 : vector<8x32xf32>
    %270 = vector.extract_strided_slice %255 {offsets = [0, 256], sizes = [8, 32], strides = [1, 1]} : vector<8x384xf32> to vector<8x32xf32>
    %271 = arith.mulf %262, %222 : vector<8x32xf32>
    %272 = arith.addf %270, %271 : vector<8x32xf32>
    %273 = math.tanh %272 : vector<8x32xf32>
    %cst_80 = arith.constant 1.000000e+00 : f32
    %274 = vector.broadcast %cst_80 : f32 to vector<8x32xf32>
    %275 = arith.subf %274, %269 : vector<8x32xf32>
    %276 = arith.mulf %275, %273 : vector<8x32xf32>
    %277 = arith.mulf %269, %213 : vector<8x32xf32>
    %278 = arith.addf %276, %277 : vector<8x32xf32>
    %c0_81 = arith.constant 0 : index
    %c0_82 = arith.constant 0 : index
    %279 = vector.load %arg9[%c0_81, %c0_82] : memref<32x512xf32, #tpu.memory_space<vmem>>, vector<32x512xf32>
    %cst_83 = arith.constant dense<0.000000e+00> : vector<8x512xf32>
    %280 = tpu.matmul %278, %279, %cst_83 {dimension_numbers = #tpu.dot_dimension_numbers<[1], [0], [0], [1], [0, 0, 1, 1], [], []>} : vector<8x32xf32>, vector<32x512xf32>, vector<8x512xf32> -> vector<8x512xf32>
    %c0_84 = arith.constant 0 : index
    %c0_85 = arith.constant 0 : index
    %281 = vector.load %arg10[%c0_84, %c0_85] : memref<1x512xf32, #tpu.memory_space<vmem>>, vector<1x512xf32>
    %282 = vector.broadcast %281 : vector<1x512xf32> to vector<8x512xf32>
    %283 = arith.addf %280, %282 : vector<8x512xf32>
    %284 = vector.extract_strided_slice %283 {offsets = [0, 0], sizes = [8, 128], strides = [1, 1]} : vector<8x512xf32> to vector<8x128xf32>
    %285 = vector.extract_strided_slice %283 {offsets = [0, 128], sizes = [8, 32], strides = [1, 1]} : vector<8x512xf32> to vector<8x32xf32>
    %286 = vector.extract_strided_slice %283 {offsets = [0, 256], sizes = [8, 32], strides = [1, 1]} : vector<8x512xf32> to vector<8x32xf32>
    %287 = vector.extract_strided_slice %283 {offsets = [0, 384], sizes = [8, 32], strides = [1, 1]} : vector<8x512xf32> to vector<8x32xf32>
    %cst_86 = arith.constant dense<0xFF800000> : vector<8xf32>
    %288 = vector.multi_reduction <maximumf>, %284, %cst_86 [1] : vector<8x128xf32> to vector<8xf32>
    %289 = vector.shape_cast %288 : vector<8xf32> to vector<8x1xf32>
    %290 = vector.broadcast %289 : vector<8x1xf32> to vector<8x128xf32>
    %291 = arith.subf %284, %290 : vector<8x128xf32>
    %292 = math.exp %291 : vector<8x128xf32>
    %cst_87 = arith.constant dense<0.000000e+00> : vector<8xf32>
    %293 = vector.multi_reduction <add>, %292, %cst_87 [1] : vector<8x128xf32> to vector<8xf32>
    %294 = vector.shape_cast %293 : vector<8xf32> to vector<8x1xf32>
    %295 = math.log %294 : vector<8x1xf32>
    %296 = arith.addf %295, %289 : vector<8x1xf32>
    %297 = vector.broadcast %289 : vector<8x1xf32> to vector<8x128xf32>
    %298 = arith.cmpf oeq, %284, %297 : vector<8x128xf32>
    %c128_i32_88 = arith.constant 128 : i32
    %299 = vector.broadcast %c128_i32_88 : i32 to vector<8x128xi32>
    %300 = arith.select %298, %15, %299 : vector<8x128xi1>, vector<8x128xi32>
    %cst_89 = arith.constant dense<2147483647> : vector<8xi32>
    %301 = vector.multi_reduction <minsi>, %300, %cst_89 [1] : vector<8x128xi32> to vector<8xi32>
    %302 = vector.shape_cast %301 : vector<8xi32> to vector<8x1xi32>
    %303 = vector.broadcast %302 : vector<8x1xi32> to vector<8x128xi32>
    %304 = arith.cmpi eq, %15, %303 : vector<8x128xi32>
    %305 = arith.subf %289, %296 : vector<8x1xf32>
    %306 = arith.addf %241, %305 : vector<8x1xf32>
    %307 = arith.sitofp %302 : vector<8x1xi32> to vector<8x1xf32>
    %cst_90 = arith.constant 5.000000e-02 : f32
    %308 = vector.broadcast %cst_90 : f32 to vector<8x1xf32>
    %309 = arith.mulf %307, %308 : vector<8x1xf32>
    %cst_91 = arith.constant -1.000000e+00 : f32
    %310 = vector.broadcast %cst_91 : f32 to vector<8x1xf32>
    %311 = arith.addf %310, %309 : vector<8x1xf32>
    %c3_i32 = arith.constant 3 : i32
    %312 = vector.broadcast %c3_i32 : i32 to vector<8x8xi32>
    %313 = arith.cmpi eq, %16, %312 : vector<8x8xi32>
    %314 = vector.shape_cast %311 : vector<8x1xf32> to vector<8x1xf32>
    %315 = vector.broadcast %314 : vector<8x1xf32> to vector<8x8xf32>
    %316 = arith.select %313, %315, %251 : vector<8x8xi1>, vector<8x8xf32>
    %317 = arith.extui %304 : vector<8x128xi1> to vector<8x128xi32>
    %318 = arith.sitofp %317 : vector<8x128xi32> to vector<8x128xf32>
    %c0_92 = arith.constant 0 : index
    %c0_93 = arith.constant 0 : index
    %319 = vector.load %arg8[%c0_92, %c0_93] : memref<128x384xf32, #tpu.memory_space<vmem>>, vector<128x384xf32>
    %cst_94 = arith.constant dense<0.000000e+00> : vector<8x384xf32>
    %320 = tpu.matmul %318, %319, %cst_94 {dimension_numbers = #tpu.dot_dimension_numbers<[1], [0], [0], [1], [0, 0, 1, 1], [], []>} : vector<8x128xf32>, vector<128x384xf32>, vector<8x384xf32> -> vector<8x384xf32>
    %321 = vector.extract_strided_slice %320 {offsets = [0, 0], sizes = [8, 32], strides = [1, 1]} : vector<8x384xf32> to vector<8x32xf32>
    %322 = arith.addf %321, %285 : vector<8x32xf32>
    %323 = arith.negf %322 : vector<8x32xf32>
    %324 = math.exp %323 : vector<8x32xf32>
    %cst_95 = arith.constant 1.000000e+00 : f32
    %325 = vector.broadcast %cst_95 : f32 to vector<8x32xf32>
    %326 = arith.addf %325, %324 : vector<8x32xf32>
    %327 = arith.divf %325, %326 : vector<8x32xf32>
    %328 = vector.extract_strided_slice %320 {offsets = [0, 128], sizes = [8, 32], strides = [1, 1]} : vector<8x384xf32> to vector<8x32xf32>
    %329 = arith.addf %328, %286 : vector<8x32xf32>
    %330 = arith.negf %329 : vector<8x32xf32>
    %331 = math.exp %330 : vector<8x32xf32>
    %cst_96 = arith.constant 1.000000e+00 : f32
    %332 = vector.broadcast %cst_96 : f32 to vector<8x32xf32>
    %333 = arith.addf %332, %331 : vector<8x32xf32>
    %334 = arith.divf %332, %333 : vector<8x32xf32>
    %335 = vector.extract_strided_slice %320 {offsets = [0, 256], sizes = [8, 32], strides = [1, 1]} : vector<8x384xf32> to vector<8x32xf32>
    %336 = arith.mulf %327, %287 : vector<8x32xf32>
    %337 = arith.addf %335, %336 : vector<8x32xf32>
    %338 = math.tanh %337 : vector<8x32xf32>
    %cst_97 = arith.constant 1.000000e+00 : f32
    %339 = vector.broadcast %cst_97 : f32 to vector<8x32xf32>
    %340 = arith.subf %339, %334 : vector<8x32xf32>
    %341 = arith.mulf %340, %338 : vector<8x32xf32>
    %342 = arith.mulf %334, %278 : vector<8x32xf32>
    %343 = arith.addf %341, %342 : vector<8x32xf32>
    %c0_98 = arith.constant 0 : index
    %c0_99 = arith.constant 0 : index
    %344 = vector.load %arg9[%c0_98, %c0_99] : memref<32x512xf32, #tpu.memory_space<vmem>>, vector<32x512xf32>
    %cst_100 = arith.constant dense<0.000000e+00> : vector<8x512xf32>
    %345 = tpu.matmul %343, %344, %cst_100 {dimension_numbers = #tpu.dot_dimension_numbers<[1], [0], [0], [1], [0, 0, 1, 1], [], []>} : vector<8x32xf32>, vector<32x512xf32>, vector<8x512xf32> -> vector<8x512xf32>
    %c0_101 = arith.constant 0 : index
    %c0_102 = arith.constant 0 : index
    %346 = vector.load %arg10[%c0_101, %c0_102] : memref<1x512xf32, #tpu.memory_space<vmem>>, vector<1x512xf32>
    %347 = vector.broadcast %346 : vector<1x512xf32> to vector<8x512xf32>
    %348 = arith.addf %345, %347 : vector<8x512xf32>
    %349 = vector.extract_strided_slice %348 {offsets = [0, 0], sizes = [8, 128], strides = [1, 1]} : vector<8x512xf32> to vector<8x128xf32>
    %350 = vector.extract_strided_slice %348 {offsets = [0, 128], sizes = [8, 32], strides = [1, 1]} : vector<8x512xf32> to vector<8x32xf32>
    %351 = vector.extract_strided_slice %348 {offsets = [0, 256], sizes = [8, 32], strides = [1, 1]} : vector<8x512xf32> to vector<8x32xf32>
    %352 = vector.extract_strided_slice %348 {offsets = [0, 384], sizes = [8, 32], strides = [1, 1]} : vector<8x512xf32> to vector<8x32xf32>
    %cst_103 = arith.constant dense<0xFF800000> : vector<8xf32>
    %353 = vector.multi_reduction <maximumf>, %349, %cst_103 [1] : vector<8x128xf32> to vector<8xf32>
    %354 = vector.shape_cast %353 : vector<8xf32> to vector<8x1xf32>
    %355 = vector.broadcast %354 : vector<8x1xf32> to vector<8x128xf32>
    %356 = arith.subf %349, %355 : vector<8x128xf32>
    %357 = math.exp %356 : vector<8x128xf32>
    %cst_104 = arith.constant dense<0.000000e+00> : vector<8xf32>
    %358 = vector.multi_reduction <add>, %357, %cst_104 [1] : vector<8x128xf32> to vector<8xf32>
    %359 = vector.shape_cast %358 : vector<8xf32> to vector<8x1xf32>
    %360 = math.log %359 : vector<8x1xf32>
    %361 = arith.addf %360, %354 : vector<8x1xf32>
    %362 = vector.broadcast %354 : vector<8x1xf32> to vector<8x128xf32>
    %363 = arith.cmpf oeq, %349, %362 : vector<8x128xf32>
    %c128_i32_105 = arith.constant 128 : i32
    %364 = vector.broadcast %c128_i32_105 : i32 to vector<8x128xi32>
    %365 = arith.select %363, %15, %364 : vector<8x128xi1>, vector<8x128xi32>
    %cst_106 = arith.constant dense<2147483647> : vector<8xi32>
    %366 = vector.multi_reduction <minsi>, %365, %cst_106 [1] : vector<8x128xi32> to vector<8xi32>
    %367 = vector.shape_cast %366 : vector<8xi32> to vector<8x1xi32>
    %368 = vector.broadcast %367 : vector<8x1xi32> to vector<8x128xi32>
    %369 = arith.cmpi eq, %15, %368 : vector<8x128xi32>
    %370 = arith.subf %354, %361 : vector<8x1xf32>
    %371 = arith.addf %306, %370 : vector<8x1xf32>
    %372 = arith.sitofp %367 : vector<8x1xi32> to vector<8x1xf32>
    %cst_107 = arith.constant 5.000000e-02 : f32
    %373 = vector.broadcast %cst_107 : f32 to vector<8x1xf32>
    %374 = arith.mulf %372, %373 : vector<8x1xf32>
    %cst_108 = arith.constant -1.000000e+00 : f32
    %375 = vector.broadcast %cst_108 : f32 to vector<8x1xf32>
    %376 = arith.addf %375, %374 : vector<8x1xf32>
    %c2_i32 = arith.constant 2 : i32
    %377 = vector.broadcast %c2_i32 : i32 to vector<8x8xi32>
    %378 = arith.cmpi eq, %16, %377 : vector<8x8xi32>
    %379 = vector.shape_cast %376 : vector<8x1xf32> to vector<8x1xf32>
    %380 = vector.broadcast %379 : vector<8x1xf32> to vector<8x8xf32>
    %381 = arith.select %378, %380, %316 : vector<8x8xi1>, vector<8x8xf32>
    %382 = arith.extui %369 : vector<8x128xi1> to vector<8x128xi32>
    %383 = arith.sitofp %382 : vector<8x128xi32> to vector<8x128xf32>
    %c0_109 = arith.constant 0 : index
    %c0_110 = arith.constant 0 : index
    %384 = vector.load %arg8[%c0_109, %c0_110] : memref<128x384xf32, #tpu.memory_space<vmem>>, vector<128x384xf32>
    %cst_111 = arith.constant dense<0.000000e+00> : vector<8x384xf32>
    %385 = tpu.matmul %383, %384, %cst_111 {dimension_numbers = #tpu.dot_dimension_numbers<[1], [0], [0], [1], [0, 0, 1, 1], [], []>} : vector<8x128xf32>, vector<128x384xf32>, vector<8x384xf32> -> vector<8x384xf32>
    %386 = vector.extract_strided_slice %385 {offsets = [0, 0], sizes = [8, 32], strides = [1, 1]} : vector<8x384xf32> to vector<8x32xf32>
    %387 = arith.addf %386, %350 : vector<8x32xf32>
    %388 = arith.negf %387 : vector<8x32xf32>
    %389 = math.exp %388 : vector<8x32xf32>
    %cst_112 = arith.constant 1.000000e+00 : f32
    %390 = vector.broadcast %cst_112 : f32 to vector<8x32xf32>
    %391 = arith.addf %390, %389 : vector<8x32xf32>
    %392 = arith.divf %390, %391 : vector<8x32xf32>
    %393 = vector.extract_strided_slice %385 {offsets = [0, 128], sizes = [8, 32], strides = [1, 1]} : vector<8x384xf32> to vector<8x32xf32>
    %394 = arith.addf %393, %351 : vector<8x32xf32>
    %395 = arith.negf %394 : vector<8x32xf32>
    %396 = math.exp %395 : vector<8x32xf32>
    %cst_113 = arith.constant 1.000000e+00 : f32
    %397 = vector.broadcast %cst_113 : f32 to vector<8x32xf32>
    %398 = arith.addf %397, %396 : vector<8x32xf32>
    %399 = arith.divf %397, %398 : vector<8x32xf32>
    %400 = vector.extract_strided_slice %385 {offsets = [0, 256], sizes = [8, 32], strides = [1, 1]} : vector<8x384xf32> to vector<8x32xf32>
    %401 = arith.mulf %392, %352 : vector<8x32xf32>
    %402 = arith.addf %400, %401 : vector<8x32xf32>
    %403 = math.tanh %402 : vector<8x32xf32>
    %cst_114 = arith.constant 1.000000e+00 : f32
    %404 = vector.broadcast %cst_114 : f32 to vector<8x32xf32>
    %405 = arith.subf %404, %399 : vector<8x32xf32>
    %406 = arith.mulf %405, %403 : vector<8x32xf32>
    %407 = arith.mulf %399, %343 : vector<8x32xf32>
    %408 = arith.addf %406, %407 : vector<8x32xf32>
    %c0_115 = arith.constant 0 : index
    %c0_116 = arith.constant 0 : index
    %409 = vector.load %arg9[%c0_115, %c0_116] : memref<32x512xf32, #tpu.memory_space<vmem>>, vector<32x512xf32>
    %cst_117 = arith.constant dense<0.000000e+00> : vector<8x512xf32>
    %410 = tpu.matmul %408, %409, %cst_117 {dimension_numbers = #tpu.dot_dimension_numbers<[1], [0], [0], [1], [0, 0, 1, 1], [], []>} : vector<8x32xf32>, vector<32x512xf32>, vector<8x512xf32> -> vector<8x512xf32>
    %c0_118 = arith.constant 0 : index
    %c0_119 = arith.constant 0 : index
    %411 = vector.load %arg10[%c0_118, %c0_119] : memref<1x512xf32, #tpu.memory_space<vmem>>, vector<1x512xf32>
    %412 = vector.broadcast %411 : vector<1x512xf32> to vector<8x512xf32>
    %413 = arith.addf %410, %412 : vector<8x512xf32>
    %414 = vector.extract_strided_slice %413 {offsets = [0, 0], sizes = [8, 128], strides = [1, 1]} : vector<8x512xf32> to vector<8x128xf32>
    %415 = vector.extract_strided_slice %413 {offsets = [0, 128], sizes = [8, 32], strides = [1, 1]} : vector<8x512xf32> to vector<8x32xf32>
    %416 = vector.extract_strided_slice %413 {offsets = [0, 256], sizes = [8, 32], strides = [1, 1]} : vector<8x512xf32> to vector<8x32xf32>
    %417 = vector.extract_strided_slice %413 {offsets = [0, 384], sizes = [8, 32], strides = [1, 1]} : vector<8x512xf32> to vector<8x32xf32>
    %cst_120 = arith.constant dense<0xFF800000> : vector<8xf32>
    %418 = vector.multi_reduction <maximumf>, %414, %cst_120 [1] : vector<8x128xf32> to vector<8xf32>
    %419 = vector.shape_cast %418 : vector<8xf32> to vector<8x1xf32>
    %420 = vector.broadcast %419 : vector<8x1xf32> to vector<8x128xf32>
    %421 = arith.subf %414, %420 : vector<8x128xf32>
    %422 = math.exp %421 : vector<8x128xf32>
    %cst_121 = arith.constant dense<0.000000e+00> : vector<8xf32>
    %423 = vector.multi_reduction <add>, %422, %cst_121 [1] : vector<8x128xf32> to vector<8xf32>
    %424 = vector.shape_cast %423 : vector<8xf32> to vector<8x1xf32>
    %425 = math.log %424 : vector<8x1xf32>
    %426 = arith.addf %425, %419 : vector<8x1xf32>
    %427 = vector.broadcast %419 : vector<8x1xf32> to vector<8x128xf32>
    %428 = arith.cmpf oeq, %414, %427 : vector<8x128xf32>
    %c128_i32_122 = arith.constant 128 : i32
    %429 = vector.broadcast %c128_i32_122 : i32 to vector<8x128xi32>
    %430 = arith.select %428, %15, %429 : vector<8x128xi1>, vector<8x128xi32>
    %cst_123 = arith.constant dense<2147483647> : vector<8xi32>
    %431 = vector.multi_reduction <minsi>, %430, %cst_123 [1] : vector<8x128xi32> to vector<8xi32>
    %432 = vector.shape_cast %431 : vector<8xi32> to vector<8x1xi32>
    %433 = vector.broadcast %432 : vector<8x1xi32> to vector<8x128xi32>
    %434 = arith.cmpi eq, %15, %433 : vector<8x128xi32>
    %435 = arith.subf %419, %426 : vector<8x1xf32>
    %436 = arith.addf %371, %435 : vector<8x1xf32>
    %437 = arith.sitofp %432 : vector<8x1xi32> to vector<8x1xf32>
    %cst_124 = arith.constant 5.000000e-02 : f32
    %438 = vector.broadcast %cst_124 : f32 to vector<8x1xf32>
    %439 = arith.mulf %437, %438 : vector<8x1xf32>
    %cst_125 = arith.constant -1.000000e+00 : f32
    %440 = vector.broadcast %cst_125 : f32 to vector<8x1xf32>
    %441 = arith.addf %440, %439 : vector<8x1xf32>
    %c1_i32 = arith.constant 1 : i32
    %442 = vector.broadcast %c1_i32 : i32 to vector<8x8xi32>
    %443 = arith.cmpi eq, %16, %442 : vector<8x8xi32>
    %444 = vector.shape_cast %441 : vector<8x1xf32> to vector<8x1xf32>
    %445 = vector.broadcast %444 : vector<8x1xf32> to vector<8x8xf32>
    %446 = arith.select %443, %445, %381 : vector<8x8xi1>, vector<8x8xf32>
    %447 = arith.extui %434 : vector<8x128xi1> to vector<8x128xi32>
    %448 = arith.sitofp %447 : vector<8x128xi32> to vector<8x128xf32>
    %c0_126 = arith.constant 0 : index
    %c0_127 = arith.constant 0 : index
    %449 = vector.load %arg8[%c0_126, %c0_127] : memref<128x384xf32, #tpu.memory_space<vmem>>, vector<128x384xf32>
    %cst_128 = arith.constant dense<0.000000e+00> : vector<8x384xf32>
    %450 = tpu.matmul %448, %449, %cst_128 {dimension_numbers = #tpu.dot_dimension_numbers<[1], [0], [0], [1], [0, 0, 1, 1], [], []>} : vector<8x128xf32>, vector<128x384xf32>, vector<8x384xf32> -> vector<8x384xf32>
    %451 = vector.extract_strided_slice %450 {offsets = [0, 0], sizes = [8, 32], strides = [1, 1]} : vector<8x384xf32> to vector<8x32xf32>
    %452 = arith.addf %451, %415 : vector<8x32xf32>
    %453 = arith.negf %452 : vector<8x32xf32>
    %454 = math.exp %453 : vector<8x32xf32>
    %cst_129 = arith.constant 1.000000e+00 : f32
    %455 = vector.broadcast %cst_129 : f32 to vector<8x32xf32>
    %456 = arith.addf %455, %454 : vector<8x32xf32>
    %457 = arith.divf %455, %456 : vector<8x32xf32>
    %458 = vector.extract_strided_slice %450 {offsets = [0, 128], sizes = [8, 32], strides = [1, 1]} : vector<8x384xf32> to vector<8x32xf32>
    %459 = arith.addf %458, %416 : vector<8x32xf32>
    %460 = arith.negf %459 : vector<8x32xf32>
    %461 = math.exp %460 : vector<8x32xf32>
    %cst_130 = arith.constant 1.000000e+00 : f32
    %462 = vector.broadcast %cst_130 : f32 to vector<8x32xf32>
    %463 = arith.addf %462, %461 : vector<8x32xf32>
    %464 = arith.divf %462, %463 : vector<8x32xf32>
    %465 = vector.extract_strided_slice %450 {offsets = [0, 256], sizes = [8, 32], strides = [1, 1]} : vector<8x384xf32> to vector<8x32xf32>
    %466 = arith.mulf %457, %417 : vector<8x32xf32>
    %467 = arith.addf %465, %466 : vector<8x32xf32>
    %468 = math.tanh %467 : vector<8x32xf32>
    %cst_131 = arith.constant 1.000000e+00 : f32
    %469 = vector.broadcast %cst_131 : f32 to vector<8x32xf32>
    %470 = arith.subf %469, %464 : vector<8x32xf32>
    %471 = arith.mulf %470, %468 : vector<8x32xf32>
    %472 = arith.mulf %464, %408 : vector<8x32xf32>
    %473 = arith.addf %471, %472 : vector<8x32xf32>
    %c0_132 = arith.constant 0 : index
    %c0_133 = arith.constant 0 : index
    %474 = vector.load %arg9[%c0_132, %c0_133] : memref<32x512xf32, #tpu.memory_space<vmem>>, vector<32x512xf32>
    %cst_134 = arith.constant dense<0.000000e+00> : vector<8x512xf32>
    %475 = tpu.matmul %473, %474, %cst_134 {dimension_numbers = #tpu.dot_dimension_numbers<[1], [0], [0], [1], [0, 0, 1, 1], [], []>} : vector<8x32xf32>, vector<32x512xf32>, vector<8x512xf32> -> vector<8x512xf32>
    %c0_135 = arith.constant 0 : index
    %c0_136 = arith.constant 0 : index
    %476 = vector.load %arg10[%c0_135, %c0_136] : memref<1x512xf32, #tpu.memory_space<vmem>>, vector<1x512xf32>
    %477 = vector.broadcast %476 : vector<1x512xf32> to vector<8x512xf32>
    %478 = arith.addf %475, %477 : vector<8x512xf32>
    %479 = vector.extract_strided_slice %478 {offsets = [0, 0], sizes = [8, 128], strides = [1, 1]} : vector<8x512xf32> to vector<8x128xf32>
    %cst_137 = arith.constant dense<0xFF800000> : vector<8xf32>
    %480 = vector.multi_reduction <maximumf>, %479, %cst_137 [1] : vector<8x128xf32> to vector<8xf32>
    %481 = vector.shape_cast %480 : vector<8xf32> to vector<8x1xf32>
    %482 = vector.broadcast %481 : vector<8x1xf32> to vector<8x128xf32>
    %483 = arith.subf %479, %482 : vector<8x128xf32>
    %484 = math.exp %483 : vector<8x128xf32>
    %cst_138 = arith.constant dense<0.000000e+00> : vector<8xf32>
    %485 = vector.multi_reduction <add>, %484, %cst_138 [1] : vector<8x128xf32> to vector<8xf32>
    %486 = vector.shape_cast %485 : vector<8xf32> to vector<8x1xf32>
    %487 = math.log %486 : vector<8x1xf32>
    %488 = arith.addf %487, %481 : vector<8x1xf32>
    %489 = vector.broadcast %481 : vector<8x1xf32> to vector<8x128xf32>
    %490 = arith.cmpf oeq, %479, %489 : vector<8x128xf32>
    %c128_i32_139 = arith.constant 128 : i32
    %491 = vector.broadcast %c128_i32_139 : i32 to vector<8x128xi32>
    %492 = arith.select %490, %15, %491 : vector<8x128xi1>, vector<8x128xi32>
    %cst_140 = arith.constant dense<2147483647> : vector<8xi32>
    %493 = vector.multi_reduction <minsi>, %492, %cst_140 [1] : vector<8x128xi32> to vector<8xi32>
    %494 = vector.shape_cast %493 : vector<8xi32> to vector<8x1xi32>
    %495 = arith.subf %481, %488 : vector<8x1xf32>
    %496 = arith.addf %436, %495 : vector<8x1xf32>
    %497 = arith.sitofp %494 : vector<8x1xi32> to vector<8x1xf32>
    %cst_141 = arith.constant 5.000000e-02 : f32
    %498 = vector.broadcast %cst_141 : f32 to vector<8x1xf32>
    %499 = arith.mulf %497, %498 : vector<8x1xf32>
    %cst_142 = arith.constant -1.000000e+00 : f32
    %500 = vector.broadcast %cst_142 : f32 to vector<8x1xf32>
    %501 = arith.addf %500, %499 : vector<8x1xf32>
    %c0_i32 = arith.constant 0 : i32
    %502 = vector.broadcast %c0_i32 : i32 to vector<8x8xi32>
    %503 = arith.cmpi eq, %16, %502 : vector<8x8xi32>
    %504 = vector.shape_cast %501 : vector<8x1xf32> to vector<8x1xf32>
    %505 = vector.broadcast %504 : vector<8x1xf32> to vector<8x8xf32>
    %506 = arith.select %503, %505, %446 : vector<8x8xi1>, vector<8x8xf32>
    %c0_143 = arith.constant 0 : index
    %c0_144 = arith.constant 0 : index
    %507 = vector.load %arg11[%c0_143, %c0_144] : memref<8x8xf32, #tpu.memory_space<vmem>>, vector<8x8xf32>
    tpu.vector_store %arg11[%c0_143, %c0_144], %506 {strides = array<i32>} : memref<8x8xf32, #tpu.memory_space<vmem>>, vector<8x8xf32>,
    %c0_145 = arith.constant 0 : index
    %c0_146 = arith.constant 0 : index
    %508 = vector.load %arg12[%c0_145, %c0_146] : memref<8x1xf32, #tpu.memory_space<vmem>>, vector<8x1xf32>
    tpu.vector_store %arg12[%c0_145, %c0_146], %496 {strides = array<i32>} : memref<8x1xf32, #tpu.memory_space<vmem>>, vector<8x1xf32>,
    return
  }
  func.func @transform_0(%arg0: i32, %arg1: memref<1xi32, #tpu.memory_space<smem>>) -> (i32, i32) {
    %c0_i32 = arith.constant 0 : i32
    %c0_i32_0 = arith.constant 0 : i32
    return %arg0, %c0_i32 : i32, i32
  }
  func.func @transform_1(%arg0: i32, %arg1: memref<1xi32, #tpu.memory_space<smem>>) -> (i32, i32) {
    %c0_i32 = arith.constant 0 : i32
    %c0_i32_0 = arith.constant 0 : i32
    return %arg0, %c0_i32 : i32, i32
  }
  func.func @transform_2(%arg0: i32, %arg1: memref<1xi32, #tpu.memory_space<smem>>) -> (i32, i32) {
    %c0_i32 = arith.constant 0 : i32
    %c0_i32_0 = arith.constant 0 : i32
    %c0_i32_1 = arith.constant 0 : i32
    return %c0_i32, %c0_i32_0 : i32, i32
  }
  func.func @transform_3(%arg0: i32, %arg1: memref<1xi32, #tpu.memory_space<smem>>) -> (i32, i32) {
    %c0_i32 = arith.constant 0 : i32
    %c0_i32_0 = arith.constant 0 : i32
    %c0_i32_1 = arith.constant 0 : i32
    return %c0_i32, %c0_i32_0 : i32, i32
  }
  func.func @transform_4(%arg0: i32, %arg1: memref<1xi32, #tpu.memory_space<smem>>) -> (i32, i32) {
    %c0_i32 = arith.constant 0 : i32
    %c0_i32_0 = arith.constant 0 : i32
    %c0_i32_1 = arith.constant 0 : i32
    return %c0_i32, %c0_i32_0 : i32, i32
  }
  func.func @transform_5(%arg0: i32, %arg1: memref<1xi32, #tpu.memory_space<smem>>) -> (i32, i32) {
    %c0_i32 = arith.constant 0 : i32
    %c0_i32_0 = arith.constant 0 : i32
    %c0_i32_1 = arith.constant 0 : i32
    return %c0_i32, %c0_i32_0 : i32, i32
  }
  func.func @transform_6(%arg0: i32, %arg1: memref<1xi32, #tpu.memory_space<smem>>) -> (i32, i32) {
    %c0_i32 = arith.constant 0 : i32
    %c0_i32_0 = arith.constant 0 : i32
    %c0_i32_1 = arith.constant 0 : i32
    return %c0_i32, %c0_i32_0 : i32, i32
  }
  func.func @transform_7(%arg0: i32, %arg1: memref<1xi32, #tpu.memory_space<smem>>) -> (i32, i32) {
    %c0_i32 = arith.constant 0 : i32
    %c0_i32_0 = arith.constant 0 : i32
    %c0_i32_1 = arith.constant 0 : i32
    return %c0_i32, %c0_i32_0 : i32, i32
  }
  func.func @transform_8(%arg0: i32, %arg1: memref<1xi32, #tpu.memory_space<smem>>) -> (i32, i32) {
    %c0_i32 = arith.constant 0 : i32
    %c0_i32_0 = arith.constant 0 : i32
    %c0_i32_1 = arith.constant 0 : i32
    return %c0_i32, %c0_i32_0 : i32, i32
  }
  func.func @transform_9(%arg0: i32, %arg1: memref<1xi32, #tpu.memory_space<smem>>) -> (i32, i32) {
    %c0_i32 = arith.constant 0 : i32
    %c0_i32_0 = arith.constant 0 : i32
    return %arg0, %c0_i32 : i32, i32
  }
  func.func @transform_10(%arg0: i32, %arg1: memref<1xi32, #tpu.memory_space<smem>>) -> (i32, i32) {
    %c0_i32 = arith.constant 0 : i32
    %c0_i32_0 = arith.constant 0 : i32
    return %arg0, %c0_i32 : i32, i32
  }
}

</mosaic_0001>

<llo_original>
// kernel: tpu_custom_call.1
$region0: #{tpu_custom_call.1}
  #allocation0 [shape = 'u32[]', space=smem, size = 0x4, offset = 0x4, fixed_abs, tag = 'smem constant byte address 0x4 - core index']
  #allocation1 [shape = 'u32[144,128]{1,0:T(1,128)}', space=vmem, size = 0x12000, scoped, tag = 'internal scratch']
  #allocation2 [shape = 's32[1]{0}', space=sflag, size = 0x4, scoped, tag = 'scoped memory for tpu_custom_call.1']
  #allocation3 [shape = 's32[1]{0:T(128)S(6)}', space=smem, size = 0x200, scoped, tag = 'prefetched SMEM operand 0']
  %s0 = inlined_call_operand.<no memory space> [shape: s32[1], index: 0, kind: input, shape index: {}]
  %s1 = inlined_call_operand.vmem [shape: f32[8,40], index: 1, kind: input, shape index: {}]
  %s2 = inlined_call_operand.vmem [shape: f32[8,8], index: 2, kind: input, shape index: {}]
  %s3 = inlined_call_operand.vmem [shape: f32[40,64], index: 3, kind: input, shape index: {}]
  %s4 = inlined_call_operand.vmem [shape: f32[1,64], index: 4, kind: input, shape index: {}]
  %s5 = inlined_call_operand.vmem [shape: f32[64,32], index: 5, kind: input, shape index: {}]
  %s6 = inlined_call_operand.vmem [shape: f32[1,32], index: 6, kind: input, shape index: {}]
  %s7 = inlined_call_operand.hbm [shape: f32[128,384], index: 7, kind: input, shape index: {}]
  %s8 = inlined_call_operand.hbm [shape: f32[32,512], index: 8, kind: input, shape index: {}]
  %s9 = inlined_call_operand.vmem [shape: f32[1,512], index: 9, kind: input, shape index: {}]
  %s10 = inlined_call_operand.hbm [shape: f32[8,8], index: 10, kind: output, shape index: {0}]
  %s11 = inlined_call_operand.vmem [shape: f32[8,1], index: 11, kind: output, shape index: {1}]
  %12 = xla_tuple %s10, %s11
  %s13 = sld [smem:[#allocation0]]
  $region62: #{tpu_custom_call.1} parent=0
    _
  %s15 = ssub.s32 1, %s13
  %s16 = scalar_select 0, %s15, %s13
  %17 = sst [smem:[#allocation3]] %s0
  $region1: #{tpu_custom_call.1} parent=0
    #allocation4 [shape = 'u8[196608]{0}', space=vmem, size = 0x30000, scoped, tag = 'input window, operand 7, single buffered']
    #allocation5 [shape = 's32[1]{0}', space=sflag, size = 0x4, scoped, tag = 'scoped memory for tpu_custom_call.1']
    #allocation6 [shape = 's32[1]{0}', space=sflag, size = 0x4, scoped, tag = 'scoped memory for tpu_custom_call.1']
    #allocation7 [shape = 'u8[65536]{0}', space=vmem, size = 0x10000, scoped, tag = 'input window, operand 8, single buffered']
    #allocation8 [shape = 's32[1]{0}', space=sflag, size = 0x4, scoped, tag = 'scoped memory for tpu_custom_call.1']
    #allocation9 [shape = 'u8[4096]{0}', space=vmem, size = 0x1000, scoped, tag = 'output window, operand 0, single buffered']
    %18 = vsyncpa [#allocation5], 0
    %19 = vsyncpa [#allocation8], 0
    %20 = vsyncpa [#allocation6], 0
    // Predicated region
    $region2: #{tpu_custom_call.1} parent=1 // pred_check
      _
    $region3: #{tpu_custom_call.1} parent=1 // pred_check_branch
      %22 = sbr.rel (0) target = $region5
    $region4: #{tpu_custom_call.1} parent=1 // pred_region
      _
    $region5: #{tpu_custom_call.1} parent=1 // pred_fallthru
      _
    // Predicated region
    $region6: #{tpu_custom_call.1} parent=1 // pred_check
      _
    $region7: #{tpu_custom_call.1} parent=1 // pred_check_branch
      %24 = sbr.rel (0) target = $region9
    $region8: #{tpu_custom_call.1} parent=1 // pred_region
      _
    $region9: #{tpu_custom_call.1} parent=1 // pred_fallthru
      _
    // Predicated region
    $region10: #{tpu_custom_call.1} parent=1 // pred_check
      _
    $region11: #{tpu_custom_call.1} parent=1 // pred_check_branch
      %26 = sbr.rel (0) target = $region13
    $region12: #{tpu_custom_call.1} parent=1 // pred_region
      _
    $region13: #{tpu_custom_call.1} parent=1 // pred_fallthru
      _
    // Predicated region
    $region14: #{tpu_custom_call.1} parent=1 // pred_check
      _
    $region15: #{tpu_custom_call.1} parent=1 // pred_check_branch
      %28 = sbr.rel (0) target = $region17
    $region16: #{tpu_custom_call.1} parent=1 // pred_region
      _
    $region17: #{tpu_custom_call.1} parent=1 // pred_fallthru
      _
    // Predicated region
    $region18: #{tpu_custom_call.1} parent=1 // pred_check
      _
    $region19: #{tpu_custom_call.1} parent=1 // pred_check_branch
      %30 = sbr.rel (0) target = $region21
    $region20: #{tpu_custom_call.1} parent=1 // pred_region
      _
    $region21: #{tpu_custom_call.1} parent=1 // pred_fallthru
      _
    // Predicated region
    $region22: #{tpu_custom_call.1} parent=1 // pred_check
      _
    $region23: #{tpu_custom_call.1} parent=1 // pred_check_branch
      %32 = sbr.rel (0) target = $region25
    $region24: #{tpu_custom_call.1} parent=1 // pred_region
      _
    $region25: #{tpu_custom_call.1} parent=1 // pred_fallthru
      _
    // Predicated region
    $region26: #{tpu_custom_call.1} parent=1 // pred_check
      _
    $region27: #{tpu_custom_call.1} parent=1 // pred_check_branch
      %34 = sbr.rel (0) target = $region29
    $region28: #{tpu_custom_call.1} parent=1 // pred_region
      %s36 = ssub.s32 6144, 6144
      %37 = vsyncadd [#allocation5], %s36
      %s38 = sshll.u32 [#allocation4], 4
      %s39 = int_to_ptr.vmem [resolvable:$true] %s38
      %44 = dma.hbm_to_vmem [thread:$0]  %s7, 6144, %s39, [#allocation5], 384, 384, 24
    $region29: #{tpu_custom_call.1} parent=1 // pred_fallthru
      _
    // Predicated region
    $region30: #{tpu_custom_call.1} parent=1 // pred_check
      _
    $region31: #{tpu_custom_call.1} parent=1 // pred_check_branch
      %46 = sbr.rel (0) target = $region33
    $region32: #{tpu_custom_call.1} parent=1 // pred_region
      %s48 = ssub.s32 2048, 2048
      %49 = vsyncadd [#allocation8], %s48
      %s50 = sshll.u32 [#allocation7], 4
      %s51 = int_to_ptr.vmem [resolvable:$true] %s50
      %56 = dma.hbm_to_vmem [thread:$0]  %s8, 2048, %s51, [#allocation8], 512, 512, 32
    $region33: #{tpu_custom_call.1} parent=1 // pred_fallthru
      _
    // Predicated region
    $region34: #{tpu_custom_call.1} parent=1 // pred_check
      _
    $region35: #{tpu_custom_call.1} parent=1 // pred_check_branch
      %58 = sbr.rel (0) target = $region37
    $region36: #{tpu_custom_call.1} parent=1 // pred_region
      _
    $region37: #{tpu_custom_call.1} parent=1 // pred_fallthru
      _
    // Predicated region
    $region38: #{tpu_custom_call.1} parent=1 // pred_check
      _
    $region39: #{tpu_custom_call.1} parent=1 // pred_check_branch
      %60 = sbr.rel (0) target = $region41
    $region40: #{tpu_custom_call.1} parent=1 // pred_region
      %61 = dma.done [#allocation5], 6144
    $region41: #{tpu_custom_call.1} parent=1 // pred_fallthru
      _
    // Predicated region
    $region42: #{tpu_custom_call.1} parent=1 // pred_check
      _
    $region43: #{tpu_custom_call.1} parent=1 // pred_check_branch
      %63 = sbr.rel (0) target = $region45
    $region44: #{tpu_custom_call.1} parent=1 // pred_region
      %64 = dma.done [#allocation8], 2048
    $region45: #{tpu_custom_call.1} parent=1 // pred_fallthru
      _
    %v65 = vld [vmem:[%s1] sm:$0xff]
    %v66 = vld [vmem:[%s3] sm:$0xff]
    %v67 = vld [vmem:[%s3 + $0x8] sm:$0xff]
    %v68 = vld [vmem:[%s3 + $0x10] sm:$0xff]
    %v69 = vld [vmem:[%s3 + $0x18] sm:$0xff]
    %v70 = vld [vmem:[%s3 + $0x20] sm:$0xff]
    %v71 = vld [vmem:[%s4] sm:$0x1]
    %v73 = vlaneseq
    %v74 = vshrl.u32 %v73, 7
    %v75 = vsub.s32 0, %v74
    %v76 = vrot.slane %v71, %v75
    %vm78 = vcmask 326656
    %v80 = vsel %vm78, %v65, 0
    %82 = vmatprep.subr.mxu0 0.0
    %83 = vmatpush1.msra.mxu0 0.0
    %84 = vmatprep.subr.mxu0 0.0
    %85 = vmatpush1.msra.mxu0 0.0
    %86 = vmatprep.subr.mxu0 0.0
    %87 = vmatpush1.msra.mxu0 0.0
    %88 = vmatprep.subr.mxu0 0.0
    %89 = vmatpush1.msra.mxu0 0.0
    %90 = vmatprep.subr.mxu0 0.0
    %91 = vmatpush1.msra.mxu0 0.0
    %92 = vmatprep.subr.mxu0 0.0
    %93 = vmatpush1.msra.mxu0 0.0
    %94 = vmatprep.subr.mxu0 0.0
    %95 = vmatpush1.msra.mxu0 0.0
    %96 = vmatprep.subr.mxu0 0.0
    %97 = vmatpush1.msra.mxu0 0.0
    %98 = vmatprep.subr.mxu0 0.0
    %99 = vmatpush1.msra.mxu0 0.0
    %100 = vmatprep.subr.mxu0 0.0
    %101 = vmatpush1.msra.mxu0 0.0
    %102 = vmatprep.subr.mxu0 0.0
    %103 = vmatpush1.msra.mxu0 0.0
    %104 = vmatprep.subr.mxu0 0.0
    %105 = vmatpush1.msra.mxu0 %v70
    %106 = vmatprep.subr.mxu0 0.0
    %107 = vmatpush1.msra.mxu0 %v69
    %108 = vmatprep.subr.mxu0 0.0
    %109 = vmatpush1.msra.mxu0 %v68
    %110 = vmatprep.subr.mxu0 0.0
    %111 = vmatpush1.msra.mxu0 %v67
    %112 = vmatprep.subr.mxu0 0.0
    %113 = vmatpush1.msra.mxu0 %v66
    %114 = vmatprep.subr.mxu0 0.0
    %115 = vmatpush2.msra.mxu0 0.0
    %116 = vmatprep.subr.mxu0 0.0
    %117 = vmatpush2.msra.mxu0 0.0
    %118 = vmatprep.subr.mxu0 0.0
    %119 = vmatpush2.msra.mxu0 0.0
    %120 = vmatprep.subr.mxu0 0.0
    %121 = vmatpush2.msra.mxu0 0.0
    %122 = vmatprep.subr.mxu0 0.0
    %123 = vmatpush2.msra.mxu0 0.0
    %124 = vmatprep.subr.mxu0 0.0
    %125 = vmatpush2.msra.mxu0 0.0
    %126 = vmatprep.subr.mxu0 0.0
    %127 = vmatpush2.msra.mxu0 0.0
    %128 = vmatprep.subr.mxu0 0.0
    %129 = vmatpush2.msra.mxu0 0.0
    %130 = vmatprep.subr.mxu0 0.0
    %131 = vmatpush2.msra.mxu0 0.0
    %132 = vmatprep.subr.mxu0 0.0
    %133 = vmatpush2.msra.mxu0 0.0
    %134 = vmatprep.subr.mxu0 0.0
    %135 = vmatpush2.msra.mxu0 0.0
    %136 = vmatprep.subr.mxu0 0.0
    %137 = vmatpush2.msra.mxu0 0.0
    %138 = vmatprep.subr.mxu0 0.0
    %139 = vmatpush2.msra.mxu0 0.0
    %140 = vmatprep.subr.mxu0 0.0
    %141 = vmatpush2.msra.mxu0 0.0
    %142 = vmatprep.subr.mxu0 0.0
    %143 = vmatpush2.msra.mxu0 0.0
    %144 = vmatprep.subr.mxu0 0.0
    %145 = vmatpush2.msra.mxu0 0.0
    %146 = vmatprep.mubr.f32.mxu0 0.0
    %147 = vmatmul.mubr.f32.gmra.mxu0 %v80
    %v148 = vpop.f32.mrf.mxu0
    %v149 = vadd.f32 %v76, %v148
    %v150 = vpop.f32.mrf.mxu0
    %151 = vdwg.mxu0
    %v152 = vmax.f32 %v149, 0.0
    %v153 = vld [vmem:[%s5] sm:$0xff]
    %v154 = vld [vmem:[%s5 + $0x8] sm:$0xff]
    %v155 = vld [vmem:[%s5 + $0x10] sm:$0xff]
    %v156 = vld [vmem:[%s5 + $0x18] sm:$0xff]
    %v157 = vld [vmem:[%s5 + $0x20] sm:$0xff]
    %v158 = vld [vmem:[%s5 + $0x28] sm:$0xff]
    %v159 = vld [vmem:[%s5 + $0x30] sm:$0xff]
    %v160 = vld [vmem:[%s5 + $0x38] sm:$0xff]
    %v161 = vld [vmem:[%s6] sm:$0x1]
    %v163 = vlaneseq
    %v164 = vshrl.u32 %v163, 7
    %v165 = vsub.s32 0, %v164
    %v166 = vrot.slane %v161, %v165
    %vm168 = vcmask 523264
    %v170 = vsel %vm168, %v152, 0
    %172 = vmatprep.subr.mxu0 0.0
    %173 = vmatpush1.msra.mxu0 0.0
    %174 = vmatprep.subr.mxu0 0.0
    %175 = vmatpush1.msra.mxu0 0.0
    %176 = vmatprep.subr.mxu0 0.0
    %177 = vmatpush1.msra.mxu0 0.0
    %178 = vmatprep.subr.mxu0 0.0
    %179 = vmatpush1.msra.mxu0 0.0
    %180 = vmatprep.subr.mxu0 0.0
    %181 = vmatpush1.msra.mxu0 0.0
    %182 = vmatprep.subr.mxu0 0.0
    %183 = vmatpush1.msra.mxu0 0.0
    %184 = vmatprep.subr.mxu0 0.0
    %185 = vmatpush1.msra.mxu0 0.0
    %186 = vmatprep.subr.mxu0 0.0
    %187 = vmatpush1.msra.mxu0 0.0
    %188 = vmatprep.subr.mxu0 0.0
    %189 = vmatpush1.msra.mxu0 %v160
    %190 = vmatprep.subr.mxu0 0.0
    %191 = vmatpush1.msra.mxu0 %v159
    %192 = vmatprep.subr.mxu0 0.0
    %193 = vmatpush1.msra.mxu0 %v158
    %194 = vmatprep.subr.mxu0 0.0
    %195 = vmatpush1.msra.mxu0 %v157
    %196 = vmatprep.subr.mxu0 0.0
    %197 = vmatpush1.msra.mxu0 %v156
    %198 = vmatprep.subr.mxu0 0.0
    %199 = vmatpush1.msra.mxu0 %v155
    %200 = vmatprep.subr.mxu0 0.0
    %201 = vmatpush1.msra.mxu0 %v154
    %202 = vmatprep.subr.mxu0 0.0
    %203 = vmatpush1.msra.mxu0 %v153
    %204 = vmatprep.subr.mxu0 0.0
    %205 = vmatpush2.msra.mxu0 0.0
    %206 = vmatprep.subr.mxu0 0.0
    %207 = vmatpush2.msra.mxu0 0.0
    %208 = vmatprep.subr.mxu0 0.0
    %209 = vmatpush2.msra.mxu0 0.0
    %210 = vmatprep.subr.mxu0 0.0
    %211 = vmatpush2.msra.mxu0 0.0
    %212 = vmatprep.subr.mxu0 0.0
    %213 = vmatpush2.msra.mxu0 0.0
    %214 = vmatprep.subr.mxu0 0.0
    %215 = vmatpush2.msra.mxu0 0.0
    %216 = vmatprep.subr.mxu0 0.0
    %217 = vmatpush2.msra.mxu0 0.0
    %218 = vmatprep.subr.mxu0 0.0
    %219 = vmatpush2.msra.mxu0 0.0
    %220 = vmatprep.subr.mxu0 0.0
    %221 = vmatpush2.msra.mxu0 0.0
    %222 = vmatprep.subr.mxu0 0.0
    %223 = vmatpush2.msra.mxu0 0.0
    %224 = vmatprep.subr.mxu0 0.0
    %225 = vmatpush2.msra.mxu0 0.0
    %226 = vmatprep.subr.mxu0 0.0
    %227 = vmatpush2.msra.mxu0 0.0
    %228 = vmatprep.subr.mxu0 0.0
    %229 = vmatpush2.msra.mxu0 0.0
    %230 = vmatprep.subr.mxu0 0.0
    %231 = vmatpush2.msra.mxu0 0.0
    %232 = vmatprep.subr.mxu0 0.0
    %233 = vmatpush2.msra.mxu0 0.0
    %234 = vmatprep.subr.mxu0 0.0
    %235 = vmatpush2.msra.mxu0 0.0
    %236 = vmatprep.mubr.f32.mxu0 0.0
    %237 = vmatmul.mubr.f32.gmra.mxu0 %v170
    %v238 = vpop.f32.mrf.mxu0
    %v239 = vadd.f32 %v166, %v238
    %v240 = vpop.f32.mrf.mxu0
    %241 = vdwg.mxu0
    %v242 = vmax.f32 %v239, 0.0
    %v243 = vlaneseq
    %v244 = vand.u32 %v243, 127
    %v245 = vld [vmem:[#allocation7] sm:$0xff]
    %v246 = vld [vmem:[#allocation7 + $0x8] sm:$0xff]
    %v247 = vld [vmem:[#allocation7 + $0x10] sm:$0xff]
    %v248 = vld [vmem:[#allocation7 + $0x18] sm:$0xff]
    %v249 = vld [vmem:[#allocation7 + $0x20] sm:$0xff]
    %v250 = vld [vmem:[#allocation7 + $0x28] sm:$0xff]
    %v251 = vld [vmem:[#allocation7 + $0x30] sm:$0xff]
    %v252 = vld [vmem:[#allocation7 + $0x38] sm:$0xff]
    %v253 = vld [vmem:[#allocation7 + $0x40] sm:$0xff]
    %v254 = vld [vmem:[#allocation7 + $0x48] sm:$0xff]
    %v255 = vld [vmem:[#allocation7 + $0x50] sm:$0xff]
    %v256 = vld [vmem:[#allocation7 + $0x58] sm:$0xff]
    %v257 = vld [vmem:[#allocation7 + $0x60] sm:$0xff]
    %v258 = vld [vmem:[#allocation7 + $0x68] sm:$0xff]
    %v259 = vld [vmem:[#allocation7 + $0x70] sm:$0xff]
    %v260 = vld [vmem:[#allocation7 + $0x78] sm:$0xff]
    %v261 = vld [vmem:[%s9] sm:$0xf]
    %v263 = vlaneseq
    %v264 = vshrl.u32 %v263, 7
    %v265 = vsub.s32 0, %v264
    %v266 = vrot.slane %v261, %v265
    %v267 = vlaneseq
    %v268 = vshrl.u32 %v267, 7
    %v269 = vsub.s32 1, %v268
    %v270 = vrot.slane %v261, %v269
    %v271 = vlaneseq
    %v272 = vshrl.u32 %v271, 7
    %v273 = vsub.s32 2, %v272
    %v274 = vrot.slane %v261, %v273
    %v275 = vlaneseq
    %v276 = vshrl.u32 %v275, 7
    %v277 = vsub.s32 3, %v276
    %v278 = vrot.slane %v261, %v277
    %vm283 = vcmask 261120
    %v285 = vsel %vm283, %v242, 0
    %287 = vmatprep.subr.mxu0 0.0
    %288 = vmatpush1.msra.mxu0 0.0
    %289 = vmatprep.subr.mxu0 0.0
    %290 = vmatpush1.msra.mxu0 0.0
    %291 = vmatprep.subr.mxu0 0.0
    %292 = vmatpush1.msra.mxu0 0.0
    %293 = vmatprep.subr.mxu0 0.0
    %294 = vmatpush1.msra.mxu0 0.0
    %295 = vmatprep.subr.mxu0 0.0
    %296 = vmatpush1.msra.mxu0 0.0
    %297 = vmatprep.subr.mxu0 0.0
    %298 = vmatpush1.msra.mxu0 0.0
    %299 = vmatprep.subr.mxu0 0.0
    %300 = vmatpush1.msra.mxu0 0.0
    %301 = vmatprep.subr.mxu0 0.0
    %302 = vmatpush1.msra.mxu0 0.0
    %303 = vmatprep.subr.mxu0 0.0
    %304 = vmatpush1.msra.mxu0 0.0
    %305 = vmatprep.subr.mxu0 0.0
    %306 = vmatpush1.msra.mxu0 0.0
    %307 = vmatprep.subr.mxu0 0.0
    %308 = vmatpush1.msra.mxu0 0.0
    %309 = vmatprep.subr.mxu0 0.0
    %310 = vmatpush1.msra.mxu0 0.0
    %311 = vmatprep.subr.mxu0 %v258
    %312 = vmatpush1.msra.mxu0 %v257
    %313 = vmatprep.subr.mxu0 %v254
    %314 = vmatpush1.msra.mxu0 %v253
    %315 = vmatprep.subr.mxu0 %v250
    %316 = vmatpush1.msra.mxu0 %v249
    %317 = vmatprep.subr.mxu0 %v246
    %318 = vmatpush1.msra.mxu0 %v245
    %319 = vmatprep.subr.mxu0 0.0
    %320 = vmatpush2.msra.mxu0 0.0
    %321 = vmatprep.subr.mxu0 0.0
    %322 = vmatpush2.msra.mxu0 0.0
    %323 = vmatprep.subr.mxu0 0.0
    %324 = vmatpush2.msra.mxu0 0.0
    %325 = vmatprep.subr.mxu0 0.0
    %326 = vmatpush2.msra.mxu0 0.0
    %327 = vmatprep.subr.mxu0 0.0
    %328 = vmatpush2.msra.mxu0 0.0
    %329 = vmatprep.subr.mxu0 0.0
    %330 = vmatpush2.msra.mxu0 0.0
    %331 = vmatprep.subr.mxu0 0.0
    %332 = vmatpush2.msra.mxu0 0.0
    %333 = vmatprep.subr.mxu0 0.0
    %334 = vmatpush2.msra.mxu0 0.0
    %335 = vmatprep.subr.mxu0 0.0
    %336 = vmatpush2.msra.mxu0 0.0
    %337 = vmatprep.subr.mxu0 0.0
    %338 = vmatpush2.msra.mxu0 0.0
    %339 = vmatprep.subr.mxu0 0.0
    %340 = vmatpush2.msra.mxu0 0.0
    %341 = vmatprep.subr.mxu0 0.0
    %342 = vmatpush2.msra.mxu0 0.0
    %343 = vmatprep.subr.mxu0 0.0
    %344 = vmatpush2.msra.mxu0 0.0
    %345 = vmatprep.subr.mxu0 0.0
    %346 = vmatpush2.msra.mxu0 0.0
    %347 = vmatprep.subr.mxu0 0.0
    %348 = vmatpush2.msra.mxu0 0.0
    %349 = vmatprep.subr.mxu0 0.0
    %350 = vmatpush2.msra.mxu0 0.0
    %351 = vmatprep.mubr.f32.mxu0 0.0
    %352 = vmatmul.mubr.f32.gmra.mxu0 %v285
    %v353 = vpop.f32.mrf.mxu0
    %v354 = vadd.f32 %v266, %v353
    %v355 = vpop.f32.mrf.mxu0
    %v356 = vadd.f32 %v270, %v355
    %357 = vdwg.mxu0
    %358 = vmatprep.subr.mxu0 0.0
    %359 = vmatpush1.msra.mxu0 0.0
    %360 = vmatprep.subr.mxu0 0.0
    %361 = vmatpush1.msra.mxu0 0.0
    %362 = vmatprep.subr.mxu0 0.0
    %363 = vmatpush1.msra.mxu0 0.0
    %364 = vmatprep.subr.mxu0 0.0
    %365 = vmatpush1.msra.mxu0 0.0
    %366 = vmatprep.subr.mxu0 0.0
    %367 = vmatpush1.msra.mxu0 0.0
    %368 = vmatprep.subr.mxu0 0.0
    %369 = vmatpush1.msra.mxu0 0.0
    %370 = vmatprep.subr.mxu0 0.0
    %371 = vmatpush1.msra.mxu0 0.0
    %372 = vmatprep.subr.mxu0 0.0
    %373 = vmatpush1.msra.mxu0 0.0
    %374 = vmatprep.subr.mxu0 0.0
    %375 = vmatpush1.msra.mxu0 0.0
    %376 = vmatprep.subr.mxu0 0.0
    %377 = vmatpush1.msra.mxu0 0.0
    %378 = vmatprep.subr.mxu0 0.0
    %379 = vmatpush1.msra.mxu0 0.0
    %380 = vmatprep.subr.mxu0 0.0
    %381 = vmatpush1.msra.mxu0 0.0
    %382 = vmatprep.subr.mxu0 %v260
    %383 = vmatpush1.msra.mxu0 %v259
    %384 = vmatprep.subr.mxu0 %v256
    %385 = vmatpush1.msra.mxu0 %v255
    %386 = vmatprep.subr.mxu0 %v252
    %387 = vmatpush1.msra.mxu0 %v251
    %388 = vmatprep.subr.mxu0 %v248
    %389 = vmatpush1.msra.mxu0 %v247
    %390 = vmatprep.subr.mxu0 0.0
    %391 = vmatpush2.msra.mxu0 0.0
    %392 = vmatprep.subr.mxu0 0.0
    %393 = vmatpush2.msra.mxu0 0.0
    %394 = vmatprep.subr.mxu0 0.0
    %395 = vmatpush2.msra.mxu0 0.0
    %396 = vmatprep.subr.mxu0 0.0
    %397 = vmatpush2.msra.mxu0 0.0
    %398 = vmatprep.subr.mxu0 0.0
    %399 = vmatpush2.msra.mxu0 0.0
    %400 = vmatprep.subr.mxu0 0.0
    %401 = vmatpush2.msra.mxu0 0.0
    %402 = vmatprep.subr.mxu0 0.0
    %403 = vmatpush2.msra.mxu0 0.0
    %404 = vmatprep.subr.mxu0 0.0
    %405 = vmatpush2.msra.mxu0 0.0
    %406 = vmatprep.subr.mxu0 0.0
    %407 = vmatpush2.msra.mxu0 0.0
    %408 = vmatprep.subr.mxu0 0.0
    %409 = vmatpush2.msra.mxu0 0.0
    %410 = vmatprep.subr.mxu0 0.0
    %411 = vmatpush2.msra.mxu0 0.0
    %412 = vmatprep.subr.mxu0 0.0
    %413 = vmatpush2.msra.mxu0 0.0
    %414 = vmatprep.subr.mxu0 0.0
    %415 = vmatpush2.msra.mxu0 0.0
    %416 = vmatprep.subr.mxu0 0.0
    %417 = vmatpush2.msra.mxu0 0.0
    %418 = vmatprep.subr.mxu0 0.0
    %419 = vmatpush2.msra.mxu0 0.0
    %420 = vmatprep.subr.mxu0 0.0
    %421 = vmatpush2.msra.mxu0 0.0
    %422 = vmatprep.mubr.f32.mxu0 0.0
    %423 = vmatmul.mubr.f32.gmra.mxu0 %v285
    %v424 = vpop.f32.mrf.mxu0
    %v425 = vadd.f32 %v274, %v424
    %v426 = vpop.f32.mrf.mxu0
    %v427 = vadd.f32 %v278, %v426
    %428 = vdwg.mxu0
    %429 = vmax.xlane.f32.xlu0 %v354
    %v430 = vpop.xlane.xlu0 %429
    %v431 = vsub.f32 %v354, %v430
    %v432 = vmul.f32 %v431, 1.442695
    %v433 = vpow.pop %v432
    %434 = vadd.xlane.f32.xlu0 %v433
    %v435 = vpop.xlane.xlu0 %434
    %v436 = vlog2.pop %v435
    %v437 = vmul.f32 %v436, 0.6931472
    %v438 = vadd.f32 %v437, %v430
    %vm439 = vcmp.eq.f32.partialorder %v354, %v430
    %v440 = vsel %vm439, %v244, 128
    %v441 = vand.u32 %v440, 65535
    %v442 = vshra.s32 %v440, 16
    %v443 = vcvt.s32.f32 %v441
    %v444 = vcvt.s32.f32 %v442
    %445 = vmin.xlane.f32.xlu0 %v444
    %v446 = vpop.xlane.xlu0 %445
    %vm447 = vcmp.eq.f32.partialorder %v444, %v446
    %v448 = vsel %vm447, %v443, inf
    %449 = vmin.xlane.f32.xlu0 %v448
    %v450 = vpop.xlane.xlu0 %449
    %v451 = vcvt.f32.s32 %v450
    %v452 = vcvt.f32.s32 %v446
    %v453 = vshll.u32 %v452, 16
    %v454 = vadd.s32 %v453, %v451
    %vm455 = vcmp.eq.s32.totalorder %v244, %v454
    %v456 = vsub.f32 %v430, %v438
    %v457 = vadd.f32 %v456, 0.0
    %v458 = vcvt.s32.f32 %v454
    %v459 = vmul.f32 %v458, 0.05
    %v460 = vadd.f32 %v459, -1.0
    %vm461 = vcmp.eq.s32.totalorder %v244, 7
    %v462 = vsel %vm461, %v460, 0.0
    %v463 = vsel %vm455, 1, 0
    %v464 = vcvt.s32.f32 %v463
    %v465 = vld [vmem:[#allocation4] sm:$0xff]
    %v466 = vld [vmem:[#allocation4 + $0x8] sm:$0xff]
    %v467 = vld [vmem:[#allocation4 + $0x10] sm:$0xff]
    %v468 = vld [vmem:[#allocation4 + $0x18] sm:$0xff]
    %v469 = vld [vmem:[#allocation4 + $0x20] sm:$0xff]
    %v470 = vld [vmem:[#allocation4 + $0x28] sm:$0xff]
    %v471 = vld [vmem:[#allocation4 + $0x30] sm:$0xff]
    %v472 = vld [vmem:[#allocation4 + $0x38] sm:$0xff]
    %v473 = vld [vmem:[#allocation4 + $0x40] sm:$0xff]
    %v474 = vld [vmem:[#allocation4 + $0x48] sm:$0xff]
    %v475 = vld [vmem:[#allocation4 + $0x50] sm:$0xff]
    %v476 = vld [vmem:[#allocation4 + $0x58] sm:$0xff]
    %v477 = vld [vmem:[#allocation4 + $0x60] sm:$0xff]
    %v478 = vld [vmem:[#allocation4 + $0x68] sm:$0xff]
    %v479 = vld [vmem:[#allocation4 + $0x70] sm:$0xff]
    %v480 = vld [vmem:[#allocation4 + $0x78] sm:$0xff]
    %v481 = vld [vmem:[#allocation4 + $0x80] sm:$0xff]
    %v482 = vld [vmem:[#allocation4 + $0x88] sm:$0xff]
    %v483 = vld [vmem:[#allocation4 + $0x90] sm:$0xff]
    %v484 = vld [vmem:[#allocation4 + $0x98] sm:$0xff]
    %v485 = vld [vmem:[#allocation4 + $0xa0] sm:$0xff]
    %v486 = vld [vmem:[#allocation4 + $0xa8] sm:$0xff]
    %v487 = vld [vmem:[#allocation4 + $0xb0] sm:$0xff]
    %v488 = vld [vmem:[#allocation4 + $0xb8] sm:$0xff]
    %v489 = vld [vmem:[#allocation4 + $0xc0] sm:$0xff]
    %v490 = vld [vmem:[#allocation4 + $0xc8] sm:$0xff]
    %v491 = vld [vmem:[#allocation4 + $0xd0] sm:$0xff]
    %v492 = vld [vmem:[#allocation4 + $0xd8] sm:$0xff]
    %v493 = vld [vmem:[#allocation4 + $0xe0] sm:$0xff]
    %v494 = vld [vmem:[#allocation4 + $0xe8] sm:$0xff]
    %v495 = vld [vmem:[#allocation4 + $0xf0] sm:$0xff]
    %v496 = vld [vmem:[#allocation4 + $0xf8] sm:$0xff]
    %v497 = vld [vmem:[#allocation4 + $0x100] sm:$0xff]
    %v498 = vld [vmem:[#allocation4 + $0x108] sm:$0xff]
    %v499 = vld [vmem:[#allocation4 + $0x110] sm:$0xff]
    %v500 = vld [vmem:[#allocation4 + $0x118] sm:$0xff]
    %v501 = vld [vmem:[#allocation4 + $0x120] sm:$0xff]
    %v502 = vld [vmem:[#allocation4 + $0x128] sm:$0xff]
    %v503 = vld [vmem:[#allocation4 + $0x130] sm:$0xff]
    %v504 = vld [vmem:[#allocation4 + $0x138] sm:$0xff]
    %v505 = vld [vmem:[#allocation4 + $0x140] sm:$0xff]
    %v506 = vld [vmem:[#allocation4 + $0x148] sm:$0xff]
    %v507 = vld [vmem:[#allocation4 + $0x150] sm:$0xff]
    %v508 = vld [vmem:[#allocation4 + $0x158] sm:$0xff]
    %v509 = vld [vmem:[#allocation4 + $0x160] sm:$0xff]
    %v510 = vld [vmem:[#allocation4 + $0x168] sm:$0xff]
    %v511 = vld [vmem:[#allocation4 + $0x170] sm:$0xff]
    %v512 = vld [vmem:[#allocation4 + $0x178] sm:$0xff]
    %513 = vmatprep.subr.mxu0 %v511
    %514 = vmatpush1.msra.mxu0 %v510
    %515 = vmatprep.subr.mxu0 %v508
    %516 = vmatpush1.msra.mxu0 %v507
    %517 = vmatprep.subr.mxu0 %v505
    %518 = vmatpush1.msra.mxu0 %v504
    %519 = vmatprep.subr.mxu0 %v502
    %520 = vmatpush1.msra.mxu0 %v501
    %521 = vmatprep.subr.mxu0 %v499
    %522 = vmatpush1.msra.mxu0 %v498
    %523 = vmatprep.subr.mxu0 %v496
    %524 = vmatpush1.msra.mxu0 %v495
    %525 = vmatprep.subr.mxu0 %v493
    %526 = vmatpush1.msra.mxu0 %v492
    %527 = vmatprep.subr.mxu0 %v490
    %528 = vmatpush1.msra.mxu0 %v489
    %529 = vmatprep.subr.mxu0 %v487
    %530 = vmatpush1.msra.mxu0 %v486
    %531 = vmatprep.subr.mxu0 %v484
    %532 = vmatpush1.msra.mxu0 %v483
    %533 = vmatprep.subr.mxu0 %v481
    %534 = vmatpush1.msra.mxu0 %v480
    %535 = vmatprep.subr.mxu0 %v478
    %536 = vmatpush1.msra.mxu0 %v477
    %537 = vmatprep.subr.mxu0 %v475
    %538 = vmatpush1.msra.mxu0 %v474
    %539 = vmatprep.subr.mxu0 %v472
    %540 = vmatpush1.msra.mxu0 %v471
    %541 = vmatprep.subr.mxu0 %v469
    %542 = vmatpush1.msra.mxu0 %v468
    %543 = vmatprep.subr.mxu0 %v466
    %544 = vmatpush1.msra.mxu0 %v465
    %545 = vmatprep.subr.mxu0 0.0
    %546 = vmatpush2.msra.mxu0 0.0
    %547 = vmatprep.subr.mxu0 0.0
    %548 = vmatpush2.msra.mxu0 0.0
    %549 = vmatprep.subr.mxu0 0.0
    %550 = vmatpush2.msra.mxu0 0.0
    %551 = vmatprep.subr.mxu0 0.0
    %552 = vmatpush2.msra.mxu0 0.0
    %553 = vmatprep.subr.mxu0 0.0
    %554 = vmatpush2.msra.mxu0 0.0
    %555 = vmatprep.subr.mxu0 0.0
    %556 = vmatpush2.msra.mxu0 0.0
    %557 = vmatprep.subr.mxu0 0.0
    %558 = vmatpush2.msra.mxu0 0.0
    %559 = vmatprep.subr.mxu0 0.0
    %560 = vmatpush2.msra.mxu0 0.0
    %561 = vmatprep.subr.mxu0 0.0
    %562 = vmatpush2.msra.mxu0 0.0
    %563 = vmatprep.subr.mxu0 0.0
    %564 = vmatpush2.msra.mxu0 0.0
    %565 = vmatprep.subr.mxu0 0.0
    %566 = vmatpush2.msra.mxu0 0.0
    %567 = vmatprep.subr.mxu0 0.0
    %568 = vmatpush2.msra.mxu0 0.0
    %569 = vmatprep.subr.mxu0 0.0
    %570 = vmatpush2.msra.mxu0 0.0
    %571 = vmatprep.subr.mxu0 0.0
    %572 = vmatpush2.msra.mxu0 0.0
    %573 = vmatprep.subr.mxu0 0.0
    %574 = vmatpush2.msra.mxu0 0.0
    %575 = vmatprep.subr.mxu0 0.0
    %576 = vmatpush2.msra.mxu0 0.0
    %577 = vmatprep.mubr.f32.mxu0 0.0
    %578 = vmatmul.mubr.f32.gmra.mxu0 %v464
    %v579 = vpop.f32.mrf.mxu0
    %v580 = vadd.f32 0.0, %v579
    %v581 = vpop.f32.mrf.mxu0
    %v582 = vadd.f32 0.0, %v581
    %583 = vdwg.mxu0
    %584 = vmatprep.subr.mxu0 0.0
    %585 = vmatpush1.msra.mxu0 %v512
    %586 = vmatprep.subr.mxu0 0.0
    %587 = vmatpush1.msra.mxu0 %v509
    %588 = vmatprep.subr.mxu0 0.0
    %589 = vmatpush1.msra.mxu0 %v506
    %590 = vmatprep.subr.mxu0 0.0
    %591 = vmatpush1.msra.mxu0 %v503
    %592 = vmatprep.subr.mxu0 0.0
    %593 = vmatpush1.msra.mxu0 %v500
    %594 = vmatprep.subr.mxu0 0.0
    %595 = vmatpush1.msra.mxu0 %v497
    %596 = vmatprep.subr.mxu0 0.0
    %597 = vmatpush1.msra.mxu0 %v494
    %598 = vmatprep.subr.mxu0 0.0
    %599 = vmatpush1.msra.mxu0 %v491
    %600 = vmatprep.subr.mxu0 0.0
    %601 = vmatpush1.msra.mxu0 %v488
    %602 = vmatprep.subr.mxu0 0.0
    %603 = vmatpush1.msra.mxu0 %v485
    %604 = vmatprep.subr.mxu0 0.0
    %605 = vmatpush1.msra.mxu0 %v482
    %606 = vmatprep.subr.mxu0 0.0
    %607 = vmatpush1.msra.mxu0 %v479
    %608 = vmatprep.subr.mxu0 0.0
    %609 = vmatpush1.msra.mxu0 %v476
    %610 = vmatprep.subr.mxu0 0.0
    %611 = vmatpush1.msra.mxu0 %v473
    %612 = vmatprep.subr.mxu0 0.0
    %613 = vmatpush1.msra.mxu0 %v470
    %614 = vmatprep.subr.mxu0 0.0
    %615 = vmatpush1.msra.mxu0 %v467
    %616 = vmatprep.subr.mxu0 0.0
    %617 = vmatpush2.msra.mxu0 0.0
    %618 = vmatprep.subr.mxu0 0.0
    %619 = vmatpush2.msra.mxu0 0.0
    %620 = vmatprep.subr.mxu0 0.0
    %621 = vmatpush2.msra.mxu0 0.0
    %622 = vmatprep.subr.mxu0 0.0
    %623 = vmatpush2.msra.mxu0 0.0
    %624 = vmatprep.subr.mxu0 0.0
    %625 = vmatpush2.msra.mxu0 0.0
    %626 = vmatprep.subr.mxu0 0.0
    %627 = vmatpush2.msra.mxu0 0.0
    %628 = vmatprep.subr.mxu0 0.0
    %629 = vmatpush2.msra.mxu0 0.0
    %630 = vmatprep.subr.mxu0 0.0
    %631 = vmatpush2.msra.mxu0 0.0
    %632 = vmatprep.subr.mxu0 0.0
    %633 = vmatpush2.msra.mxu0 0.0
    %634 = vmatprep.subr.mxu0 0.0
    %635 = vmatpush2.msra.mxu0 0.0
    %636 = vmatprep.subr.mxu0 0.0
    %637 = vmatpush2.msra.mxu0 0.0
    %638 = vmatprep.subr.mxu0 0.0
    %639 = vmatpush2.msra.mxu0 0.0
    %640 = vmatprep.subr.mxu0 0.0
    %641 = vmatpush2.msra.mxu0 0.0
    %642 = vmatprep.subr.mxu0 0.0
    %643 = vmatpush2.msra.mxu0 0.0
    %644 = vmatprep.subr.mxu0 0.0
    %645 = vmatpush2.msra.mxu0 0.0
    %646 = vmatprep.subr.mxu0 0.0
    %647 = vmatpush2.msra.mxu0 0.0
    %648 = vmatprep.mubr.f32.mxu0 0.0
    %649 = vmatmul.mubr.f32.gmra.mxu0 %v464
    %v650 = vpop.f32.mrf.mxu0
    %v651 = vadd.f32 0.0, %v650
    %v652 = vpop.f32.mrf.mxu0
    %653 = vdwg.mxu0
    %v654 = vadd.f32 %v580, %v356
    %v655 = vxor.u32 %v654, 2147483648
    %v656 = vmul.f32 %v655, 1.442695
    %v657 = vpow.pop %v656
    %v658 = vadd.f32 %v657, 1.0
    %v659 = vrcp.pop %v658
    %v660 = vmul.f32 1.0, %v659
    %v661 = vadd.f32 %v582, %v425
    %v662 = vxor.u32 %v661, 2147483648
    %v663 = vmul.f32 %v662, 1.442695
    %v664 = vpow.pop %v663
    %v665 = vadd.f32 %v664, 1.0
    %v666 = vrcp.pop %v665
    %v667 = vmul.f32 1.0, %v666
    %v668 = vmul.f32 %v660, %v427
    %v669 = vadd.f32 %v651, %v668
    %v670 = vtanh.pop %v669
    %v671 = vsub.f32 1.0, %v667
    %v672 = vmul.f32 %v671, %v670
    %v673 = vmul.f32 %v667, %v242
    %v674 = vadd.f32 %v672, %v673
    %v676 = vsel %vm283, %v674, 0
    %678 = vmatprep.subr.mxu0 0.0
    %679 = vmatpush1.msra.mxu0 0.0
    %680 = vmatprep.subr.mxu0 0.0
    %681 = vmatpush1.msra.mxu0 0.0
    %682 = vmatprep.subr.mxu0 0.0
    %683 = vmatpush1.msra.mxu0 0.0
    %684 = vmatprep.subr.mxu0 0.0
    %685 = vmatpush1.msra.mxu0 0.0
    %686 = vmatprep.subr.mxu0 0.0
    %687 = vmatpush1.msra.mxu0 0.0
    %688 = vmatprep.subr.mxu0 0.0
    %689 = vmatpush1.msra.mxu0 0.0
    %690 = vmatprep.subr.mxu0 0.0
    %691 = vmatpush1.msra.mxu0 0.0
    %692 = vmatprep.subr.mxu0 0.0
    %693 = vmatpush1.msra.mxu0 0.0
    %694 = vmatprep.subr.mxu0 0.0
    %695 = vmatpush1.msra.mxu0 0.0
    %696 = vmatprep.subr.mxu0 0.0
    %697 = vmatpush1.msra.mxu0 0.0
    %698 = vmatprep.subr.mxu0 0.0
    %699 = vmatpush1.msra.mxu0 0.0
    %700 = vmatprep.subr.mxu0 0.0
    %701 = vmatpush1.msra.mxu0 0.0
    %702 = vmatprep.subr.mxu0 %v258
    %703 = vmatpush1.msra.mxu0 %v257
    %704 = vmatprep.subr.mxu0 %v254
    %705 = vmatpush1.msra.mxu0 %v253
    %706 = vmatprep.subr.mxu0 %v250
    %707 = vmatpush1.msra.mxu0 %v249
    %708 = vmatprep.subr.mxu0 %v246
    %709 = vmatpush1.msra.mxu0 %v245
    %710 = vmatprep.subr.mxu0 0.0
    %711 = vmatpush2.msra.mxu0 0.0
    %712 = vmatprep.subr.mxu0 0.0
    %713 = vmatpush2.msra.mxu0 0.0
    %714 = vmatprep.subr.mxu0 0.0
    %715 = vmatpush2.msra.mxu0 0.0
    %716 = vmatprep.subr.mxu0 0.0
    %717 = vmatpush2.msra.mxu0 0.0
    %718 = vmatprep.subr.mxu0 0.0
    %719 = vmatpush2.msra.mxu0 0.0
    %720 = vmatprep.subr.mxu0 0.0
    %721 = vmatpush2.msra.mxu0 0.0
    %722 = vmatprep.subr.mxu0 0.0
    %723 = vmatpush2.msra.mxu0 0.0
    %724 = vmatprep.subr.mxu0 0.0
    %725 = vmatpush2.msra.mxu0 0.0
    %726 = vmatprep.subr.mxu0 0.0
    %727 = vmatpush2.msra.mxu0 0.0
    %728 = vmatprep.subr.mxu0 0.0
    %729 = vmatpush2.msra.mxu0 0.0
    %730 = vmatprep.subr.mxu0 0.0
    %731 = vmatpush2.msra.mxu0 0.0
    %732 = vmatprep.subr.mxu0 0.0
    %733 = vmatpush2.msra.mxu0 0.0
    %734 = vmatprep.subr.mxu0 0.0
    %735 = vmatpush2.msra.mxu0 0.0
    %736 = vmatprep.subr.mxu0 0.0
    %737 = vmatpush2.msra.mxu0 0.0
    %738 = vmatprep.subr.mxu0 0.0
    %739 = vmatpush2.msra.mxu0 0.0
    %740 = vmatprep.subr.mxu0 0.0
    %741 = vmatpush2.msra.mxu0 0.0
    %742 = vmatprep.mubr.f32.mxu0 0.0
    %743 = vmatmul.mubr.f32.gmra.mxu0 %v676
    %v744 = vpop.f32.mrf.mxu0
    %v745 = vadd.f32 %v266, %v744
    %v746 = vpop.f32.mrf.mxu0
    %v747 = vadd.f32 %v270, %v746
    %748 = vdwg.mxu0
    %749 = vmatprep.subr.mxu0 0.0
    %750 = vmatpush1.msra.mxu0 0.0
    %751 = vmatprep.subr.mxu0 0.0
    %752 = vmatpush1.msra.mxu0 0.0
    %753 = vmatprep.subr.mxu0 0.0
    %754 = vmatpush1.msra.mxu0 0.0
    %755 = vmatprep.subr.mxu0 0.0
    %756 = vmatpush1.msra.mxu0 0.0
    %757 = vmatprep.subr.mxu0 0.0
    %758 = vmatpush1.msra.mxu0 0.0
    %759 = vmatprep.subr.mxu0 0.0
    %760 = vmatpush1.msra.mxu0 0.0
    %761 = vmatprep.subr.mxu0 0.0
    %762 = vmatpush1.msra.mxu0 0.0
    %763 = vmatprep.subr.mxu0 0.0
    %764 = vmatpush1.msra.mxu0 0.0
    %765 = vmatprep.subr.mxu0 0.0
    %766 = vmatpush1.msra.mxu0 0.0
    %767 = vmatprep.subr.mxu0 0.0
    %768 = vmatpush1.msra.mxu0 0.0
    %769 = vmatprep.subr.mxu0 0.0
    %770 = vmatpush1.msra.mxu0 0.0
    %771 = vmatprep.subr.mxu0 0.0
    %772 = vmatpush1.msra.mxu0 0.0
    %773 = vmatprep.subr.mxu0 %v260
    %774 = vmatpush1.msra.mxu0 %v259
    %775 = vmatprep.subr.mxu0 %v256
    %776 = vmatpush1.msra.mxu0 %v255
    %777 = vmatprep.subr.mxu0 %v252
    %778 = vmatpush1.msra.mxu0 %v251
    %779 = vmatprep.subr.mxu0 %v248
    %780 = vmatpush1.msra.mxu0 %v247
    %781 = vmatprep.subr.mxu0 0.0
    %782 = vmatpush2.msra.mxu0 0.0
    %783 = vmatprep.subr.mxu0 0.0
    %784 = vmatpush2.msra.mxu0 0.0
    %785 = vmatprep.subr.mxu0 0.0
    %786 = vmatpush2.msra.mxu0 0.0
    %787 = vmatprep.subr.mxu0 0.0
    %788 = vmatpush2.msra.mxu0 0.0
    %789 = vmatprep.subr.mxu0 0.0
    %790 = vmatpush2.msra.mxu0 0.0
    %791 = vmatprep.subr.mxu0 0.0
    %792 = vmatpush2.msra.mxu0 0.0
    %793 = vmatprep.subr.mxu0 0.0
    %794 = vmatpush2.msra.mxu0 0.0
    %795 = vmatprep.subr.mxu0 0.0
    %796 = vmatpush2.msra.mxu0 0.0
    %797 = vmatprep.subr.mxu0 0.0
    %798 = vmatpush2.msra.mxu0 0.0
    %799 = vmatprep.subr.mxu0 0.0
    %800 = vmatpush2.msra.mxu0 0.0
    %801 = vmatprep.subr.mxu0 0.0
    %802 = vmatpush2.msra.mxu0 0.0
    %803 = vmatprep.subr.mxu0 0.0
    %804 = vmatpush2.msra.mxu0 0.0
    %805 = vmatprep.subr.mxu0 0.0
    %806 = vmatpush2.msra.mxu0 0.0
    %807 = vmatprep.subr.mxu0 0.0
    %808 = vmatpush2.msra.mxu0 0.0
    %809 = vmatprep.subr.mxu0 0.0
    %810 = vmatpush2.msra.mxu0 0.0
    %811 = vmatprep.subr.mxu0 0.0
    %812 = vmatpush2.msra.mxu0 0.0
    %813 = vmatprep.mubr.f32.mxu0 0.0
    %814 = vmatmul.mubr.f32.gmra.mxu0 %v676
    %v815 = vpop.f32.mrf.mxu0
    %v816 = vadd.f32 %v274, %v815
    %v817 = vpop.f32.mrf.mxu0
    %v818 = vadd.f32 %v278, %v817
    %819 = vdwg.mxu0
    %820 = vmax.xlane.f32.xlu0 %v745
    %v821 = vpop.xlane.xlu0 %820
    %v822 = vsub.f32 %v745, %v821
    %v823 = vmul.f32 %v822, 1.442695
    %v824 = vpow.pop %v823
    %825 = vadd.xlane.f32.xlu0 %v824
    %v826 = vpop.xlane.xlu0 %825
    %v827 = vlog2.pop %v826
    %v828 = vmul.f32 %v827, 0.6931472
    %v829 = vadd.f32 %v828, %v821
    %vm830 = vcmp.eq.f32.partialorder %v745, %v821
    %v831 = vsel %vm830, %v244, 128
    %v832 = vand.u32 %v831, 65535
    %v833 = vshra.s32 %v831, 16
    %v834 = vcvt.s32.f32 %v832
    %v835 = vcvt.s32.f32 %v833
    %836 = vmin.xlane.f32.xlu0 %v835
    %v837 = vpop.xlane.xlu0 %836
    %vm838 = vcmp.eq.f32.partialorder %v835, %v837
    %v839 = vsel %vm838, %v834, inf
    %840 = vmin.xlane.f32.xlu0 %v839
    %v841 = vpop.xlane.xlu0 %840
    %v842 = vcvt.f32.s32 %v841
    %v843 = vcvt.f32.s32 %v837
    %v844 = vshll.u32 %v843, 16
    %v845 = vadd.s32 %v844, %v842
    %vm846 = vcmp.eq.s32.totalorder %v244, %v845
    %v847 = vsub.f32 %v821, %v829
    %v848 = vadd.f32 %v457, %v847
    %v849 = vcvt.s32.f32 %v845
    %v850 = vmul.f32 %v849, 0.05
    %v851 = vadd.f32 %v850, -1.0
    %vm852 = vcmp.eq.s32.totalorder %v244, 6
    %v853 = vsel %vm852, %v851, %v462
    %v854 = vsel %vm846, 1, 0
    %v855 = vcvt.s32.f32 %v854
    %856 = vmatprep.subr.mxu0 %v511
    %857 = vmatpush1.msra.mxu0 %v510
    %858 = vmatprep.subr.mxu0 %v508
    %859 = vmatpush1.msra.mxu0 %v507
    %860 = vmatprep.subr.mxu0 %v505
    %861 = vmatpush1.msra.mxu0 %v504
    %862 = vmatprep.subr.mxu0 %v502
    %863 = vmatpush1.msra.mxu0 %v501
    %864 = vmatprep.subr.mxu0 %v499
    %865 = vmatpush1.msra.mxu0 %v498
    %866 = vmatprep.subr.mxu0 %v496
    %867 = vmatpush1.msra.mxu0 %v495
    %868 = vmatprep.subr.mxu0 %v493
    %869 = vmatpush1.msra.mxu0 %v492
    %870 = vmatprep.subr.mxu0 %v490
    %871 = vmatpush1.msra.mxu0 %v489
    %872 = vmatprep.subr.mxu0 %v487
    %873 = vmatpush1.msra.mxu0 %v486
    %874 = vmatprep.subr.mxu0 %v484
    %875 = vmatpush1.msra.mxu0 %v483
    %876 = vmatprep.subr.mxu0 %v481
    %877 = vmatpush1.msra.mxu0 %v480
    %878 = vmatprep.subr.mxu0 %v478
    %879 = vmatpush1.msra.mxu0 %v477
    %880 = vmatprep.subr.mxu0 %v475
    %881 = vmatpush1.msra.mxu0 %v474
    %882 = vmatprep.subr.mxu0 %v472
    %883 = vmatpush1.msra.mxu0 %v471
    %884 = vmatprep.subr.mxu0 %v469
    %885 = vmatpush1.msra.mxu0 %v468
    %886 = vmatprep.subr.mxu0 %v466
    %887 = vmatpush1.msra.mxu0 %v465
    %888 = vmatprep.subr.mxu0 0.0
    %889 = vmatpush2.msra.mxu0 0.0
    %890 = vmatprep.subr.mxu0 0.0
    %891 = vmatpush2.msra.mxu0 0.0
    %892 = vmatprep.subr.mxu0 0.0
    %893 = vmatpush2.msra.mxu0 0.0
    %894 = vmatprep.subr.mxu0 0.0
    %895 = vmatpush2.msra.mxu0 0.0
    %896 = vmatprep.subr.mxu0 0.0
    %897 = vmatpush2.msra.mxu0 0.0
    %898 = vmatprep.subr.mxu0 0.0
    %899 = vmatpush2.msra.mxu0 0.0
    %900 = vmatprep.subr.mxu0 0.0
    %901 = vmatpush2.msra.mxu0 0.0
    %902 = vmatprep.subr.mxu0 0.0
    %903 = vmatpush2.msra.mxu0 0.0
    %904 = vmatprep.subr.mxu0 0.0
    %905 = vmatpush2.msra.mxu0 0.0
    %906 = vmatprep.subr.mxu0 0.0
    %907 = vmatpush2.msra.mxu0 0.0
    %908 = vmatprep.subr.mxu0 0.0
    %909 = vmatpush2.msra.mxu0 0.0
    %910 = vmatprep.subr.mxu0 0.0
    %911 = vmatpush2.msra.mxu0 0.0
    %912 = vmatprep.subr.mxu0 0.0
    %913 = vmatpush2.msra.mxu0 0.0
    %914 = vmatprep.subr.mxu0 0.0
    %915 = vmatpush2.msra.mxu0 0.0
    %916 = vmatprep.subr.mxu0 0.0
    %917 = vmatpush2.msra.mxu0 0.0
    %918 = vmatprep.subr.mxu0 0.0
    %919 = vmatpush2.msra.mxu0 0.0
    %920 = vmatprep.mubr.f32.mxu0 0.0
    %921 = vmatmul.mubr.f32.gmra.mxu0 %v855
    %v922 = vpop.f32.mrf.mxu0
    %v923 = vadd.f32 0.0, %v922
    %v924 = vpop.f32.mrf.mxu0
    %v925 = vadd.f32 0.0, %v924
    %926 = vdwg.mxu0
    %927 = vmatprep.subr.mxu0 0.0
    %928 = vmatpush1.msra.mxu0 %v512
    %929 = vmatprep.subr.mxu0 0.0
    %930 = vmatpush1.msra.mxu0 %v509
    %931 = vmatprep.subr.mxu0 0.0
    %932 = vmatpush1.msra.mxu0 %v506
    %933 = vmatprep.subr.mxu0 0.0
    %934 = vmatpush1.msra.mxu0 %v503
    %935 = vmatprep.subr.mxu0 0.0
    %936 = vmatpush1.msra.mxu0 %v500
    %937 = vmatprep.subr.mxu0 0.0
    %938 = vmatpush1.msra.mxu0 %v497
    %939 = vmatprep.subr.mxu0 0.0
    %940 = vmatpush1.msra.mxu0 %v494
    %941 = vmatprep.subr.mxu0 0.0
    %942 = vmatpush1.msra.mxu0 %v491
    %943 = vmatprep.subr.mxu0 0.0
    %944 = vmatpush1.msra.mxu0 %v488
    %945 = vmatprep.subr.mxu0 0.0
    %946 = vmatpush1.msra.mxu0 %v485
    %947 = vmatprep.subr.mxu0 0.0
    %948 = vmatpush1.msra.mxu0 %v482
    %949 = vmatprep.subr.mxu0 0.0
    %950 = vmatpush1.msra.mxu0 %v479
    %951 = vmatprep.subr.mxu0 0.0
    %952 = vmatpush1.msra.mxu0 %v476
    %953 = vmatprep.subr.mxu0 0.0
    %954 = vmatpush1.msra.mxu0 %v473
    %955 = vmatprep.subr.mxu0 0.0
    %956 = vmatpush1.msra.mxu0 %v470
    %957 = vmatprep.subr.mxu0 0.0
    %958 = vmatpush1.msra.mxu0 %v467
    %959 = vmatprep.subr.mxu0 0.0
    %960 = vmatpush2.msra.mxu0 0.0
    %961 = vmatprep.subr.mxu0 0.0
    %962 = vmatpush2.msra.mxu0 0.0
    %963 = vmatprep.subr.mxu0 0.0
    %964 = vmatpush2.msra.mxu0 0.0
    %965 = vmatprep.subr.mxu0 0.0
    %966 = vmatpush2.msra.mxu0 0.0
    %967 = vmatprep.subr.mxu0 0.0
    %968 = vmatpush2.msra.mxu0 0.0
    %969 = vmatprep.subr.mxu0 0.0
    %970 = vmatpush2.msra.mxu0 0.0
    %971 = vmatprep.subr.mxu0 0.0
    %972 = vmatpush2.msra.mxu0 0.0
    %973 = vmatprep.subr.mxu0 0.0
    %974 = vmatpush2.msra.mxu0 0.0
    %975 = vmatprep.subr.mxu0 0.0
    %976 = vmatpush2.msra.mxu0 0.0
    %977 = vmatprep.subr.mxu0 0.0
    %978 = vmatpush2.msra.mxu0 0.0
    %979 = vmatprep.subr.mxu0 0.0
    %980 = vmatpush2.msra.mxu0 0.0
    %981 = vmatprep.subr.mxu0 0.0
    %982 = vmatpush2.msra.mxu0 0.0
    %983 = vmatprep.subr.mxu0 0.0
    %984 = vmatpush2.msra.mxu0 0.0
    %985 = vmatprep.subr.mxu0 0.0
    %986 = vmatpush2.msra.mxu0 0.0
    %987 = vmatprep.subr.mxu0 0.0
    %988 = vmatpush2.msra.mxu0 0.0
    %989 = vmatprep.subr.mxu0 0.0
    %990 = vmatpush2.msra.mxu0 0.0
    %991 = vmatprep.mubr.f32.mxu0 0.0
    %992 = vmatmul.mubr.f32.gmra.mxu0 %v855
    %v993 = vpop.f32.mrf.mxu0
    %v994 = vadd.f32 0.0, %v993
    %v995 = vpop.f32.mrf.mxu0
    %996 = vdwg.mxu0
    %v997 = vadd.f32 %v923, %v747
    %v998 = vxor.u32 %v997, 2147483648
    %v999 = vmul.f32 %v998, 1.442695
    %v1000 = vpow.pop %v999
    %v1001 = vadd.f32 %v1000, 1.0
    %v1002 = vrcp.pop %v1001
    %v1003 = vmul.f32 1.0, %v1002
    %v1004 = vadd.f32 %v925, %v816
    %v1005 = vxor.u32 %v1004, 2147483648
    %v1006 = vmul.f32 %v1005, 1.442695
    %v1007 = vpow.pop %v1006
    %v1008 = vadd.f32 %v1007, 1.0
    %v1009 = vrcp.pop %v1008
    %v1010 = vmul.f32 1.0, %v1009
    %v1011 = vmul.f32 %v1003, %v818
    %v1012 = vadd.f32 %v994, %v1011
    %v1013 = vtanh.pop %v1012
    %v1014 = vsub.f32 1.0, %v1010
    %v1015 = vmul.f32 %v1014, %v1013
    %v1016 = vmul.f32 %v1010, %v674
    %v1017 = vadd.f32 %v1015, %v1016
    %v1019 = vsel %vm283, %v1017, 0
    %1021 = vmatprep.subr.mxu0 0.0
    %1022 = vmatpush1.msra.mxu0 0.0
    %1023 = vmatprep.subr.mxu0 0.0
    %1024 = vmatpush1.msra.mxu0 0.0
    %1025 = vmatprep.subr.mxu0 0.0
    %1026 = vmatpush1.msra.mxu0 0.0
    %1027 = vmatprep.subr.mxu0 0.0
    %1028 = vmatpush1.msra.mxu0 0.0
    %1029 = vmatprep.subr.mxu0 0.0
    %1030 = vmatpush1.msra.mxu0 0.0
    %1031 = vmatprep.subr.mxu0 0.0
    %1032 = vmatpush1.msra.mxu0 0.0
    %1033 = vmatprep.subr.mxu0 0.0
    %1034 = vmatpush1.msra.mxu0 0.0
    %1035 = vmatprep.subr.mxu0 0.0
    %1036 = vmatpush1.msra.mxu0 0.0
    %1037 = vmatprep.subr.mxu0 0.0
    %1038 = vmatpush1.msra.mxu0 0.0
    %1039 = vmatprep.subr.mxu0 0.0
    %1040 = vmatpush1.msra.mxu0 0.0
    %1041 = vmatprep.subr.mxu0 0.0
    %1042 = vmatpush1.msra.mxu0 0.0
    %1043 = vmatprep.subr.mxu0 0.0
    %1044 = vmatpush1.msra.mxu0 0.0
    %1045 = vmatprep.subr.mxu0 %v258
    %1046 = vmatpush1.msra.mxu0 %v257
    %1047 = vmatprep.subr.mxu0 %v254
    %1048 = vmatpush1.msra.mxu0 %v253
    %1049 = vmatprep.subr.mxu0 %v250
    %1050 = vmatpush1.msra.mxu0 %v249
    %1051 = vmatprep.subr.mxu0 %v246
    %1052 = vmatpush1.msra.mxu0 %v245
    %1053 = vmatprep.subr.mxu0 0.0
    %1054 = vmatpush2.msra.mxu0 0.0
    %1055 = vmatprep.subr.mxu0 0.0
    %1056 = vmatpush2.msra.mxu0 0.0
    %1057 = vmatprep.subr.mxu0 0.0
    %1058 = vmatpush2.msra.mxu0 0.0
    %1059 = vmatprep.subr.mxu0 0.0
    %1060 = vmatpush2.msra.mxu0 0.0
    %1061 = vmatprep.subr.mxu0 0.0
    %1062 = vmatpush2.msra.mxu0 0.0
    %1063 = vmatprep.subr.mxu0 0.0
    %1064 = vmatpush2.msra.mxu0 0.0
    %1065 = vmatprep.subr.mxu0 0.0
    %1066 = vmatpush2.msra.mxu0 0.0
    %1067 = vmatprep.subr.mxu0 0.0
    %1068 = vmatpush2.msra.mxu0 0.0
    %1069 = vmatprep.subr.mxu0 0.0
    %1070 = vmatpush2.msra.mxu0 0.0
    %1071 = vmatprep.subr.mxu0 0.0
    %1072 = vmatpush2.msra.mxu0 0.0
    %1073 = vmatprep.subr.mxu0 0.0
    %1074 = vmatpush2.msra.mxu0 0.0
    %1075 = vmatprep.subr.mxu0 0.0
    %1076 = vmatpush2.msra.mxu0 0.0
    %1077 = vmatprep.subr.mxu0 0.0
    %1078 = vmatpush2.msra.mxu0 0.0
    %1079 = vmatprep.subr.mxu0 0.0
    %1080 = vmatpush2.msra.mxu0 0.0
    %1081 = vmatprep.subr.mxu0 0.0
    %1082 = vmatpush2.msra.mxu0 0.0
    %1083 = vmatprep.subr.mxu0 0.0
    %1084 = vmatpush2.msra.mxu0 0.0
    %1085 = vmatprep.mubr.f32.mxu0 0.0
    %1086 = vmatmul.mubr.f32.gmra.mxu0 %v1019
    %v1087 = vpop.f32.mrf.mxu0
    %v1088 = vadd.f32 %v266, %v1087
    %v1089 = vpop.f32.mrf.mxu0
    %v1090 = vadd.f32 %v270, %v1089
    %1091 = vdwg.mxu0
    %1092 = vmatprep.subr.mxu0 0.0
    %1093 = vmatpush1.msra.mxu0 0.0
    %1094 = vmatprep.subr.mxu0 0.0
    %1095 = vmatpush1.msra.mxu0 0.0
    %1096 = vmatprep.subr.mxu0 0.0
    %1097 = vmatpush1.msra.mxu0 0.0
    %1098 = vmatprep.subr.mxu0 0.0
    %1099 = vmatpush1.msra.mxu0 0.0
    %1100 = vmatprep.subr.mxu0 0.0
    %1101 = vmatpush1.msra.mxu0 0.0
    %1102 = vmatprep.subr.mxu0 0.0
    %1103 = vmatpush1.msra.mxu0 0.0
    %1104 = vmatprep.subr.mxu0 0.0
    %1105 = vmatpush1.msra.mxu0 0.0
    %1106 = vmatprep.subr.mxu0 0.0
    %1107 = vmatpush1.msra.mxu0 0.0
    %1108 = vmatprep.subr.mxu0 0.0
    %1109 = vmatpush1.msra.mxu0 0.0
    %1110 = vmatprep.subr.mxu0 0.0
    %1111 = vmatpush1.msra.mxu0 0.0
    %1112 = vmatprep.subr.mxu0 0.0
    %1113 = vmatpush1.msra.mxu0 0.0
    %1114 = vmatprep.subr.mxu0 0.0
    %1115 = vmatpush1.msra.mxu0 0.0
    %1116 = vmatprep.subr.mxu0 %v260
    %1117 = vmatpush1.msra.mxu0 %v259
    %1118 = vmatprep.subr.mxu0 %v256
    %1119 = vmatpush1.msra.mxu0 %v255
    %1120 = vmatprep.subr.mxu0 %v252
    %1121 = vmatpush1.msra.mxu0 %v251
    %1122 = vmatprep.subr.mxu0 %v248
    %1123 = vmatpush1.msra.mxu0 %v247
    %1124 = vmatprep.subr.mxu0 0.0
    %1125 = vmatpush2.msra.mxu0 0.0
    %1126 = vmatprep.subr.mxu0 0.0
    %1127 = vmatpush2.msra.mxu0 0.0
    %1128 = vmatprep.subr.mxu0 0.0
    %1129 = vmatpush2.msra.mxu0 0.0
    %1130 = vmatprep.subr.mxu0 0.0
    %1131 = vmatpush2.msra.mxu0 0.0
    %1132 = vmatprep.subr.mxu0 0.0
    %1133 = vmatpush2.msra.mxu0 0.0
    %1134 = vmatprep.subr.mxu0 0.0
    %1135 = vmatpush2.msra.mxu0 0.0
    %1136 = vmatprep.subr.mxu0 0.0
    %1137 = vmatpush2.msra.mxu0 0.0
    %1138 = vmatprep.subr.mxu0 0.0
    %1139 = vmatpush2.msra.mxu0 0.0
    %1140 = vmatprep.subr.mxu0 0.0
    %1141 = vmatpush2.msra.mxu0 0.0
    %1142 = vmatprep.subr.mxu0 0.0
    %1143 = vmatpush2.msra.mxu0 0.0
    %1144 = vmatprep.subr.mxu0 0.0
    %1145 = vmatpush2.msra.mxu0 0.0
    %1146 = vmatprep.subr.mxu0 0.0
    %1147 = vmatpush2.msra.mxu0 0.0
    %1148 = vmatprep.subr.mxu0 0.0
    %1149 = vmatpush2.msra.mxu0 0.0
    %1150 = vmatprep.subr.mxu0 0.0
    %1151 = vmatpush2.msra.mxu0 0.0
    %1152 = vmatprep.subr.mxu0 0.0
    %1153 = vmatpush2.msra.mxu0 0.0
    %1154 = vmatprep.subr.mxu0 0.0
    %1155 = vmatpush2.msra.mxu0 0.0
    %1156 = vmatprep.mubr.f32.mxu0 0.0
    %1157 = vmatmul.mubr.f32.gmra.mxu0 %v1019
    %v1158 = vpop.f32.mrf.mxu0
    %v1159 = vadd.f32 %v274, %v1158
    %v1160 = vpop.f32.mrf.mxu0
    %v1161 = vadd.f32 %v278, %v1160
    %1162 = vdwg.mxu0
    %1163 = vmax.xlane.f32.xlu0 %v1088
    %v1164 = vpop.xlane.xlu0 %1163
    %v1165 = vsub.f32 %v1088, %v1164
    %v1166 = vmul.f32 %v1165, 1.442695
    %v1167 = vpow.pop %v1166
    %1168 = vadd.xlane.f32.xlu0 %v1167
    %v1169 = vpop.xlane.xlu0 %1168
    %v1170 = vlog2.pop %v1169
    %v1171 = vmul.f32 %v1170, 0.6931472
    %v1172 = vadd.f32 %v1171, %v1164
    %vm1173 = vcmp.eq.f32.partialorder %v1088, %v1164
    %v1174 = vsel %vm1173, %v244, 128
    %v1175 = vand.u32 %v1174, 65535
    %v1176 = vshra.s32 %v1174, 16
    %v1177 = vcvt.s32.f32 %v1175
    %v1178 = vcvt.s32.f32 %v1176
    %1179 = vmin.xlane.f32.xlu0 %v1178
    %v1180 = vpop.xlane.xlu0 %1179
    %vm1181 = vcmp.eq.f32.partialorder %v1178, %v1180
    %v1182 = vsel %vm1181, %v1177, inf
    %1183 = vmin.xlane.f32.xlu0 %v1182
    %v1184 = vpop.xlane.xlu0 %1183
    %v1185 = vcvt.f32.s32 %v1184
    %v1186 = vcvt.f32.s32 %v1180
    %v1187 = vshll.u32 %v1186, 16
    %v1188 = vadd.s32 %v1187, %v1185
    %vm1189 = vcmp.eq.s32.totalorder %v244, %v1188
    %v1190 = vsub.f32 %v1164, %v1172
    %v1191 = vadd.f32 %v848, %v1190
    %v1192 = vcvt.s32.f32 %v1188
    %v1193 = vmul.f32 %v1192, 0.05
    %v1194 = vadd.f32 %v1193, -1.0
    %vm1195 = vcmp.eq.s32.totalorder %v244, 5
    %v1196 = vsel %vm1195, %v1194, %v853
    %v1197 = vsel %vm1189, 1, 0
    %v1198 = vcvt.s32.f32 %v1197
    %1199 = vmatprep.subr.mxu0 %v511
    %1200 = vmatpush1.msra.mxu0 %v510
    %1201 = vmatprep.subr.mxu0 %v508
    %1202 = vmatpush1.msra.mxu0 %v507
    %1203 = vmatprep.subr.mxu0 %v505
    %1204 = vmatpush1.msra.mxu0 %v504
    %1205 = vmatprep.subr.mxu0 %v502
    %1206 = vmatpush1.msra.mxu0 %v501
    %1207 = vmatprep.subr.mxu0 %v499
    %1208 = vmatpush1.msra.mxu0 %v498
    %1209 = vmatprep.subr.mxu0 %v496
    %1210 = vmatpush1.msra.mxu0 %v495
    %1211 = vmatprep.subr.mxu0 %v493
    %1212 = vmatpush1.msra.mxu0 %v492
    %1213 = vmatprep.subr.mxu0 %v490
    %1214 = vmatpush1.msra.mxu0 %v489
    %1215 = vmatprep.subr.mxu0 %v487
    %1216 = vmatpush1.msra.mxu0 %v486
    %1217 = vmatprep.subr.mxu0 %v484
    %1218 = vmatpush1.msra.mxu0 %v483
    %1219 = vmatprep.subr.mxu0 %v481
    %1220 = vmatpush1.msra.mxu0 %v480
    %1221 = vmatprep.subr.mxu0 %v478
    %1222 = vmatpush1.msra.mxu0 %v477
    %1223 = vmatprep.subr.mxu0 %v475
    %1224 = vmatpush1.msra.mxu0 %v474
    %1225 = vmatprep.subr.mxu0 %v472
    %1226 = vmatpush1.msra.mxu0 %v471
    %1227 = vmatprep.subr.mxu0 %v469
    %1228 = vmatpush1.msra.mxu0 %v468
    %1229 = vmatprep.subr.mxu0 %v466
    %1230 = vmatpush1.msra.mxu0 %v465
    %1231 = vmatprep.subr.mxu0 0.0
    %1232 = vmatpush2.msra.mxu0 0.0
    %1233 = vmatprep.subr.mxu0 0.0
    %1234 = vmatpush2.msra.mxu0 0.0
    %1235 = vmatprep.subr.mxu0 0.0
    %1236 = vmatpush2.msra.mxu0 0.0
    %1237 = vmatprep.subr.mxu0 0.0
    %1238 = vmatpush2.msra.mxu0 0.0
    %1239 = vmatprep.subr.mxu0 0.0
    %1240 = vmatpush2.msra.mxu0 0.0
    %1241 = vmatprep.subr.mxu0 0.0
    %1242 = vmatpush2.msra.mxu0 0.0
    %1243 = vmatprep.subr.mxu0 0.0
    %1244 = vmatpush2.msra.mxu0 0.0
    %1245 = vmatprep.subr.mxu0 0.0
    %1246 = vmatpush2.msra.mxu0 0.0
    %1247 = vmatprep.subr.mxu0 0.0
    %1248 = vmatpush2.msra.mxu0 0.0
    %1249 = vmatprep.subr.mxu0 0.0
    %1250 = vmatpush2.msra.mxu0 0.0
    %1251 = vmatprep.subr.mxu0 0.0
    %1252 = vmatpush2.msra.mxu0 0.0
    %1253 = vmatprep.subr.mxu0 0.0
    %1254 = vmatpush2.msra.mxu0 0.0
    %1255 = vmatprep.subr.mxu0 0.0
    %1256 = vmatpush2.msra.mxu0 0.0
    %1257 = vmatprep.subr.mxu0 0.0
    %1258 = vmatpush2.msra.mxu0 0.0
    %1259 = vmatprep.subr.mxu0 0.0
    %1260 = vmatpush2.msra.mxu0 0.0
    %1261 = vmatprep.subr.mxu0 0.0
    %1262 = vmatpush2.msra.mxu0 0.0
    %1263 = vmatprep.mubr.f32.mxu0 0.0
    %1264 = vmatmul.mubr.f32.gmra.mxu0 %v1198
    %v1265 = vpop.f32.mrf.mxu0
    %v1266 = vadd.f32 0.0, %v1265
    %v1267 = vpop.f32.mrf.mxu0
    %v1268 = vadd.f32 0.0, %v1267
    %1269 = vdwg.mxu0
    %1270 = vmatprep.subr.mxu0 0.0
    %1271 = vmatpush1.msra.mxu0 %v512
    %1272 = vmatprep.subr.mxu0 0.0
    %1273 = vmatpush1.msra.mxu0 %v509
    %1274 = vmatprep.subr.mxu0 0.0
    %1275 = vmatpush1.msra.mxu0 %v506
    %1276 = vmatprep.subr.mxu0 0.0
    %1277 = vmatpush1.msra.mxu0 %v503
    %1278 = vmatprep.subr.mxu0 0.0
    %1279 = vmatpush1.msra.mxu0 %v500
    %1280 = vmatprep.subr.mxu0 0.0
    %1281 = vmatpush1.msra.mxu0 %v497
    %1282 = vmatprep.subr.mxu0 0.0
    %1283 = vmatpush1.msra.mxu0 %v494
    %1284 = vmatprep.subr.mxu0 0.0
    %1285 = vmatpush1.msra.mxu0 %v491
    %1286 = vmatprep.subr.mxu0 0.0
    %1287 = vmatpush1.msra.mxu0 %v488
    %1288 = vmatprep.subr.mxu0 0.0
    %1289 = vmatpush1.msra.mxu0 %v485
    %1290 = vmatprep.subr.mxu0 0.0
    %1291 = vmatpush1.msra.mxu0 %v482
    %1292 = vmatprep.subr.mxu0 0.0
    %1293 = vmatpush1.msra.mxu0 %v479
    %1294 = vmatprep.subr.mxu0 0.0
    %1295 = vmatpush1.msra.mxu0 %v476
    %1296 = vmatprep.subr.mxu0 0.0
    %1297 = vmatpush1.msra.mxu0 %v473
    %1298 = vmatprep.subr.mxu0 0.0
    %1299 = vmatpush1.msra.mxu0 %v470
    %1300 = vmatprep.subr.mxu0 0.0
    %1301 = vmatpush1.msra.mxu0 %v467
    %1302 = vmatprep.subr.mxu0 0.0
    %1303 = vmatpush2.msra.mxu0 0.0
    %1304 = vmatprep.subr.mxu0 0.0
    %1305 = vmatpush2.msra.mxu0 0.0
    %1306 = vmatprep.subr.mxu0 0.0
    %1307 = vmatpush2.msra.mxu0 0.0
    %1308 = vmatprep.subr.mxu0 0.0
    %1309 = vmatpush2.msra.mxu0 0.0
    %1310 = vmatprep.subr.mxu0 0.0
    %1311 = vmatpush2.msra.mxu0 0.0
    %1312 = vmatprep.subr.mxu0 0.0
    %1313 = vmatpush2.msra.mxu0 0.0
    %1314 = vmatprep.subr.mxu0 0.0
    %1315 = vmatpush2.msra.mxu0 0.0
    %1316 = vmatprep.subr.mxu0 0.0
    %1317 = vmatpush2.msra.mxu0 0.0
    %1318 = vmatprep.subr.mxu0 0.0
    %1319 = vmatpush2.msra.mxu0 0.0
    %1320 = vmatprep.subr.mxu0 0.0
    %1321 = vmatpush2.msra.mxu0 0.0
    %1322 = vmatprep.subr.mxu0 0.0
    %1323 = vmatpush2.msra.mxu0 0.0
    %1324 = vmatprep.subr.mxu0 0.0
    %1325 = vmatpush2.msra.mxu0 0.0
    %1326 = vmatprep.subr.mxu0 0.0
    %1327 = vmatpush2.msra.mxu0 0.0
    %1328 = vmatprep.subr.mxu0 0.0
    %1329 = vmatpush2.msra.mxu0 0.0
    %1330 = vmatprep.subr.mxu0 0.0
    %1331 = vmatpush2.msra.mxu0 0.0
    %1332 = vmatprep.subr.mxu0 0.0
    %1333 = vmatpush2.msra.mxu0 0.0
    %1334 = vmatprep.mubr.f32.mxu0 0.0
    %1335 = vmatmul.mubr.f32.gmra.mxu0 %v1198
    %v1336 = vpop.f32.mrf.mxu0
    %v1337 = vadd.f32 0.0, %v1336
    %v1338 = vpop.f32.mrf.mxu0
    %1339 = vdwg.mxu0
    %v1340 = vadd.f32 %v1266, %v1090
    %v1341 = vxor.u32 %v1340, 2147483648
    %v1342 = vmul.f32 %v1341, 1.442695
    %v1343 = vpow.pop %v1342
    %v1344 = vadd.f32 %v1343, 1.0
    %v1345 = vrcp.pop %v1344
    %v1346 = vmul.f32 1.0, %v1345
    %v1347 = vadd.f32 %v1268, %v1159
    %v1348 = vxor.u32 %v1347, 2147483648
    %v1349 = vmul.f32 %v1348, 1.442695
    %v1350 = vpow.pop %v1349
    %v1351 = vadd.f32 %v1350, 1.0
    %v1352 = vrcp.pop %v1351
    %v1353 = vmul.f32 1.0, %v1352
    %v1354 = vmul.f32 %v1346, %v1161
    %v1355 = vadd.f32 %v1337, %v1354
    %v1356 = vtanh.pop %v1355
    %v1357 = vsub.f32 1.0, %v1353
    %v1358 = vmul.f32 %v1357, %v1356
    %v1359 = vmul.f32 %v1353, %v1017
    %v1360 = vadd.f32 %v1358, %v1359
    %v1362 = vsel %vm283, %v1360, 0
    %1364 = vmatprep.subr.mxu0 0.0
    %1365 = vmatpush1.msra.mxu0 0.0
    %1366 = vmatprep.subr.mxu0 0.0
    %1367 = vmatpush1.msra.mxu0 0.0
    %1368 = vmatprep.subr.mxu0 0.0
    %1369 = vmatpush1.msra.mxu0 0.0
    %1370 = vmatprep.subr.mxu0 0.0
    %1371 = vmatpush1.msra.mxu0 0.0
    %1372 = vmatprep.subr.mxu0 0.0
    %1373 = vmatpush1.msra.mxu0 0.0
    %1374 = vmatprep.subr.mxu0 0.0
    %1375 = vmatpush1.msra.mxu0 0.0
    %1376 = vmatprep.subr.mxu0 0.0
    %1377 = vmatpush1.msra.mxu0 0.0
    %1378 = vmatprep.subr.mxu0 0.0
    %1379 = vmatpush1.msra.mxu0 0.0
    %1380 = vmatprep.subr.mxu0 0.0
    %1381 = vmatpush1.msra.mxu0 0.0
    %1382 = vmatprep.subr.mxu0 0.0
    %1383 = vmatpush1.msra.mxu0 0.0
    %1384 = vmatprep.subr.mxu0 0.0
    %1385 = vmatpush1.msra.mxu0 0.0
    %1386 = vmatprep.subr.mxu0 0.0
    %1387 = vmatpush1.msra.mxu0 0.0
    %1388 = vmatprep.subr.mxu0 %v258
    %1389 = vmatpush1.msra.mxu0 %v257
    %1390 = vmatprep.subr.mxu0 %v254
    %1391 = vmatpush1.msra.mxu0 %v253
    %1392 = vmatprep.subr.mxu0 %v250
    %1393 = vmatpush1.msra.mxu0 %v249
    %1394 = vmatprep.subr.mxu0 %v246
    %1395 = vmatpush1.msra.mxu0 %v245
    %1396 = vmatprep.subr.mxu0 0.0
    %1397 = vmatpush2.msra.mxu0 0.0
    %1398 = vmatprep.subr.mxu0 0.0
    %1399 = vmatpush2.msra.mxu0 0.0
    %1400 = vmatprep.subr.mxu0 0.0
    %1401 = vmatpush2.msra.mxu0 0.0
    %1402 = vmatprep.subr.mxu0 0.0
    %1403 = vmatpush2.msra.mxu0 0.0
    %1404 = vmatprep.subr.mxu0 0.0
    %1405 = vmatpush2.msra.mxu0 0.0
    %1406 = vmatprep.subr.mxu0 0.0
    %1407 = vmatpush2.msra.mxu0 0.0
    %1408 = vmatprep.subr.mxu0 0.0
    %1409 = vmatpush2.msra.mxu0 0.0
    %1410 = vmatprep.subr.mxu0 0.0
    %1411 = vmatpush2.msra.mxu0 0.0
    %1412 = vmatprep.subr.mxu0 0.0
    %1413 = vmatpush2.msra.mxu0 0.0
    %1414 = vmatprep.subr.mxu0 0.0
    %1415 = vmatpush2.msra.mxu0 0.0
    %1416 = vmatprep.subr.mxu0 0.0
    %1417 = vmatpush2.msra.mxu0 0.0
    %1418 = vmatprep.subr.mxu0 0.0
    %1419 = vmatpush2.msra.mxu0 0.0
    %1420 = vmatprep.subr.mxu0 0.0
    %1421 = vmatpush2.msra.mxu0 0.0
    %1422 = vmatprep.subr.mxu0 0.0
    %1423 = vmatpush2.msra.mxu0 0.0
    %1424 = vmatprep.subr.mxu0 0.0
    %1425 = vmatpush2.msra.mxu0 0.0
    %1426 = vmatprep.subr.mxu0 0.0
    %1427 = vmatpush2.msra.mxu0 0.0
    %1428 = vmatprep.mubr.f32.mxu0 0.0
    %1429 = vmatmul.mubr.f32.gmra.mxu0 %v1362
    %v1430 = vpop.f32.mrf.mxu0
    %v1431 = vadd.f32 %v266, %v1430
    %v1432 = vpop.f32.mrf.mxu0
    %v1433 = vadd.f32 %v270, %v1432
    %1434 = vdwg.mxu0
    %1435 = vmatprep.subr.mxu0 0.0
    %1436 = vmatpush1.msra.mxu0 0.0
    %1437 = vmatprep.subr.mxu0 0.0
    %1438 = vmatpush1.msra.mxu0 0.0
    %1439 = vmatprep.subr.mxu0 0.0
    %1440 = vmatpush1.msra.mxu0 0.0
    %1441 = vmatprep.subr.mxu0 0.0
    %1442 = vmatpush1.msra.mxu0 0.0
    %1443 = vmatprep.subr.mxu0 0.0
    %1444 = vmatpush1.msra.mxu0 0.0
    %1445 = vmatprep.subr.mxu0 0.0
    %1446 = vmatpush1.msra.mxu0 0.0
    %1447 = vmatprep.subr.mxu0 0.0
    %1448 = vmatpush1.msra.mxu0 0.0
    %1449 = vmatprep.subr.mxu0 0.0
    %1450 = vmatpush1.msra.mxu0 0.0
    %1451 = vmatprep.subr.mxu0 0.0
    %1452 = vmatpush1.msra.mxu0 0.0
    %1453 = vmatprep.subr.mxu0 0.0
    %1454 = vmatpush1.msra.mxu0 0.0
    %1455 = vmatprep.subr.mxu0 0.0
    %1456 = vmatpush1.msra.mxu0 0.0
    %1457 = vmatprep.subr.mxu0 0.0
    %1458 = vmatpush1.msra.mxu0 0.0
    %1459 = vmatprep.subr.mxu0 %v260
    %1460 = vmatpush1.msra.mxu0 %v259
    %1461 = vmatprep.subr.mxu0 %v256
    %1462 = vmatpush1.msra.mxu0 %v255
    %1463 = vmatprep.subr.mxu0 %v252
    %1464 = vmatpush1.msra.mxu0 %v251
    %1465 = vmatprep.subr.mxu0 %v248
    %1466 = vmatpush1.msra.mxu0 %v247
    %1467 = vmatprep.subr.mxu0 0.0
    %1468 = vmatpush2.msra.mxu0 0.0
    %1469 = vmatprep.subr.mxu0 0.0
    %1470 = vmatpush2.msra.mxu0 0.0
    %1471 = vmatprep.subr.mxu0 0.0
    %1472 = vmatpush2.msra.mxu0 0.0
    %1473 = vmatprep.subr.mxu0 0.0
    %1474 = vmatpush2.msra.mxu0 0.0
    %1475 = vmatprep.subr.mxu0 0.0
    %1476 = vmatpush2.msra.mxu0 0.0
    %1477 = vmatprep.subr.mxu0 0.0
    %1478 = vmatpush2.msra.mxu0 0.0
    %1479 = vmatprep.subr.mxu0 0.0
    %1480 = vmatpush2.msra.mxu0 0.0
    %1481 = vmatprep.subr.mxu0 0.0
    %1482 = vmatpush2.msra.mxu0 0.0
    %1483 = vmatprep.subr.mxu0 0.0
    %1484 = vmatpush2.msra.mxu0 0.0
    %1485 = vmatprep.subr.mxu0 0.0
    %1486 = vmatpush2.msra.mxu0 0.0
    %1487 = vmatprep.subr.mxu0 0.0
    %1488 = vmatpush2.msra.mxu0 0.0
    %1489 = vmatprep.subr.mxu0 0.0
    %1490 = vmatpush2.msra.mxu0 0.0
    %1491 = vmatprep.subr.mxu0 0.0
    %1492 = vmatpush2.msra.mxu0 0.0
    %1493 = vmatprep.subr.mxu0 0.0
    %1494 = vmatpush2.msra.mxu0 0.0
    %1495 = vmatprep.subr.mxu0 0.0
    %1496 = vmatpush2.msra.mxu0 0.0
    %1497 = vmatprep.subr.mxu0 0.0
    %1498 = vmatpush2.msra.mxu0 0.0
    %1499 = vmatprep.mubr.f32.mxu0 0.0
    %1500 = vmatmul.mubr.f32.gmra.mxu0 %v1362
    %v1501 = vpop.f32.mrf.mxu0
    %v1502 = vadd.f32 %v274, %v1501
    %v1503 = vpop.f32.mrf.mxu0
    %v1504 = vadd.f32 %v278, %v1503
    %1505 = vdwg.mxu0
    %1506 = vmax.xlane.f32.xlu0 %v1431
    %v1507 = vpop.xlane.xlu0 %1506
    %v1508 = vsub.f32 %v1431, %v1507
    %v1509 = vmul.f32 %v1508, 1.442695
    %v1510 = vpow.pop %v1509
    %1511 = vadd.xlane.f32.xlu0 %v1510
    %v1512 = vpop.xlane.xlu0 %1511
    %v1513 = vlog2.pop %v1512
    %v1514 = vmul.f32 %v1513, 0.6931472
    %v1515 = vadd.f32 %v1514, %v1507
    %vm1516 = vcmp.eq.f32.partialorder %v1431, %v1507
    %v1517 = vsel %vm1516, %v244, 128
    %v1518 = vand.u32 %v1517, 65535
    %v1519 = vshra.s32 %v1517, 16
    %v1520 = vcvt.s32.f32 %v1518
    %v1521 = vcvt.s32.f32 %v1519
    %1522 = vmin.xlane.f32.xlu0 %v1521
    %v1523 = vpop.xlane.xlu0 %1522
    %vm1524 = vcmp.eq.f32.partialorder %v1521, %v1523
    %v1525 = vsel %vm1524, %v1520, inf
    %1526 = vmin.xlane.f32.xlu0 %v1525
    %v1527 = vpop.xlane.xlu0 %1526
    %v1528 = vcvt.f32.s32 %v1527
    %v1529 = vcvt.f32.s32 %v1523
    %v1530 = vshll.u32 %v1529, 16
    %v1531 = vadd.s32 %v1530, %v1528
    %vm1532 = vcmp.eq.s32.totalorder %v244, %v1531
    %v1533 = vsub.f32 %v1507, %v1515
    %v1534 = vadd.f32 %v1191, %v1533
    %v1535 = vcvt.s32.f32 %v1531
    %v1536 = vmul.f32 %v1535, 0.05
    %v1537 = vadd.f32 %v1536, -1.0
    %vm1538 = vcmp.eq.s32.totalorder %v244, 4
    %v1539 = vsel %vm1538, %v1537, %v1196
    %v1540 = vsel %vm1532, 1, 0
    %v1541 = vcvt.s32.f32 %v1540
    %1542 = vmatprep.subr.mxu0 %v511
    %1543 = vmatpush1.msra.mxu0 %v510
    %1544 = vmatprep.subr.mxu0 %v508
    %1545 = vmatpush1.msra.mxu0 %v507
    %1546 = vmatprep.subr.mxu0 %v505
    %1547 = vmatpush1.msra.mxu0 %v504
    %1548 = vmatprep.subr.mxu0 %v502
    %1549 = vmatpush1.msra.mxu0 %v501
    %1550 = vmatprep.subr.mxu0 %v499
    %1551 = vmatpush1.msra.mxu0 %v498
    %1552 = vmatprep.subr.mxu0 %v496
    %1553 = vmatpush1.msra.mxu0 %v495
    %1554 = vmatprep.subr.mxu0 %v493
    %1555 = vmatpush1.msra.mxu0 %v492
    %1556 = vmatprep.subr.mxu0 %v490
    %1557 = vmatpush1.msra.mxu0 %v489
    %1558 = vmatprep.subr.mxu0 %v487
    %1559 = vmatpush1.msra.mxu0 %v486
    %1560 = vmatprep.subr.mxu0 %v484
    %1561 = vmatpush1.msra.mxu0 %v483
    %1562 = vmatprep.subr.mxu0 %v481
    %1563 = vmatpush1.msra.mxu0 %v480
    %1564 = vmatprep.subr.mxu0 %v478
    %1565 = vmatpush1.msra.mxu0 %v477
    %1566 = vmatprep.subr.mxu0 %v475
    %1567 = vmatpush1.msra.mxu0 %v474
    %1568 = vmatprep.subr.mxu0 %v472
    %1569 = vmatpush1.msra.mxu0 %v471
    %1570 = vmatprep.subr.mxu0 %v469
    %1571 = vmatpush1.msra.mxu0 %v468
    %1572 = vmatprep.subr.mxu0 %v466
    %1573 = vmatpush1.msra.mxu0 %v465
    %1574 = vmatprep.subr.mxu0 0.0
    %1575 = vmatpush2.msra.mxu0 0.0
    %1576 = vmatprep.subr.mxu0 0.0
    %1577 = vmatpush2.msra.mxu0 0.0
    %1578 = vmatprep.subr.mxu0 0.0
    %1579 = vmatpush2.msra.mxu0 0.0
    %1580 = vmatprep.subr.mxu0 0.0
    %1581 = vmatpush2.msra.mxu0 0.0
    %1582 = vmatprep.subr.mxu0 0.0
    %1583 = vmatpush2.msra.mxu0 0.0
    %1584 = vmatprep.subr.mxu0 0.0
    %1585 = vmatpush2.msra.mxu0 0.0
    %1586 = vmatprep.subr.mxu0 0.0
    %1587 = vmatpush2.msra.mxu0 0.0
    %1588 = vmatprep.subr.mxu0 0.0
    %1589 = vmatpush2.msra.mxu0 0.0
    %1590 = vmatprep.subr.mxu0 0.0
    %1591 = vmatpush2.msra.mxu0 0.0
    %1592 = vmatprep.subr.mxu0 0.0
    %1593 = vmatpush2.msra.mxu0 0.0
    %1594 = vmatprep.subr.mxu0 0.0
    %1595 = vmatpush2.msra.mxu0 0.0
    %1596 = vmatprep.subr.mxu0 0.0
    %1597 = vmatpush2.msra.mxu0 0.0
    %1598 = vmatprep.subr.mxu0 0.0
    %1599 = vmatpush2.msra.mxu0 0.0
    %1600 = vmatprep.subr.mxu0 0.0
    %1601 = vmatpush2.msra.mxu0 0.0
    %1602 = vmatprep.subr.mxu0 0.0
    %1603 = vmatpush2.msra.mxu0 0.0
    %1604 = vmatprep.subr.mxu0 0.0
    %1605 = vmatpush2.msra.mxu0 0.0
    %1606 = vmatprep.mubr.f32.mxu0 0.0
    %1607 = vmatmul.mubr.f32.gmra.mxu0 %v1541
    %v1608 = vpop.f32.mrf.mxu0
    %v1609 = vadd.f32 0.0, %v1608
    %v1610 = vpop.f32.mrf.mxu0
    %v1611 = vadd.f32 0.0, %v1610
    %1612 = vdwg.mxu0
    %1613 = vmatprep.subr.mxu0 0.0
    %1614 = vmatpush1.msra.mxu0 %v512
    %1615 = vmatprep.subr.mxu0 0.0
    %1616 = vmatpush1.msra.mxu0 %v509
    %1617 = vmatprep.subr.mxu0 0.0
    %1618 = vmatpush1.msra.mxu0 %v506
    %1619 = vmatprep.subr.mxu0 0.0
    %1620 = vmatpush1.msra.mxu0 %v503
    %1621 = vmatprep.subr.mxu0 0.0
    %1622 = vmatpush1.msra.mxu0 %v500
    %1623 = vmatprep.subr.mxu0 0.0
    %1624 = vmatpush1.msra.mxu0 %v497
    %1625 = vmatprep.subr.mxu0 0.0
    %1626 = vmatpush1.msra.mxu0 %v494
    %1627 = vmatprep.subr.mxu0 0.0
    %1628 = vmatpush1.msra.mxu0 %v491
    %1629 = vmatprep.subr.mxu0 0.0
    %1630 = vmatpush1.msra.mxu0 %v488
    %1631 = vmatprep.subr.mxu0 0.0
    %1632 = vmatpush1.msra.mxu0 %v485
    %1633 = vmatprep.subr.mxu0 0.0
    %1634 = vmatpush1.msra.mxu0 %v482
    %1635 = vmatprep.subr.mxu0 0.0
    %1636 = vmatpush1.msra.mxu0 %v479
    %1637 = vmatprep.subr.mxu0 0.0
    %1638 = vmatpush1.msra.mxu0 %v476
    %1639 = vmatprep.subr.mxu0 0.0
    %1640 = vmatpush1.msra.mxu0 %v473
    %1641 = vmatprep.subr.mxu0 0.0
    %1642 = vmatpush1.msra.mxu0 %v470
    %1643 = vmatprep.subr.mxu0 0.0
    %1644 = vmatpush1.msra.mxu0 %v467
    %1645 = vmatprep.subr.mxu0 0.0
    %1646 = vmatpush2.msra.mxu0 0.0
    %1647 = vmatprep.subr.mxu0 0.0
    %1648 = vmatpush2.msra.mxu0 0.0
    %1649 = vmatprep.subr.mxu0 0.0
    %1650 = vmatpush2.msra.mxu0 0.0
    %1651 = vmatprep.subr.mxu0 0.0
    %1652 = vmatpush2.msra.mxu0 0.0
    %1653 = vmatprep.subr.mxu0 0.0
    %1654 = vmatpush2.msra.mxu0 0.0
    %1655 = vmatprep.subr.mxu0 0.0
    %1656 = vmatpush2.msra.mxu0 0.0
    %1657 = vmatprep.subr.mxu0 0.0
    %1658 = vmatpush2.msra.mxu0 0.0
    %1659 = vmatprep.subr.mxu0 0.0
    %1660 = vmatpush2.msra.mxu0 0.0
    %1661 = vmatprep.subr.mxu0 0.0
    %1662 = vmatpush2.msra.mxu0 0.0
    %1663 = vmatprep.subr.mxu0 0.0
    %1664 = vmatpush2.msra.mxu0 0.0
    %1665 = vmatprep.subr.mxu0 0.0
    %1666 = vmatpush2.msra.mxu0 0.0
    %1667 = vmatprep.subr.mxu0 0.0
    %1668 = vmatpush2.msra.mxu0 0.0
    %1669 = vmatprep.subr.mxu0 0.0
    %1670 = vmatpush2.msra.mxu0 0.0
    %1671 = vmatprep.subr.mxu0 0.0
    %1672 = vmatpush2.msra.mxu0 0.0
    %1673 = vmatprep.subr.mxu0 0.0
    %1674 = vmatpush2.msra.mxu0 0.0
    %1675 = vmatprep.subr.mxu0 0.0
    %1676 = vmatpush2.msra.mxu0 0.0
    %1677 = vmatprep.mubr.f32.mxu0 0.0
    %1678 = vmatmul.mubr.f32.gmra.mxu0 %v1541
    %v1679 = vpop.f32.mrf.mxu0
    %v1680 = vadd.f32 0.0, %v1679
    %v1681 = vpop.f32.mrf.mxu0
    %1682 = vdwg.mxu0
    %v1683 = vadd.f32 %v1609, %v1433
    %v1684 = vxor.u32 %v1683, 2147483648
    %v1685 = vmul.f32 %v1684, 1.442695
    %v1686 = vpow.pop %v1685
    %v1687 = vadd.f32 %v1686, 1.0
    %v1688 = vrcp.pop %v1687
    %v1689 = vmul.f32 1.0, %v1688
    %v1690 = vadd.f32 %v1611, %v1502
    %v1691 = vxor.u32 %v1690, 2147483648
    %v1692 = vmul.f32 %v1691, 1.442695
    %v1693 = vpow.pop %v1692
    %v1694 = vadd.f32 %v1693, 1.0
    %v1695 = vrcp.pop %v1694
    %v1696 = vmul.f32 1.0, %v1695
    %v1697 = vmul.f32 %v1689, %v1504
    %v1698 = vadd.f32 %v1680, %v1697
    %v1699 = vtanh.pop %v1698
    %v1700 = vsub.f32 1.0, %v1696
    %v1701 = vmul.f32 %v1700, %v1699
    %v1702 = vmul.f32 %v1696, %v1360
    %v1703 = vadd.f32 %v1701, %v1702
    %v1705 = vsel %vm283, %v1703, 0
    %1707 = vmatprep.subr.mxu0 0.0
    %1708 = vmatpush1.msra.mxu0 0.0
    %1709 = vmatprep.subr.mxu0 0.0
    %1710 = vmatpush1.msra.mxu0 0.0
    %1711 = vmatprep.subr.mxu0 0.0
    %1712 = vmatpush1.msra.mxu0 0.0
    %1713 = vmatprep.subr.mxu0 0.0
    %1714 = vmatpush1.msra.mxu0 0.0
    %1715 = vmatprep.subr.mxu0 0.0
    %1716 = vmatpush1.msra.mxu0 0.0
    %1717 = vmatprep.subr.mxu0 0.0
    %1718 = vmatpush1.msra.mxu0 0.0
    %1719 = vmatprep.subr.mxu0 0.0
    %1720 = vmatpush1.msra.mxu0 0.0
    %1721 = vmatprep.subr.mxu0 0.0
    %1722 = vmatpush1.msra.mxu0 0.0
    %1723 = vmatprep.subr.mxu0 0.0
    %1724 = vmatpush1.msra.mxu0 0.0
    %1725 = vmatprep.subr.mxu0 0.0
    %1726 = vmatpush1.msra.mxu0 0.0
    %1727 = vmatprep.subr.mxu0 0.0
    %1728 = vmatpush1.msra.mxu0 0.0
    %1729 = vmatprep.subr.mxu0 0.0
    %1730 = vmatpush1.msra.mxu0 0.0
    %1731 = vmatprep.subr.mxu0 %v258
    %1732 = vmatpush1.msra.mxu0 %v257
    %1733 = vmatprep.subr.mxu0 %v254
    %1734 = vmatpush1.msra.mxu0 %v253
    %1735 = vmatprep.subr.mxu0 %v250
    %1736 = vmatpush1.msra.mxu0 %v249
    %1737 = vmatprep.subr.mxu0 %v246
    %1738 = vmatpush1.msra.mxu0 %v245
    %1739 = vmatprep.subr.mxu0 0.0
    %1740 = vmatpush2.msra.mxu0 0.0
    %1741 = vmatprep.subr.mxu0 0.0
    %1742 = vmatpush2.msra.mxu0 0.0
    %1743 = vmatprep.subr.mxu0 0.0
    %1744 = vmatpush2.msra.mxu0 0.0
    %1745 = vmatprep.subr.mxu0 0.0
    %1746 = vmatpush2.msra.mxu0 0.0
    %1747 = vmatprep.subr.mxu0 0.0
    %1748 = vmatpush2.msra.mxu0 0.0
    %1749 = vmatprep.subr.mxu0 0.0
    %1750 = vmatpush2.msra.mxu0 0.0
    %1751 = vmatprep.subr.mxu0 0.0
    %1752 = vmatpush2.msra.mxu0 0.0
    %1753 = vmatprep.subr.mxu0 0.0
    %1754 = vmatpush2.msra.mxu0 0.0
    %1755 = vmatprep.subr.mxu0 0.0
    %1756 = vmatpush2.msra.mxu0 0.0
    %1757 = vmatprep.subr.mxu0 0.0
    %1758 = vmatpush2.msra.mxu0 0.0
    %1759 = vmatprep.subr.mxu0 0.0
    %1760 = vmatpush2.msra.mxu0 0.0
    %1761 = vmatprep.subr.mxu0 0.0
    %1762 = vmatpush2.msra.mxu0 0.0
    %1763 = vmatprep.subr.mxu0 0.0
    %1764 = vmatpush2.msra.mxu0 0.0
    %1765 = vmatprep.subr.mxu0 0.0
    %1766 = vmatpush2.msra.mxu0 0.0
    %1767 = vmatprep.subr.mxu0 0.0
    %1768 = vmatpush2.msra.mxu0 0.0
    %1769 = vmatprep.subr.mxu0 0.0
    %1770 = vmatpush2.msra.mxu0 0.0
    %1771 = vmatprep.mubr.f32.mxu0 0.0
    %1772 = vmatmul.mubr.f32.gmra.mxu0 %v1705
    %v1773 = vpop.f32.mrf.mxu0
    %v1774 = vadd.f32 %v266, %v1773
    %v1775 = vpop.f32.mrf.mxu0
    %v1776 = vadd.f32 %v270, %v1775
    %1777 = vdwg.mxu0
    %1778 = vmatprep.subr.mxu0 0.0
    %1779 = vmatpush1.msra.mxu0 0.0
    %1780 = vmatprep.subr.mxu0 0.0
    %1781 = vmatpush1.msra.mxu0 0.0
    %1782 = vmatprep.subr.mxu0 0.0
    %1783 = vmatpush1.msra.mxu0 0.0
    %1784 = vmatprep.subr.mxu0 0.0
    %1785 = vmatpush1.msra.mxu0 0.0
    %1786 = vmatprep.subr.mxu0 0.0
    %1787 = vmatpush1.msra.mxu0 0.0
    %1788 = vmatprep.subr.mxu0 0.0
    %1789 = vmatpush1.msra.mxu0 0.0
    %1790 = vmatprep.subr.mxu0 0.0
    %1791 = vmatpush1.msra.mxu0 0.0
    %1792 = vmatprep.subr.mxu0 0.0
    %1793 = vmatpush1.msra.mxu0 0.0
    %1794 = vmatprep.subr.mxu0 0.0
    %1795 = vmatpush1.msra.mxu0 0.0
    %1796 = vmatprep.subr.mxu0 0.0
    %1797 = vmatpush1.msra.mxu0 0.0
    %1798 = vmatprep.subr.mxu0 0.0
    %1799 = vmatpush1.msra.mxu0 0.0
    %1800 = vmatprep.subr.mxu0 0.0
    %1801 = vmatpush1.msra.mxu0 0.0
    %1802 = vmatprep.subr.mxu0 %v260
    %1803 = vmatpush1.msra.mxu0 %v259
    %1804 = vmatprep.subr.mxu0 %v256
    %1805 = vmatpush1.msra.mxu0 %v255
    %1806 = vmatprep.subr.mxu0 %v252
    %1807 = vmatpush1.msra.mxu0 %v251
    %1808 = vmatprep.subr.mxu0 %v248
    %1809 = vmatpush1.msra.mxu0 %v247
    %1810 = vmatprep.subr.mxu0 0.0
    %1811 = vmatpush2.msra.mxu0 0.0
    %1812 = vmatprep.subr.mxu0 0.0
    %1813 = vmatpush2.msra.mxu0 0.0
    %1814 = vmatprep.subr.mxu0 0.0
    %1815 = vmatpush2.msra.mxu0 0.0
    %1816 = vmatprep.subr.mxu0 0.0
    %1817 = vmatpush2.msra.mxu0 0.0
    %1818 = vmatprep.subr.mxu0 0.0
    %1819 = vmatpush2.msra.mxu0 0.0
    %1820 = vmatprep.subr.mxu0 0.0
    %1821 = vmatpush2.msra.mxu0 0.0
    %1822 = vmatprep.subr.mxu0 0.0
    %1823 = vmatpush2.msra.mxu0 0.0
    %1824 = vmatprep.subr.mxu0 0.0
    %1825 = vmatpush2.msra.mxu0 0.0
    %1826 = vmatprep.subr.mxu0 0.0
    %1827 = vmatpush2.msra.mxu0 0.0
    %1828 = vmatprep.subr.mxu0 0.0
    %1829 = vmatpush2.msra.mxu0 0.0
    %1830 = vmatprep.subr.mxu0 0.0
    %1831 = vmatpush2.msra.mxu0 0.0
    %1832 = vmatprep.subr.mxu0 0.0
    %1833 = vmatpush2.msra.mxu0 0.0
    %1834 = vmatprep.subr.mxu0 0.0
    %1835 = vmatpush2.msra.mxu0 0.0
    %1836 = vmatprep.subr.mxu0 0.0
    %1837 = vmatpush2.msra.mxu0 0.0
    %1838 = vmatprep.subr.mxu0 0.0
    %1839 = vmatpush2.msra.mxu0 0.0
    %1840 = vmatprep.subr.mxu0 0.0
    %1841 = vmatpush2.msra.mxu0 0.0
    %1842 = vmatprep.mubr.f32.mxu0 0.0
    %1843 = vmatmul.mubr.f32.gmra.mxu0 %v1705
    %v1844 = vpop.f32.mrf.mxu0
    %v1845 = vadd.f32 %v274, %v1844
    %v1846 = vpop.f32.mrf.mxu0
    %v1847 = vadd.f32 %v278, %v1846
    %1848 = vdwg.mxu0
    %1849 = vmax.xlane.f32.xlu0 %v1774
    %v1850 = vpop.xlane.xlu0 %1849
    %v1851 = vsub.f32 %v1774, %v1850
    %v1852 = vmul.f32 %v1851, 1.442695
    %v1853 = vpow.pop %v1852
    %1854 = vadd.xlane.f32.xlu0 %v1853
    %v1855 = vpop.xlane.xlu0 %1854
    %v1856 = vlog2.pop %v1855
    %v1857 = vmul.f32 %v1856, 0.6931472
    %v1858 = vadd.f32 %v1857, %v1850
    %vm1859 = vcmp.eq.f32.partialorder %v1774, %v1850
    %v1860 = vsel %vm1859, %v244, 128
    %v1861 = vand.u32 %v1860, 65535
    %v1862 = vshra.s32 %v1860, 16
    %v1863 = vcvt.s32.f32 %v1861
    %v1864 = vcvt.s32.f32 %v1862
    %1865 = vmin.xlane.f32.xlu0 %v1864
    %v1866 = vpop.xlane.xlu0 %1865
    %vm1867 = vcmp.eq.f32.partialorder %v1864, %v1866
    %v1868 = vsel %vm1867, %v1863, inf
    %1869 = vmin.xlane.f32.xlu0 %v1868
    %v1870 = vpop.xlane.xlu0 %1869
    %v1871 = vcvt.f32.s32 %v1870
    %v1872 = vcvt.f32.s32 %v1866
    %v1873 = vshll.u32 %v1872, 16
    %v1874 = vadd.s32 %v1873, %v1871
    %vm1875 = vcmp.eq.s32.totalorder %v244, %v1874
    %v1876 = vsub.f32 %v1850, %v1858
    %v1877 = vadd.f32 %v1534, %v1876
    %v1878 = vcvt.s32.f32 %v1874
    %v1879 = vmul.f32 %v1878, 0.05
    %v1880 = vadd.f32 %v1879, -1.0
    %vm1881 = vcmp.eq.s32.totalorder %v244, 3
    %v1882 = vsel %vm1881, %v1880, %v1539
    %v1883 = vsel %vm1875, 1, 0
    %v1884 = vcvt.s32.f32 %v1883
    %1885 = vmatprep.subr.mxu0 %v511
    %1886 = vmatpush1.msra.mxu0 %v510
    %1887 = vmatprep.subr.mxu0 %v508
    %1888 = vmatpush1.msra.mxu0 %v507
    %1889 = vmatprep.subr.mxu0 %v505
    %1890 = vmatpush1.msra.mxu0 %v504
    %1891 = vmatprep.subr.mxu0 %v502
    %1892 = vmatpush1.msra.mxu0 %v501
    %1893 = vmatprep.subr.mxu0 %v499
    %1894 = vmatpush1.msra.mxu0 %v498
    %1895 = vmatprep.subr.mxu0 %v496
    %1896 = vmatpush1.msra.mxu0 %v495
    %1897 = vmatprep.subr.mxu0 %v493
    %1898 = vmatpush1.msra.mxu0 %v492
    %1899 = vmatprep.subr.mxu0 %v490
    %1900 = vmatpush1.msra.mxu0 %v489
    %1901 = vmatprep.subr.mxu0 %v487
    %1902 = vmatpush1.msra.mxu0 %v486
    %1903 = vmatprep.subr.mxu0 %v484
    %1904 = vmatpush1.msra.mxu0 %v483
    %1905 = vmatprep.subr.mxu0 %v481
    %1906 = vmatpush1.msra.mxu0 %v480
    %1907 = vmatprep.subr.mxu0 %v478
    %1908 = vmatpush1.msra.mxu0 %v477
    %1909 = vmatprep.subr.mxu0 %v475
    %1910 = vmatpush1.msra.mxu0 %v474
    %1911 = vmatprep.subr.mxu0 %v472
    %1912 = vmatpush1.msra.mxu0 %v471
    %1913 = vmatprep.subr.mxu0 %v469
    %1914 = vmatpush1.msra.mxu0 %v468
    %1915 = vmatprep.subr.mxu0 %v466
    %1916 = vmatpush1.msra.mxu0 %v465
    %1917 = vmatprep.subr.mxu0 0.0
    %1918 = vmatpush2.msra.mxu0 0.0
    %1919 = vmatprep.subr.mxu0 0.0
    %1920 = vmatpush2.msra.mxu0 0.0
    %1921 = vmatprep.subr.mxu0 0.0
    %1922 = vmatpush2.msra.mxu0 0.0
    %1923 = vmatprep.subr.mxu0 0.0
    %1924 = vmatpush2.msra.mxu0 0.0
    %1925 = vmatprep.subr.mxu0 0.0
    %1926 = vmatpush2.msra.mxu0 0.0
    %1927 = vmatprep.subr.mxu0 0.0
    %1928 = vmatpush2.msra.mxu0 0.0
    %1929 = vmatprep.subr.mxu0 0.0
    %1930 = vmatpush2.msra.mxu0 0.0
    %1931 = vmatprep.subr.mxu0 0.0
    %1932 = vmatpush2.msra.mxu0 0.0
    %1933 = vmatprep.subr.mxu0 0.0
    %1934 = vmatpush2.msra.mxu0 0.0
    %1935 = vmatprep.subr.mxu0 0.0
    %1936 = vmatpush2.msra.mxu0 0.0
    %1937 = vmatprep.subr.mxu0 0.0
    %1938 = vmatpush2.msra.mxu0 0.0
    %1939 = vmatprep.subr.mxu0 0.0
    %1940 = vmatpush2.msra.mxu0 0.0
    %1941 = vmatprep.subr.mxu0 0.0
    %1942 = vmatpush2.msra.mxu0 0.0
    %1943 = vmatprep.subr.mxu0 0.0
    %1944 = vmatpush2.msra.mxu0 0.0
    %1945 = vmatprep.subr.mxu0 0.0
    %1946 = vmatpush2.msra.mxu0 0.0
    %1947 = vmatprep.subr.mxu0 0.0
    %1948 = vmatpush2.msra.mxu0 0.0
    %1949 = vmatprep.mubr.f32.mxu0 0.0
    %1950 = vmatmul.mubr.f32.gmra.mxu0 %v1884
    %v1951 = vpop.f32.mrf.mxu0
    %v1952 = vadd.f32 0.0, %v1951
    %v1953 = vpop.f32.mrf.mxu0
    %v1954 = vadd.f32 0.0, %v1953
    %1955 = vdwg.mxu0
    %1956 = vmatprep.subr.mxu0 0.0
    %1957 = vmatpush1.msra.mxu0 %v512
    %1958 = vmatprep.subr.mxu0 0.0
    %1959 = vmatpush1.msra.mxu0 %v509
    %1960 = vmatprep.subr.mxu0 0.0
    %1961 = vmatpush1.msra.mxu0 %v506
    %1962 = vmatprep.subr.mxu0 0.0
    %1963 = vmatpush1.msra.mxu0 %v503
    %1964 = vmatprep.subr.mxu0 0.0
    %1965 = vmatpush1.msra.mxu0 %v500
    %1966 = vmatprep.subr.mxu0 0.0
    %1967 = vmatpush1.msra.mxu0 %v497
    %1968 = vmatprep.subr.mxu0 0.0
    %1969 = vmatpush1.msra.mxu0 %v494
    %1970 = vmatprep.subr.mxu0 0.0
    %1971 = vmatpush1.msra.mxu0 %v491
    %1972 = vmatprep.subr.mxu0 0.0
    %1973 = vmatpush1.msra.mxu0 %v488
    %1974 = vmatprep.subr.mxu0 0.0
    %1975 = vmatpush1.msra.mxu0 %v485
    %1976 = vmatprep.subr.mxu0 0.0
    %1977 = vmatpush1.msra.mxu0 %v482
    %1978 = vmatprep.subr.mxu0 0.0
    %1979 = vmatpush1.msra.mxu0 %v479
    %1980 = vmatprep.subr.mxu0 0.0
    %1981 = vmatpush1.msra.mxu0 %v476
    %1982 = vmatprep.subr.mxu0 0.0
    %1983 = vmatpush1.msra.mxu0 %v473
    %1984 = vmatprep.subr.mxu0 0.0
    %1985 = vmatpush1.msra.mxu0 %v470
    %1986 = vmatprep.subr.mxu0 0.0
    %1987 = vmatpush1.msra.mxu0 %v467
    %1988 = vmatprep.subr.mxu0 0.0
    %1989 = vmatpush2.msra.mxu0 0.0
    %1990 = vmatprep.subr.mxu0 0.0
    %1991 = vmatpush2.msra.mxu0 0.0
    %1992 = vmatprep.subr.mxu0 0.0
    %1993 = vmatpush2.msra.mxu0 0.0
    %1994 = vmatprep.subr.mxu0 0.0
    %1995 = vmatpush2.msra.mxu0 0.0
    %1996 = vmatprep.subr.mxu0 0.0
    %1997 = vmatpush2.msra.mxu0 0.0
    %1998 = vmatprep.subr.mxu0 0.0
    %1999 = vmatpush2.msra.mxu0 0.0
    %2000 = vmatprep.subr.mxu0 0.0
    %2001 = vmatpush2.msra.mxu0 0.0
    %2002 = vmatprep.subr.mxu0 0.0
    %2003 = vmatpush2.msra.mxu0 0.0
    %2004 = vmatprep.subr.mxu0 0.0
    %2005 = vmatpush2.msra.mxu0 0.0
    %2006 = vmatprep.subr.mxu0 0.0
    %2007 = vmatpush2.msra.mxu0 0.0
    %2008 = vmatprep.subr.mxu0 0.0
    %2009 = vmatpush2.msra.mxu0 0.0
    %2010 = vmatprep.subr.mxu0 0.0
    %2011 = vmatpush2.msra.mxu0 0.0
    %2012 = vmatprep.subr.mxu0 0.0
    %2013 = vmatpush2.msra.mxu0 0.0
    %2014 = vmatprep.subr.mxu0 0.0
    %2015 = vmatpush2.msra.mxu0 0.0
    %2016 = vmatprep.subr.mxu0 0.0
    %2017 = vmatpush2.msra.mxu0 0.0
    %2018 = vmatprep.subr.mxu0 0.0
    %2019 = vmatpush2.msra.mxu0 0.0
    %2020 = vmatprep.mubr.f32.mxu0 0.0
    %2021 = vmatmul.mubr.f32.gmra.mxu0 %v1884
    %v2022 = vpop.f32.mrf.mxu0
    %v2023 = vadd.f32 0.0, %v2022
    %v2024 = vpop.f32.mrf.mxu0
    %2025 = vdwg.mxu0
    %v2026 = vadd.f32 %v1952, %v1776
    %v2027 = vxor.u32 %v2026, 2147483648
    %v2028 = vmul.f32 %v2027, 1.442695
    %v2029 = vpow.pop %v2028
    %v2030 = vadd.f32 %v2029, 1.0
    %v2031 = vrcp.pop %v2030
    %v2032 = vmul.f32 1.0, %v2031
    %v2033 = vadd.f32 %v1954, %v1845
    %v2034 = vxor.u32 %v2033, 2147483648
    %v2035 = vmul.f32 %v2034, 1.442695
    %v2036 = vpow.pop %v2035
    %v2037 = vadd.f32 %v2036, 1.0
    %v2038 = vrcp.pop %v2037
    %v2039 = vmul.f32 1.0, %v2038
    %v2040 = vmul.f32 %v2032, %v1847
    %v2041 = vadd.f32 %v2023, %v2040
    %v2042 = vtanh.pop %v2041
    %v2043 = vsub.f32 1.0, %v2039
    %v2044 = vmul.f32 %v2043, %v2042
    %v2045 = vmul.f32 %v2039, %v1703
    %v2046 = vadd.f32 %v2044, %v2045
    %v2048 = vsel %vm283, %v2046, 0
    %2050 = vmatprep.subr.mxu0 0.0
    %2051 = vmatpush1.msra.mxu0 0.0
    %2052 = vmatprep.subr.mxu0 0.0
    %2053 = vmatpush1.msra.mxu0 0.0
    %2054 = vmatprep.subr.mxu0 0.0
    %2055 = vmatpush1.msra.mxu0 0.0
    %2056 = vmatprep.subr.mxu0 0.0
    %2057 = vmatpush1.msra.mxu0 0.0
    %2058 = vmatprep.subr.mxu0 0.0
    %2059 = vmatpush1.msra.mxu0 0.0
    %2060 = vmatprep.subr.mxu0 0.0
    %2061 = vmatpush1.msra.mxu0 0.0
    %2062 = vmatprep.subr.mxu0 0.0
    %2063 = vmatpush1.msra.mxu0 0.0
    %2064 = vmatprep.subr.mxu0 0.0
    %2065 = vmatpush1.msra.mxu0 0.0
    %2066 = vmatprep.subr.mxu0 0.0
    %2067 = vmatpush1.msra.mxu0 0.0
    %2068 = vmatprep.subr.mxu0 0.0
    %2069 = vmatpush1.msra.mxu0 0.0
    %2070 = vmatprep.subr.mxu0 0.0
    %2071 = vmatpush1.msra.mxu0 0.0
    %2072 = vmatprep.subr.mxu0 0.0
    %2073 = vmatpush1.msra.mxu0 0.0
    %2074 = vmatprep.subr.mxu0 %v258
    %2075 = vmatpush1.msra.mxu0 %v257
    %2076 = vmatprep.subr.mxu0 %v254
    %2077 = vmatpush1.msra.mxu0 %v253
    %2078 = vmatprep.subr.mxu0 %v250
    %2079 = vmatpush1.msra.mxu0 %v249
    %2080 = vmatprep.subr.mxu0 %v246
    %2081 = vmatpush1.msra.mxu0 %v245
    %2082 = vmatprep.subr.mxu0 0.0
    %2083 = vmatpush2.msra.mxu0 0.0
    %2084 = vmatprep.subr.mxu0 0.0
    %2085 = vmatpush2.msra.mxu0 0.0
    %2086 = vmatprep.subr.mxu0 0.0
    %2087 = vmatpush2.msra.mxu0 0.0
    %2088 = vmatprep.subr.mxu0 0.0
    %2089 = vmatpush2.msra.mxu0 0.0
    %2090 = vmatprep.subr.mxu0 0.0
    %2091 = vmatpush2.msra.mxu0 0.0
    %2092 = vmatprep.subr.mxu0 0.0
    %2093 = vmatpush2.msra.mxu0 0.0
    %2094 = vmatprep.subr.mxu0 0.0
    %2095 = vmatpush2.msra.mxu0 0.0
    %2096 = vmatprep.subr.mxu0 0.0
    %2097 = vmatpush2.msra.mxu0 0.0
    %2098 = vmatprep.subr.mxu0 0.0
    %2099 = vmatpush2.msra.mxu0 0.0
    %2100 = vmatprep.subr.mxu0 0.0
    %2101 = vmatpush2.msra.mxu0 0.0
    %2102 = vmatprep.subr.mxu0 0.0
    %2103 = vmatpush2.msra.mxu0 0.0
    %2104 = vmatprep.subr.mxu0 0.0
    %2105 = vmatpush2.msra.mxu0 0.0
    %2106 = vmatprep.subr.mxu0 0.0
    %2107 = vmatpush2.msra.mxu0 0.0
    %2108 = vmatprep.subr.mxu0 0.0
    %2109 = vmatpush2.msra.mxu0 0.0
    %2110 = vmatprep.subr.mxu0 0.0
    %2111 = vmatpush2.msra.mxu0 0.0
    %2112 = vmatprep.subr.mxu0 0.0
    %2113 = vmatpush2.msra.mxu0 0.0
    %2114 = vmatprep.mubr.f32.mxu0 0.0
    %2115 = vmatmul.mubr.f32.gmra.mxu0 %v2048
    %v2116 = vpop.f32.mrf.mxu0
    %v2117 = vadd.f32 %v266, %v2116
    %v2118 = vpop.f32.mrf.mxu0
    %v2119 = vadd.f32 %v270, %v2118
    %2120 = vdwg.mxu0
    %2121 = vmatprep.subr.mxu0 0.0
    %2122 = vmatpush1.msra.mxu0 0.0
    %2123 = vmatprep.subr.mxu0 0.0
    %2124 = vmatpush1.msra.mxu0 0.0
    %2125 = vmatprep.subr.mxu0 0.0
    %2126 = vmatpush1.msra.mxu0 0.0
    %2127 = vmatprep.subr.mxu0 0.0
    %2128 = vmatpush1.msra.mxu0 0.0
    %2129 = vmatprep.subr.mxu0 0.0
    %2130 = vmatpush1.msra.mxu0 0.0
    %2131 = vmatprep.subr.mxu0 0.0
    %2132 = vmatpush1.msra.mxu0 0.0
    %2133 = vmatprep.subr.mxu0 0.0
    %2134 = vmatpush1.msra.mxu0 0.0
    %2135 = vmatprep.subr.mxu0 0.0
    %2136 = vmatpush1.msra.mxu0 0.0
    %2137 = vmatprep.subr.mxu0 0.0
    %2138 = vmatpush1.msra.mxu0 0.0
    %2139 = vmatprep.subr.mxu0 0.0
    %2140 = vmatpush1.msra.mxu0 0.0
    %2141 = vmatprep.subr.mxu0 0.0
    %2142 = vmatpush1.msra.mxu0 0.0
    %2143 = vmatprep.subr.mxu0 0.0
    %2144 = vmatpush1.msra.mxu0 0.0
    %2145 = vmatprep.subr.mxu0 %v260
    %2146 = vmatpush1.msra.mxu0 %v259
    %2147 = vmatprep.subr.mxu0 %v256
    %2148 = vmatpush1.msra.mxu0 %v255
    %2149 = vmatprep.subr.mxu0 %v252
    %2150 = vmatpush1.msra.mxu0 %v251
    %2151 = vmatprep.subr.mxu0 %v248
    %2152 = vmatpush1.msra.mxu0 %v247
    %2153 = vmatprep.subr.mxu0 0.0
    %2154 = vmatpush2.msra.mxu0 0.0
    %2155 = vmatprep.subr.mxu0 0.0
    %2156 = vmatpush2.msra.mxu0 0.0
    %2157 = vmatprep.subr.mxu0 0.0
    %2158 = vmatpush2.msra.mxu0 0.0
    %2159 = vmatprep.subr.mxu0 0.0
    %2160 = vmatpush2.msra.mxu0 0.0
    %2161 = vmatprep.subr.mxu0 0.0
    %2162 = vmatpush2.msra.mxu0 0.0
    %2163 = vmatprep.subr.mxu0 0.0
    %2164 = vmatpush2.msra.mxu0 0.0
    %2165 = vmatprep.subr.mxu0 0.0
    %2166 = vmatpush2.msra.mxu0 0.0
    %2167 = vmatprep.subr.mxu0 0.0
    %2168 = vmatpush2.msra.mxu0 0.0
    %2169 = vmatprep.subr.mxu0 0.0
    %2170 = vmatpush2.msra.mxu0 0.0
    %2171 = vmatprep.subr.mxu0 0.0
    %2172 = vmatpush2.msra.mxu0 0.0
    %2173 = vmatprep.subr.mxu0 0.0
    %2174 = vmatpush2.msra.mxu0 0.0
    %2175 = vmatprep.subr.mxu0 0.0
    %2176 = vmatpush2.msra.mxu0 0.0
    %2177 = vmatprep.subr.mxu0 0.0
    %2178 = vmatpush2.msra.mxu0 0.0
    %2179 = vmatprep.subr.mxu0 0.0
    %2180 = vmatpush2.msra.mxu0 0.0
    %2181 = vmatprep.subr.mxu0 0.0
    %2182 = vmatpush2.msra.mxu0 0.0
    %2183 = vmatprep.subr.mxu0 0.0
    %2184 = vmatpush2.msra.mxu0 0.0
    %2185 = vmatprep.mubr.f32.mxu0 0.0
    %2186 = vmatmul.mubr.f32.gmra.mxu0 %v2048
    %v2187 = vpop.f32.mrf.mxu0
    %v2188 = vadd.f32 %v274, %v2187
    %v2189 = vpop.f32.mrf.mxu0
    %v2190 = vadd.f32 %v278, %v2189
    %2191 = vdwg.mxu0
    %2192 = vmax.xlane.f32.xlu0 %v2117
    %v2193 = vpop.xlane.xlu0 %2192
    %v2194 = vsub.f32 %v2117, %v2193
    %v2195 = vmul.f32 %v2194, 1.442695
    %v2196 = vpow.pop %v2195
    %2197 = vadd.xlane.f32.xlu0 %v2196
    %v2198 = vpop.xlane.xlu0 %2197
    %v2199 = vlog2.pop %v2198
    %v2200 = vmul.f32 %v2199, 0.6931472
    %v2201 = vadd.f32 %v2200, %v2193
    %vm2202 = vcmp.eq.f32.partialorder %v2117, %v2193
    %v2203 = vsel %vm2202, %v244, 128
    %v2204 = vand.u32 %v2203, 65535
    %v2205 = vshra.s32 %v2203, 16
    %v2206 = vcvt.s32.f32 %v2204
    %v2207 = vcvt.s32.f32 %v2205
    %2208 = vmin.xlane.f32.xlu0 %v2207
    %v2209 = vpop.xlane.xlu0 %2208
    %vm2210 = vcmp.eq.f32.partialorder %v2207, %v2209
    %v2211 = vsel %vm2210, %v2206, inf
    %2212 = vmin.xlane.f32.xlu0 %v2211
    %v2213 = vpop.xlane.xlu0 %2212
    %v2214 = vcvt.f32.s32 %v2213
    %v2215 = vcvt.f32.s32 %v2209
    %v2216 = vshll.u32 %v2215, 16
    %v2217 = vadd.s32 %v2216, %v2214
    %vm2218 = vcmp.eq.s32.totalorder %v244, %v2217
    %v2219 = vsub.f32 %v2193, %v2201
    %v2220 = vadd.f32 %v1877, %v2219
    %v2221 = vcvt.s32.f32 %v2217
    %v2222 = vmul.f32 %v2221, 0.05
    %v2223 = vadd.f32 %v2222, -1.0
    %vm2224 = vcmp.eq.s32.totalorder %v244, 2
    %v2225 = vsel %vm2224, %v2223, %v1882
    %v2226 = vsel %vm2218, 1, 0
    %v2227 = vcvt.s32.f32 %v2226
    %2228 = vmatprep.subr.mxu0 %v511
    %2229 = vmatpush1.msra.mxu0 %v510
    %2230 = vmatprep.subr.mxu0 %v508
    %2231 = vmatpush1.msra.mxu0 %v507
    %2232 = vmatprep.subr.mxu0 %v505
    %2233 = vmatpush1.msra.mxu0 %v504
    %2234 = vmatprep.subr.mxu0 %v502
    %2235 = vmatpush1.msra.mxu0 %v501
    %2236 = vmatprep.subr.mxu0 %v499
    %2237 = vmatpush1.msra.mxu0 %v498
    %2238 = vmatprep.subr.mxu0 %v496
    %2239 = vmatpush1.msra.mxu0 %v495
    %2240 = vmatprep.subr.mxu0 %v493
    %2241 = vmatpush1.msra.mxu0 %v492
    %2242 = vmatprep.subr.mxu0 %v490
    %2243 = vmatpush1.msra.mxu0 %v489
    %2244 = vmatprep.subr.mxu0 %v487
    %2245 = vmatpush1.msra.mxu0 %v486
    %2246 = vmatprep.subr.mxu0 %v484
    %2247 = vmatpush1.msra.mxu0 %v483
    %2248 = vmatprep.subr.mxu0 %v481
    %2249 = vmatpush1.msra.mxu0 %v480
    %2250 = vmatprep.subr.mxu0 %v478
    %2251 = vmatpush1.msra.mxu0 %v477
    %2252 = vmatprep.subr.mxu0 %v475
    %2253 = vmatpush1.msra.mxu0 %v474
    %2254 = vmatprep.subr.mxu0 %v472
    %2255 = vmatpush1.msra.mxu0 %v471
    %2256 = vmatprep.subr.mxu0 %v469
    %2257 = vmatpush1.msra.mxu0 %v468
    %2258 = vmatprep.subr.mxu0 %v466
    %2259 = vmatpush1.msra.mxu0 %v465
    %2260 = vmatprep.subr.mxu0 0.0
    %2261 = vmatpush2.msra.mxu0 0.0
    %2262 = vmatprep.subr.mxu0 0.0
    %2263 = vmatpush2.msra.mxu0 0.0
    %2264 = vmatprep.subr.mxu0 0.0
    %2265 = vmatpush2.msra.mxu0 0.0
    %2266 = vmatprep.subr.mxu0 0.0
    %2267 = vmatpush2.msra.mxu0 0.0
    %2268 = vmatprep.subr.mxu0 0.0
    %2269 = vmatpush2.msra.mxu0 0.0
    %2270 = vmatprep.subr.mxu0 0.0
    %2271 = vmatpush2.msra.mxu0 0.0
    %2272 = vmatprep.subr.mxu0 0.0
    %2273 = vmatpush2.msra.mxu0 0.0
    %2274 = vmatprep.subr.mxu0 0.0
    %2275 = vmatpush2.msra.mxu0 0.0
    %2276 = vmatprep.subr.mxu0 0.0
    %2277 = vmatpush2.msra.mxu0 0.0
    %2278 = vmatprep.subr.mxu0 0.0
    %2279 = vmatpush2.msra.mxu0 0.0
    %2280 = vmatprep.subr.mxu0 0.0
    %2281 = vmatpush2.msra.mxu0 0.0
    %2282 = vmatprep.subr.mxu0 0.0
    %2283 = vmatpush2.msra.mxu0 0.0
    %2284 = vmatprep.subr.mxu0 0.0
    %2285 = vmatpush2.msra.mxu0 0.0
    %2286 = vmatprep.subr.mxu0 0.0
    %2287 = vmatpush2.msra.mxu0 0.0
    %2288 = vmatprep.subr.mxu0 0.0
    %2289 = vmatpush2.msra.mxu0 0.0
    %2290 = vmatprep.subr.mxu0 0.0
    %2291 = vmatpush2.msra.mxu0 0.0
    %2292 = vmatprep.mubr.f32.mxu0 0.0
    %2293 = vmatmul.mubr.f32.gmra.mxu0 %v2227
    %v2294 = vpop.f32.mrf.mxu0
    %v2295 = vadd.f32 0.0, %v2294
    %v2296 = vpop.f32.mrf.mxu0
    %v2297 = vadd.f32 0.0, %v2296
    %2298 = vdwg.mxu0
    %2299 = vmatprep.subr.mxu0 0.0
    %2300 = vmatpush1.msra.mxu0 %v512
    %2301 = vmatprep.subr.mxu0 0.0
    %2302 = vmatpush1.msra.mxu0 %v509
    %2303 = vmatprep.subr.mxu0 0.0
    %2304 = vmatpush1.msra.mxu0 %v506
    %2305 = vmatprep.subr.mxu0 0.0
    %2306 = vmatpush1.msra.mxu0 %v503
    %2307 = vmatprep.subr.mxu0 0.0
    %2308 = vmatpush1.msra.mxu0 %v500
    %2309 = vmatprep.subr.mxu0 0.0
    %2310 = vmatpush1.msra.mxu0 %v497
    %2311 = vmatprep.subr.mxu0 0.0
    %2312 = vmatpush1.msra.mxu0 %v494
    %2313 = vmatprep.subr.mxu0 0.0
    %2314 = vmatpush1.msra.mxu0 %v491
    %2315 = vmatprep.subr.mxu0 0.0
    %2316 = vmatpush1.msra.mxu0 %v488
    %2317 = vmatprep.subr.mxu0 0.0
    %2318 = vmatpush1.msra.mxu0 %v485
    %2319 = vmatprep.subr.mxu0 0.0
    %2320 = vmatpush1.msra.mxu0 %v482
    %2321 = vmatprep.subr.mxu0 0.0
    %2322 = vmatpush1.msra.mxu0 %v479
    %2323 = vmatprep.subr.mxu0 0.0
    %2324 = vmatpush1.msra.mxu0 %v476
    %2325 = vmatprep.subr.mxu0 0.0
    %2326 = vmatpush1.msra.mxu0 %v473
    %2327 = vmatprep.subr.mxu0 0.0
    %2328 = vmatpush1.msra.mxu0 %v470
    %2329 = vmatprep.subr.mxu0 0.0
    %2330 = vmatpush1.msra.mxu0 %v467
    %2331 = vmatprep.subr.mxu0 0.0
    %2332 = vmatpush2.msra.mxu0 0.0
    %2333 = vmatprep.subr.mxu0 0.0
    %2334 = vmatpush2.msra.mxu0 0.0
    %2335 = vmatprep.subr.mxu0 0.0
    %2336 = vmatpush2.msra.mxu0 0.0
    %2337 = vmatprep.subr.mxu0 0.0
    %2338 = vmatpush2.msra.mxu0 0.0
    %2339 = vmatprep.subr.mxu0 0.0
    %2340 = vmatpush2.msra.mxu0 0.0
    %2341 = vmatprep.subr.mxu0 0.0
    %2342 = vmatpush2.msra.mxu0 0.0
    %2343 = vmatprep.subr.mxu0 0.0
    %2344 = vmatpush2.msra.mxu0 0.0
    %2345 = vmatprep.subr.mxu0 0.0
    %2346 = vmatpush2.msra.mxu0 0.0
    %2347 = vmatprep.subr.mxu0 0.0
    %2348 = vmatpush2.msra.mxu0 0.0
    %2349 = vmatprep.subr.mxu0 0.0
    %2350 = vmatpush2.msra.mxu0 0.0
    %2351 = vmatprep.subr.mxu0 0.0
    %2352 = vmatpush2.msra.mxu0 0.0
    %2353 = vmatprep.subr.mxu0 0.0
    %2354 = vmatpush2.msra.mxu0 0.0
    %2355 = vmatprep.subr.mxu0 0.0
    %2356 = vmatpush2.msra.mxu0 0.0
    %2357 = vmatprep.subr.mxu0 0.0
    %2358 = vmatpush2.msra.mxu0 0.0
    %2359 = vmatprep.subr.mxu0 0.0
    %2360 = vmatpush2.msra.mxu0 0.0
    %2361 = vmatprep.subr.mxu0 0.0
    %2362 = vmatpush2.msra.mxu0 0.0
    %2363 = vmatprep.mubr.f32.mxu0 0.0
    %2364 = vmatmul.mubr.f32.gmra.mxu0 %v2227
    %v2365 = vpop.f32.mrf.mxu0
    %v2366 = vadd.f32 0.0, %v2365
    %v2367 = vpop.f32.mrf.mxu0
    %2368 = vdwg.mxu0
    %v2369 = vadd.f32 %v2295, %v2119
    %v2370 = vxor.u32 %v2369, 2147483648
    %v2371 = vmul.f32 %v2370, 1.442695
    %v2372 = vpow.pop %v2371
    %v2373 = vadd.f32 %v2372, 1.0
    %v2374 = vrcp.pop %v2373
    %v2375 = vmul.f32 1.0, %v2374
    %v2376 = vadd.f32 %v2297, %v2188
    %v2377 = vxor.u32 %v2376, 2147483648
    %v2378 = vmul.f32 %v2377, 1.442695
    %v2379 = vpow.pop %v2378
    %v2380 = vadd.f32 %v2379, 1.0
    %v2381 = vrcp.pop %v2380
    %v2382 = vmul.f32 1.0, %v2381
    %v2383 = vmul.f32 %v2375, %v2190
    %v2384 = vadd.f32 %v2366, %v2383
    %v2385 = vtanh.pop %v2384
    %v2386 = vsub.f32 1.0, %v2382
    %v2387 = vmul.f32 %v2386, %v2385
    %v2388 = vmul.f32 %v2382, %v2046
    %v2389 = vadd.f32 %v2387, %v2388
    %v2391 = vsel %vm283, %v2389, 0
    %2393 = vmatprep.subr.mxu0 0.0
    %2394 = vmatpush1.msra.mxu0 0.0
    %2395 = vmatprep.subr.mxu0 0.0
    %2396 = vmatpush1.msra.mxu0 0.0
    %2397 = vmatprep.subr.mxu0 0.0
    %2398 = vmatpush1.msra.mxu0 0.0
    %2399 = vmatprep.subr.mxu0 0.0
    %2400 = vmatpush1.msra.mxu0 0.0
    %2401 = vmatprep.subr.mxu0 0.0
    %2402 = vmatpush1.msra.mxu0 0.0
    %2403 = vmatprep.subr.mxu0 0.0
    %2404 = vmatpush1.msra.mxu0 0.0
    %2405 = vmatprep.subr.mxu0 0.0
    %2406 = vmatpush1.msra.mxu0 0.0
    %2407 = vmatprep.subr.mxu0 0.0
    %2408 = vmatpush1.msra.mxu0 0.0
    %2409 = vmatprep.subr.mxu0 0.0
    %2410 = vmatpush1.msra.mxu0 0.0
    %2411 = vmatprep.subr.mxu0 0.0
    %2412 = vmatpush1.msra.mxu0 0.0
    %2413 = vmatprep.subr.mxu0 0.0
    %2414 = vmatpush1.msra.mxu0 0.0
    %2415 = vmatprep.subr.mxu0 0.0
    %2416 = vmatpush1.msra.mxu0 0.0
    %2417 = vmatprep.subr.mxu0 %v258
    %2418 = vmatpush1.msra.mxu0 %v257
    %2419 = vmatprep.subr.mxu0 %v254
    %2420 = vmatpush1.msra.mxu0 %v253
    %2421 = vmatprep.subr.mxu0 %v250
    %2422 = vmatpush1.msra.mxu0 %v249
    %2423 = vmatprep.subr.mxu0 %v246
    %2424 = vmatpush1.msra.mxu0 %v245
    %2425 = vmatprep.subr.mxu0 0.0
    %2426 = vmatpush2.msra.mxu0 0.0
    %2427 = vmatprep.subr.mxu0 0.0
    %2428 = vmatpush2.msra.mxu0 0.0
    %2429 = vmatprep.subr.mxu0 0.0
    %2430 = vmatpush2.msra.mxu0 0.0
    %2431 = vmatprep.subr.mxu0 0.0
    %2432 = vmatpush2.msra.mxu0 0.0
    %2433 = vmatprep.subr.mxu0 0.0
    %2434 = vmatpush2.msra.mxu0 0.0
    %2435 = vmatprep.subr.mxu0 0.0
    %2436 = vmatpush2.msra.mxu0 0.0
    %2437 = vmatprep.subr.mxu0 0.0
    %2438 = vmatpush2.msra.mxu0 0.0
    %2439 = vmatprep.subr.mxu0 0.0
    %2440 = vmatpush2.msra.mxu0 0.0
    %2441 = vmatprep.subr.mxu0 0.0
    %2442 = vmatpush2.msra.mxu0 0.0
    %2443 = vmatprep.subr.mxu0 0.0
    %2444 = vmatpush2.msra.mxu0 0.0
    %2445 = vmatprep.subr.mxu0 0.0
    %2446 = vmatpush2.msra.mxu0 0.0
    %2447 = vmatprep.subr.mxu0 0.0
    %2448 = vmatpush2.msra.mxu0 0.0
    %2449 = vmatprep.subr.mxu0 0.0
    %2450 = vmatpush2.msra.mxu0 0.0
    %2451 = vmatprep.subr.mxu0 0.0
    %2452 = vmatpush2.msra.mxu0 0.0
    %2453 = vmatprep.subr.mxu0 0.0
    %2454 = vmatpush2.msra.mxu0 0.0
    %2455 = vmatprep.subr.mxu0 0.0
    %2456 = vmatpush2.msra.mxu0 0.0
    %2457 = vmatprep.mubr.f32.mxu0 0.0
    %2458 = vmatmul.mubr.f32.gmra.mxu0 %v2391
    %v2459 = vpop.f32.mrf.mxu0
    %v2460 = vadd.f32 %v266, %v2459
    %v2461 = vpop.f32.mrf.mxu0
    %v2462 = vadd.f32 %v270, %v2461
    %2463 = vdwg.mxu0
    %2464 = vmatprep.subr.mxu0 0.0
    %2465 = vmatpush1.msra.mxu0 0.0
    %2466 = vmatprep.subr.mxu0 0.0
    %2467 = vmatpush1.msra.mxu0 0.0
    %2468 = vmatprep.subr.mxu0 0.0
    %2469 = vmatpush1.msra.mxu0 0.0
    %2470 = vmatprep.subr.mxu0 0.0
    %2471 = vmatpush1.msra.mxu0 0.0
    %2472 = vmatprep.subr.mxu0 0.0
    %2473 = vmatpush1.msra.mxu0 0.0
    %2474 = vmatprep.subr.mxu0 0.0
    %2475 = vmatpush1.msra.mxu0 0.0
    %2476 = vmatprep.subr.mxu0 0.0
    %2477 = vmatpush1.msra.mxu0 0.0
    %2478 = vmatprep.subr.mxu0 0.0
    %2479 = vmatpush1.msra.mxu0 0.0
    %2480 = vmatprep.subr.mxu0 0.0
    %2481 = vmatpush1.msra.mxu0 0.0
    %2482 = vmatprep.subr.mxu0 0.0
    %2483 = vmatpush1.msra.mxu0 0.0
    %2484 = vmatprep.subr.mxu0 0.0
    %2485 = vmatpush1.msra.mxu0 0.0
    %2486 = vmatprep.subr.mxu0 0.0
    %2487 = vmatpush1.msra.mxu0 0.0
    %2488 = vmatprep.subr.mxu0 %v260
    %2489 = vmatpush1.msra.mxu0 %v259
    %2490 = vmatprep.subr.mxu0 %v256
    %2491 = vmatpush1.msra.mxu0 %v255
    %2492 = vmatprep.subr.mxu0 %v252
    %2493 = vmatpush1.msra.mxu0 %v251
    %2494 = vmatprep.subr.mxu0 %v248
    %2495 = vmatpush1.msra.mxu0 %v247
    %2496 = vmatprep.subr.mxu0 0.0
    %2497 = vmatpush2.msra.mxu0 0.0
    %2498 = vmatprep.subr.mxu0 0.0
    %2499 = vmatpush2.msra.mxu0 0.0
    %2500 = vmatprep.subr.mxu0 0.0
    %2501 = vmatpush2.msra.mxu0 0.0
    %2502 = vmatprep.subr.mxu0 0.0
    %2503 = vmatpush2.msra.mxu0 0.0
    %2504 = vmatprep.subr.mxu0 0.0
    %2505 = vmatpush2.msra.mxu0 0.0
    %2506 = vmatprep.subr.mxu0 0.0
    %2507 = vmatpush2.msra.mxu0 0.0
    %2508 = vmatprep.subr.mxu0 0.0
    %2509 = vmatpush2.msra.mxu0 0.0
    %2510 = vmatprep.subr.mxu0 0.0
    %2511 = vmatpush2.msra.mxu0 0.0
    %2512 = vmatprep.subr.mxu0 0.0
    %2513 = vmatpush2.msra.mxu0 0.0
    %2514 = vmatprep.subr.mxu0 0.0
    %2515 = vmatpush2.msra.mxu0 0.0
    %2516 = vmatprep.subr.mxu0 0.0
    %2517 = vmatpush2.msra.mxu0 0.0
    %2518 = vmatprep.subr.mxu0 0.0
    %2519 = vmatpush2.msra.mxu0 0.0
    %2520 = vmatprep.subr.mxu0 0.0
    %2521 = vmatpush2.msra.mxu0 0.0
    %2522 = vmatprep.subr.mxu0 0.0
    %2523 = vmatpush2.msra.mxu0 0.0
    %2524 = vmatprep.subr.mxu0 0.0
    %2525 = vmatpush2.msra.mxu0 0.0
    %2526 = vmatprep.subr.mxu0 0.0
    %2527 = vmatpush2.msra.mxu0 0.0
    %2528 = vmatprep.mubr.f32.mxu0 0.0
    %2529 = vmatmul.mubr.f32.gmra.mxu0 %v2391
    %v2530 = vpop.f32.mrf.mxu0
    %v2531 = vadd.f32 %v274, %v2530
    %v2532 = vpop.f32.mrf.mxu0
    %v2533 = vadd.f32 %v278, %v2532
    %2534 = vdwg.mxu0
    %2535 = vmax.xlane.f32.xlu0 %v2460
    %v2536 = vpop.xlane.xlu0 %2535
    %v2537 = vsub.f32 %v2460, %v2536
    %v2538 = vmul.f32 %v2537, 1.442695
    %v2539 = vpow.pop %v2538
    %2540 = vadd.xlane.f32.xlu0 %v2539
    %v2541 = vpop.xlane.xlu0 %2540
    %v2542 = vlog2.pop %v2541
    %v2543 = vmul.f32 %v2542, 0.6931472
    %v2544 = vadd.f32 %v2543, %v2536
    %vm2545 = vcmp.eq.f32.partialorder %v2460, %v2536
    %v2546 = vsel %vm2545, %v244, 128
    %v2547 = vand.u32 %v2546, 65535
    %v2548 = vshra.s32 %v2546, 16
    %v2549 = vcvt.s32.f32 %v2547
    %v2550 = vcvt.s32.f32 %v2548
    %2551 = vmin.xlane.f32.xlu0 %v2550
    %v2552 = vpop.xlane.xlu0 %2551
    %vm2553 = vcmp.eq.f32.partialorder %v2550, %v2552
    %v2554 = vsel %vm2553, %v2549, inf
    %2555 = vmin.xlane.f32.xlu0 %v2554
    %v2556 = vpop.xlane.xlu0 %2555
    %v2557 = vcvt.f32.s32 %v2556
    %v2558 = vcvt.f32.s32 %v2552
    %v2559 = vshll.u32 %v2558, 16
    %v2560 = vadd.s32 %v2559, %v2557
    %vm2561 = vcmp.eq.s32.totalorder %v244, %v2560
    %v2562 = vsub.f32 %v2536, %v2544
    %v2563 = vadd.f32 %v2220, %v2562
    %v2564 = vcvt.s32.f32 %v2560
    %v2565 = vmul.f32 %v2564, 0.05
    %v2566 = vadd.f32 %v2565, -1.0
    %vm2567 = vcmp.eq.s32.totalorder %v244, 1
    %v2568 = vsel %vm2567, %v2566, %v2225
    %v2569 = vsel %vm2561, 1, 0
    %v2570 = vcvt.s32.f32 %v2569
    %2571 = vmatprep.subr.mxu0 %v511
    %2572 = vmatpush1.msra.mxu0 %v510
    %2573 = vmatprep.subr.mxu0 %v508
    %2574 = vmatpush1.msra.mxu0 %v507
    %2575 = vmatprep.subr.mxu0 %v505
    %2576 = vmatpush1.msra.mxu0 %v504
    %2577 = vmatprep.subr.mxu0 %v502
    %2578 = vmatpush1.msra.mxu0 %v501
    %2579 = vmatprep.subr.mxu0 %v499
    %2580 = vmatpush1.msra.mxu0 %v498
    %2581 = vmatprep.subr.mxu0 %v496
    %2582 = vmatpush1.msra.mxu0 %v495
    %2583 = vmatprep.subr.mxu0 %v493
    %2584 = vmatpush1.msra.mxu0 %v492
    %2585 = vmatprep.subr.mxu0 %v490
    %2586 = vmatpush1.msra.mxu0 %v489
    %2587 = vmatprep.subr.mxu0 %v487
    %2588 = vmatpush1.msra.mxu0 %v486
    %2589 = vmatprep.subr.mxu0 %v484
    %2590 = vmatpush1.msra.mxu0 %v483
    %2591 = vmatprep.subr.mxu0 %v481
    %2592 = vmatpush1.msra.mxu0 %v480
    %2593 = vmatprep.subr.mxu0 %v478
    %2594 = vmatpush1.msra.mxu0 %v477
    %2595 = vmatprep.subr.mxu0 %v475
    %2596 = vmatpush1.msra.mxu0 %v474
    %2597 = vmatprep.subr.mxu0 %v472
    %2598 = vmatpush1.msra.mxu0 %v471
    %2599 = vmatprep.subr.mxu0 %v469
    %2600 = vmatpush1.msra.mxu0 %v468
    %2601 = vmatprep.subr.mxu0 %v466
    %2602 = vmatpush1.msra.mxu0 %v465
    %2603 = vmatprep.subr.mxu0 0.0
    %2604 = vmatpush2.msra.mxu0 0.0
    %2605 = vmatprep.subr.mxu0 0.0
    %2606 = vmatpush2.msra.mxu0 0.0
    %2607 = vmatprep.subr.mxu0 0.0
    %2608 = vmatpush2.msra.mxu0 0.0
    %2609 = vmatprep.subr.mxu0 0.0
    %2610 = vmatpush2.msra.mxu0 0.0
    %2611 = vmatprep.subr.mxu0 0.0
    %2612 = vmatpush2.msra.mxu0 0.0
    %2613 = vmatprep.subr.mxu0 0.0
    %2614 = vmatpush2.msra.mxu0 0.0
    %2615 = vmatprep.subr.mxu0 0.0
    %2616 = vmatpush2.msra.mxu0 0.0
    %2617 = vmatprep.subr.mxu0 0.0
    %2618 = vmatpush2.msra.mxu0 0.0
    %2619 = vmatprep.subr.mxu0 0.0
    %2620 = vmatpush2.msra.mxu0 0.0
    %2621 = vmatprep.subr.mxu0 0.0
    %2622 = vmatpush2.msra.mxu0 0.0
    %2623 = vmatprep.subr.mxu0 0.0
    %2624 = vmatpush2.msra.mxu0 0.0
    %2625 = vmatprep.subr.mxu0 0.0
    %2626 = vmatpush2.msra.mxu0 0.0
    %2627 = vmatprep.subr.mxu0 0.0
    %2628 = vmatpush2.msra.mxu0 0.0
    %2629 = vmatprep.subr.mxu0 0.0
    %2630 = vmatpush2.msra.mxu0 0.0
    %2631 = vmatprep.subr.mxu0 0.0
    %2632 = vmatpush2.msra.mxu0 0.0
    %2633 = vmatprep.subr.mxu0 0.0
    %2634 = vmatpush2.msra.mxu0 0.0
    %2635 = vmatprep.mubr.f32.mxu0 0.0
    %2636 = vmatmul.mubr.f32.gmra.mxu0 %v2570
    %v2637 = vpop.f32.mrf.mxu0
    %v2638 = vadd.f32 0.0, %v2637
    %v2639 = vpop.f32.mrf.mxu0
    %v2640 = vadd.f32 0.0, %v2639
    %2641 = vdwg.mxu0
    %2642 = vmatprep.subr.mxu0 0.0
    %2643 = vmatpush1.msra.mxu0 %v512
    %2644 = vmatprep.subr.mxu0 0.0
    %2645 = vmatpush1.msra.mxu0 %v509
    %2646 = vmatprep.subr.mxu0 0.0
    %2647 = vmatpush1.msra.mxu0 %v506
    %2648 = vmatprep.subr.mxu0 0.0
    %2649 = vmatpush1.msra.mxu0 %v503
    %2650 = vmatprep.subr.mxu0 0.0
    %2651 = vmatpush1.msra.mxu0 %v500
    %2652 = vmatprep.subr.mxu0 0.0
    %2653 = vmatpush1.msra.mxu0 %v497
    %2654 = vmatprep.subr.mxu0 0.0
    %2655 = vmatpush1.msra.mxu0 %v494
    %2656 = vmatprep.subr.mxu0 0.0
    %2657 = vmatpush1.msra.mxu0 %v491
    %2658 = vmatprep.subr.mxu0 0.0
    %2659 = vmatpush1.msra.mxu0 %v488
    %2660 = vmatprep.subr.mxu0 0.0
    %2661 = vmatpush1.msra.mxu0 %v485
    %2662 = vmatprep.subr.mxu0 0.0
    %2663 = vmatpush1.msra.mxu0 %v482
    %2664 = vmatprep.subr.mxu0 0.0
    %2665 = vmatpush1.msra.mxu0 %v479
    %2666 = vmatprep.subr.mxu0 0.0
    %2667 = vmatpush1.msra.mxu0 %v476
    %2668 = vmatprep.subr.mxu0 0.0
    %2669 = vmatpush1.msra.mxu0 %v473
    %2670 = vmatprep.subr.mxu0 0.0
    %2671 = vmatpush1.msra.mxu0 %v470
    %2672 = vmatprep.subr.mxu0 0.0
    %2673 = vmatpush1.msra.mxu0 %v467
    %2674 = vmatprep.subr.mxu0 0.0
    %2675 = vmatpush2.msra.mxu0 0.0
    %2676 = vmatprep.subr.mxu0 0.0
    %2677 = vmatpush2.msra.mxu0 0.0
    %2678 = vmatprep.subr.mxu0 0.0
    %2679 = vmatpush2.msra.mxu0 0.0
    %2680 = vmatprep.subr.mxu0 0.0
    %2681 = vmatpush2.msra.mxu0 0.0
    %2682 = vmatprep.subr.mxu0 0.0
    %2683 = vmatpush2.msra.mxu0 0.0
    %2684 = vmatprep.subr.mxu0 0.0
    %2685 = vmatpush2.msra.mxu0 0.0
    %2686 = vmatprep.subr.mxu0 0.0
    %2687 = vmatpush2.msra.mxu0 0.0
    %2688 = vmatprep.subr.mxu0 0.0
    %2689 = vmatpush2.msra.mxu0 0.0
    %2690 = vmatprep.subr.mxu0 0.0
    %2691 = vmatpush2.msra.mxu0 0.0
    %2692 = vmatprep.subr.mxu0 0.0
    %2693 = vmatpush2.msra.mxu0 0.0
    %2694 = vmatprep.subr.mxu0 0.0
    %2695 = vmatpush2.msra.mxu0 0.0
    %2696 = vmatprep.subr.mxu0 0.0
    %2697 = vmatpush2.msra.mxu0 0.0
    %2698 = vmatprep.subr.mxu0 0.0
    %2699 = vmatpush2.msra.mxu0 0.0
    %2700 = vmatprep.subr.mxu0 0.0
    %2701 = vmatpush2.msra.mxu0 0.0
    %2702 = vmatprep.subr.mxu0 0.0
    %2703 = vmatpush2.msra.mxu0 0.0
    %2704 = vmatprep.subr.mxu0 0.0
    %2705 = vmatpush2.msra.mxu0 0.0
    %2706 = vmatprep.mubr.f32.mxu0 0.0
    %2707 = vmatmul.mubr.f32.gmra.mxu0 %v2570
    %v2708 = vpop.f32.mrf.mxu0
    %v2709 = vadd.f32 0.0, %v2708
    %v2710 = vpop.f32.mrf.mxu0
    %2711 = vdwg.mxu0
    %v2712 = vadd.f32 %v2638, %v2462
    %v2713 = vxor.u32 %v2712, 2147483648
    %v2714 = vmul.f32 %v2713, 1.442695
    %v2715 = vpow.pop %v2714
    %v2716 = vadd.f32 %v2715, 1.0
    %v2717 = vrcp.pop %v2716
    %v2718 = vmul.f32 1.0, %v2717
    %v2719 = vadd.f32 %v2640, %v2531
    %v2720 = vxor.u32 %v2719, 2147483648
    %v2721 = vmul.f32 %v2720, 1.442695
    %v2722 = vpow.pop %v2721
    %v2723 = vadd.f32 %v2722, 1.0
    %v2724 = vrcp.pop %v2723
    %v2725 = vmul.f32 1.0, %v2724
    %v2726 = vmul.f32 %v2718, %v2533
    %v2727 = vadd.f32 %v2709, %v2726
    %v2728 = vtanh.pop %v2727
    %v2729 = vsub.f32 1.0, %v2725
    %v2730 = vmul.f32 %v2729, %v2728
    %v2731 = vmul.f32 %v2725, %v2389
    %v2732 = vadd.f32 %v2730, %v2731
    %v2734 = vsel %vm283, %v2732, 0
    %2736 = vmatprep.subr.mxu0 0.0
    %2737 = vmatpush1.msra.mxu0 0.0
    %2738 = vmatprep.subr.mxu0 0.0
    %2739 = vmatpush1.msra.mxu0 0.0
    %2740 = vmatprep.subr.mxu0 0.0
    %2741 = vmatpush1.msra.mxu0 0.0
    %2742 = vmatprep.subr.mxu0 0.0
    %2743 = vmatpush1.msra.mxu0 0.0
    %2744 = vmatprep.subr.mxu0 0.0
    %2745 = vmatpush1.msra.mxu0 0.0
    %2746 = vmatprep.subr.mxu0 0.0
    %2747 = vmatpush1.msra.mxu0 0.0
    %2748 = vmatprep.subr.mxu0 0.0
    %2749 = vmatpush1.msra.mxu0 0.0
    %2750 = vmatprep.subr.mxu0 0.0
    %2751 = vmatpush1.msra.mxu0 0.0
    %2752 = vmatprep.subr.mxu0 0.0
    %2753 = vmatpush1.msra.mxu0 0.0
    %2754 = vmatprep.subr.mxu0 0.0
    %2755 = vmatpush1.msra.mxu0 0.0
    %2756 = vmatprep.subr.mxu0 0.0
    %2757 = vmatpush1.msra.mxu0 0.0
    %2758 = vmatprep.subr.mxu0 0.0
    %2759 = vmatpush1.msra.mxu0 0.0
    %2760 = vmatprep.subr.mxu0 %v258
    %2761 = vmatpush1.msra.mxu0 %v257
    %2762 = vmatprep.subr.mxu0 %v254
    %2763 = vmatpush1.msra.mxu0 %v253
    %2764 = vmatprep.subr.mxu0 %v250
    %2765 = vmatpush1.msra.mxu0 %v249
    %2766 = vmatprep.subr.mxu0 %v246
    %2767 = vmatpush1.msra.mxu0 %v245
    %2768 = vmatprep.subr.mxu0 0.0
    %2769 = vmatpush2.msra.mxu0 0.0
    %2770 = vmatprep.subr.mxu0 0.0
    %2771 = vmatpush2.msra.mxu0 0.0
    %2772 = vmatprep.subr.mxu0 0.0
    %2773 = vmatpush2.msra.mxu0 0.0
    %2774 = vmatprep.subr.mxu0 0.0
    %2775 = vmatpush2.msra.mxu0 0.0
    %2776 = vmatprep.subr.mxu0 0.0
    %2777 = vmatpush2.msra.mxu0 0.0
    %2778 = vmatprep.subr.mxu0 0.0
    %2779 = vmatpush2.msra.mxu0 0.0
    %2780 = vmatprep.subr.mxu0 0.0
    %2781 = vmatpush2.msra.mxu0 0.0
    %2782 = vmatprep.subr.mxu0 0.0
    %2783 = vmatpush2.msra.mxu0 0.0
    %2784 = vmatprep.subr.mxu0 0.0
    %2785 = vmatpush2.msra.mxu0 0.0
    %2786 = vmatprep.subr.mxu0 0.0
    %2787 = vmatpush2.msra.mxu0 0.0
    %2788 = vmatprep.subr.mxu0 0.0
    %2789 = vmatpush2.msra.mxu0 0.0
    %2790 = vmatprep.subr.mxu0 0.0
    %2791 = vmatpush2.msra.mxu0 0.0
    %2792 = vmatprep.subr.mxu0 0.0
    %2793 = vmatpush2.msra.mxu0 0.0
    %2794 = vmatprep.subr.mxu0 0.0
    %2795 = vmatpush2.msra.mxu0 0.0
    %2796 = vmatprep.subr.mxu0 0.0
    %2797 = vmatpush2.msra.mxu0 0.0
    %2798 = vmatprep.subr.mxu0 0.0
    %2799 = vmatpush2.msra.mxu0 0.0
    %2800 = vmatprep.mubr.f32.mxu0 0.0
    %2801 = vmatmul.mubr.f32.gmra.mxu0 %v2734
    %v2802 = vpop.f32.mrf.mxu0
    %v2803 = vadd.f32 %v266, %v2802
    %v2804 = vpop.f32.mrf.mxu0
    %2805 = vdwg.mxu0
    %2806 = vmax.xlane.f32.xlu0 %v2803
    %v2807 = vpop.xlane.xlu0 %2806
    %v2808 = vsub.f32 %v2803, %v2807
    %v2809 = vmul.f32 %v2808, 1.442695
    %v2810 = vpow.pop %v2809
    %2811 = vadd.xlane.f32.xlu0 %v2810
    %v2812 = vpop.xlane.xlu0 %2811
    %v2813 = vlog2.pop %v2812
    %v2814 = vmul.f32 %v2813, 0.6931472
    %v2815 = vadd.f32 %v2814, %v2807
    %vm2816 = vcmp.eq.f32.partialorder %v2803, %v2807
    %v2817 = vsel %vm2816, %v244, 128
    %v2818 = vand.u32 %v2817, 65535
    %v2819 = vshra.s32 %v2817, 16
    %v2820 = vcvt.s32.f32 %v2818
    %v2821 = vcvt.s32.f32 %v2819
    %2822 = vmin.xlane.f32.xlu0 %v2821
    %v2823 = vpop.xlane.xlu0 %2822
    %vm2824 = vcmp.eq.f32.partialorder %v2821, %v2823
    %v2825 = vsel %vm2824, %v2820, inf
    %2826 = vmin.xlane.f32.xlu0 %v2825
    %v2827 = vpop.xlane.xlu0 %2826
    %v2828 = vcvt.f32.s32 %v2827
    %v2829 = vcvt.f32.s32 %v2823
    %v2830 = vshll.u32 %v2829, 16
    %v2831 = vadd.s32 %v2830, %v2828
    %v2832 = vsub.f32 %v2807, %v2815
    %v2833 = vadd.f32 %v2563, %v2832
    %v2834 = vcvt.s32.f32 %v2831
    %v2835 = vmul.f32 %v2834, 0.05
    %v2836 = vadd.f32 %v2835, -1.0
    %vm2837 = vcmp.eq.s32.totalorder %v244, 0
    %v2838 = vsel %vm2837, %v2836, %v2568
    %vm2839 = vcmask 64512
    %2840 = vst.msk [vmem:[#allocation9] sm:$0xff] %vm2839, %v2838
    %vm2841 = vcmask 7168
    %2842 = vst.msk [vmem:[%s11] sm:$0xff] %vm2841, %v2833
    // Predicated region
    $region46: #{tpu_custom_call.1} parent=1 // pred_check
      _
    $region47: #{tpu_custom_call.1} parent=1 // pred_check_branch
      %2844 = sbr.rel (0) target = $region49
    $region48: #{tpu_custom_call.1} parent=1 // pred_region
      %s2846 = ssub.s32 128, 128
      %2847 = vsyncadd [#allocation6], %s2846
      %s2849 = sshll.u32 [#allocation9], 4
      %s2850 = int_to_ptr.vmem [resolvable:$true] %s2849
      %2852 = dma.vmem_to_hbm [thread:$0]  %s2850, 128, %s10, [#allocation6]
    $region49: #{tpu_custom_call.1} parent=1 // pred_fallthru
      _
    // Predicated region
    $region50: #{tpu_custom_call.1} parent=1 // pred_check
      _
    $region51: #{tpu_custom_call.1} parent=1 // pred_check_branch
      %2854 = sbr.rel (0) target = $region53
    $region52: #{tpu_custom_call.1} parent=1 // pred_region
      _
    $region53: #{tpu_custom_call.1} parent=1 // pred_fallthru
      _
    // Predicated region
    $region54: #{tpu_custom_call.1} parent=1 // pred_check
      _
    $region55: #{tpu_custom_call.1} parent=1 // pred_check_branch
      %2856 = sbr.rel (0) target = $region57
    $region56: #{tpu_custom_call.1} parent=1 // pred_region
      %2857 = dma.done [#allocation6], 128
    $region57: #{tpu_custom_call.1} parent=1 // pred_fallthru
      _
    // Predicated region
    $region58: #{tpu_custom_call.1} parent=1 // pred_check
      _
    $region59: #{tpu_custom_call.1} parent=1 // pred_check_branch
      %2859 = sbr.rel (0) target = $region61
    $region60: #{tpu_custom_call.1} parent=1 // pred_region
      _
    $region61: #{tpu_custom_call.1} parent=1 // pred_fallthru
      _
    %2860 = vsyncpa [#allocation5], 1
    %2861 = vsyncpa [#allocation8], 1
    %2862 = vsyncpa [#allocation6], 1

</llo_original>
